<compile_context>
chip_gen: v7x
topology: tpu7x:2x2x1
jax: 0.10.0
libtpu: 0.0.40
codegen_flags: <defaults>
</compile_context>

<pallas_src>
import jax
import jax.numpy as jnp
from jax.experimental import pallas as pl
from jax.experimental.pallas import tpu as pltpu

# ---- Hyperparameters (match the PyTorch module spec) ----
VOCAB_SIZE   = 58559
EMBED_SIZE   = 256
FILTER_SIZES = (2, 2, 2, 3, 3, 3, 4, 4, 5, 6)
NUM_FILTERS  = 32
HIDDEN_SIZE  = 64
NUM_CLASSES  = 4
MAX_LEN      = 16
BATCH        = 2

N_TAPS        = max(FILTER_SIZES)                      # 6
TOTAL_FILTERS = NUM_FILTERS * len(FILTER_SIZES)        # 320
N_PAD         = ((TOTAL_FILTERS + 127) // 128) * 128   # 384 (lane-dense)
H_PAD         = 128                                    # hidden padded to lanes
C_PAD         = 128                                    # classes padded to lanes
BL            = BATCH * MAX_LEN                        # 32 fused rows
NEG_INF       = -1e30


def cnn_kernel(tok_ref, emb_hbm, w_ref, mask_ref, cb_ref,
               fcw_ref, fcb_ref, ow_ref, ob_ref,
               o_ref, emb_vmem, sem):
    """Whole batch in a single invocation.

    tok_ref : (B*L,)      int32  SMEM   flattened token ids
    emb_hbm : (V, E)      f32    HBM    embedding table (pl.ANY, never copied whole)
    w_ref   : (6*E, 384)  bf16   VMEM   fused conv weights (taps >= fs are zero)
    mask_ref: (B*L, 384)  f32    VMEM   0 for valid pool positions, -1e30 otherwise
    cb_ref  : (1, 384)    f32           fused conv bias (added after pooling)
    fcw_ref : (384, 128)  bf16 ; fcb_ref: (1, 128) f32
    ow_ref  : (128, 128)  bf16 ; ob_ref : (1, 128) f32
    o_ref   : (B, 128)    f32           padded logits
    emb_vmem: (B*L, E)    f32    VMEM scratch for the gathered embedding rows
    sem     : shared DMA semaphore for the gather copies
    """
    # ---- 1) Fused embedding gather: one 1 KB row DMA per token, all in flight. ----
    copies = []
    for i in range(BL):
        cp = pltpu.make_async_copy(emb_hbm.at[tok_ref[i]], emb_vmem.at[i], sem)
        cp.start()
        copies.append(cp)
    for cp in copies:                       # one semaphore, waited once per row
        cp.wait()

    emb = emb_vmem[...]                                        # (B*L, E) f32

    # ---- 2) Conv banks as ONE MXU matmul: (B*L, 6E) @ (6E, 384). ----
    # taps[o][r] = emb[(r + o) mod B*L]; wrapped rows only reach masked positions.
    taps = [emb] + [pltpu.roll(emb, shift=BL - o, axis=0) for o in range(1, N_TAPS)]
    lhs = jnp.concatenate(taps, axis=-1).astype(jnp.bfloat16)  # (B*L, 6E), one cast
    acc = jnp.dot(lhs, w_ref[...], preferred_element_type=jnp.float32)  # (B*L, 384)

    # ---- 3) Mask invalid / cross-sample positions, per-sample max-pool, bias. ----
    masked = acc + mask_ref[...]
    pooled = jnp.concatenate(
        [jnp.max(masked[b * MAX_LEN:(b + 1) * MAX_LEN], axis=0, keepdims=True)
         for b in range(BATCH)], axis=0) + cb_ref[...]         # (B, 384)

    # ---- 4) fc -> relu -> (dropout = identity) -> output, lane-dense. ----
    h = jnp.dot(pooled.astype(jnp.bfloat16), fcw_ref[...],
                preferred_element_type=jnp.float32) + fcb_ref[...]
    h = jnp.maximum(h, 0.0)
    # TODO(synk): training-mode dropout (p=0.5 mask + 1/(1-p) scaling) not implemented.
    logits = jnp.dot(h.astype(jnp.bfloat16), ow_ref[...],
                     preferred_element_type=jnp.float32) + ob_ref[...]
    o_ref[...] = logits.astype(o_ref.dtype)


def cnn_forward(token_ids, params):
    assert token_ids.shape == (BATCH, MAX_LEN)
    tok_flat = token_ids.reshape(BL).astype(jnp.int32)

    flops = (2 * BL * (N_TAPS * EMBED_SIZE) * N_PAD
             + 2 * BATCH * (N_PAD * H_PAD + H_PAD * C_PAD))
    bytes_accessed = (N_TAPS * EMBED_SIZE * N_PAD * 2          # conv weights (bf16)
                      + N_PAD * H_PAD * 2 + H_PAD * C_PAD * 2  # fc / out weights
                      + BL * N_PAD * 4                         # pool mask
                      + BL * EMBED_SIZE * 4                    # gathered rows
                      + (N_PAD + H_PAD + C_PAD) * 4            # biases
                      + BL * 4 + BATCH * C_PAD * 4)            # tokens + logits

    out = pl.pallas_call(
        cnn_kernel,
        out_shape=jax.ShapeDtypeStruct((BATCH, C_PAD), jnp.float32),
        in_specs=[
            pl.BlockSpec(memory_space=pltpu.MemorySpace.SMEM),  # token ids
            pl.BlockSpec(memory_space=pl.ANY),                  # embedding table (HBM)
            pl.BlockSpec(memory_space=pltpu.MemorySpace.VMEM),  # fused conv w
            pl.BlockSpec(memory_space=pltpu.MemorySpace.VMEM),  # pool mask
            pl.BlockSpec(memory_space=pltpu.MemorySpace.VMEM),  # fused conv b
            pl.BlockSpec(memory_space=pltpu.MemorySpace.VMEM),  # fc w
            pl.BlockSpec(memory_space=pltpu.MemorySpace.VMEM),  # fc b
            pl.BlockSpec(memory_space=pltpu.MemorySpace.VMEM),  # out w
            pl.BlockSpec(memory_space=pltpu.MemorySpace.VMEM),  # out b
        ],
        out_specs=pl.BlockSpec(memory_space=pltpu.MemorySpace.VMEM),
        scratch_shapes=[
            pltpu.VMEM((BL, EMBED_SIZE), jnp.float32),          # gathered embeddings
            pltpu.SemaphoreType.DMA,                            # shared gather semaphore
        ],
        cost_estimate=pl.CostEstimate(flops=flops, transcendentals=0,
                                      bytes_accessed=bytes_accessed),
        # TODO(synk): for steady-state serving, keep the ~1.3 MB of weights
        # VMEM-resident / cross-call prefetched; the kernel is then purely DMA-bound.
    )(tok_flat, params["embedding"], params["conv_w_fused"], params["pool_mask"],
      params["conv_b_fused"], params["fc_w_pad"], params["fc_b_pad"],
      params["out_w_pad"], params["out_b_pad"])

    return out[:, :NUM_CLASSES]                                 # (B, num_classes)


def init_params(key):
    keys = jax.random.split(key, 26)
    params = {}
    params["embedding"] = 0.1 * jax.random.normal(
        keys[0], (VOCAB_SIZE, EMBED_SIZE), jnp.float32)

    # Raw (reference) conv weights + fused/padded kernel versions.
    w_fused = jnp.zeros((N_TAPS, EMBED_SIZE, N_PAD), jnp.float32)
    b_fused = jnp.zeros((1, N_PAD), jnp.float32)
    mask = jnp.zeros((MAX_LEN, N_PAD), jnp.float32)
    for i, fs in enumerate(FILTER_SIZES):
        w_i = 0.05 * jax.random.normal(keys[1 + i], (fs, EMBED_SIZE, NUM_FILTERS),
                                       jnp.float32)
        b_i = 0.01 * jax.random.normal(keys[11 + i], (NUM_FILTERS,), jnp.float32)
        params[f"conv_w_raw_{i}"] = w_i
        params[f"conv_b_raw_{i}"] = b_i
        c0 = i * NUM_FILTERS
        w_fused = w_fused.at[:fs, :, c0:c0 + NUM_FILTERS].set(w_i)
        b_fused = b_fused.at[0, c0:c0 + NUM_FILTERS].set(b_i)
        l_out = MAX_LEN - fs + 1
        mask = mask.at[l_out:, c0:c0 + NUM_FILTERS].set(NEG_INF)
    # (6, E, 384) -> (6*E, 384): row o*E + e matches the lane-concat of rolled taps.
    params["conv_w_fused"] = (w_fused.reshape(N_TAPS * EMBED_SIZE, N_PAD)
                              .astype(jnp.bfloat16))
    params["conv_b_fused"] = b_fused
    params["pool_mask"] = jnp.tile(mask, (BATCH, 1))            # (B*L, 384)

    fc_w = 0.05 * jax.random.normal(keys[21], (TOTAL_FILTERS, HIDDEN_SIZE), jnp.float32)
    fc_b = 0.01 * jax.random.normal(keys[22], (HIDDEN_SIZE,), jnp.float32)
    out_w = 0.05 * jax.random.normal(keys[23], (HIDDEN_SIZE, NUM_CLASSES), jnp.float32)
    out_b = 0.01 * jax.random.normal(keys[24], (NUM_CLASSES,), jnp.float32)
    params["fc_w_raw"], params["fc_b_raw"] = fc_w, fc_b
    params["out_w_raw"], params["out_b_raw"] = out_w, out_b

    params["fc_w_pad"] = (jnp.zeros((N_PAD, H_PAD), jnp.float32)
                          .at[:TOTAL_FILTERS, :HIDDEN_SIZE].set(fc_w)
                          .astype(jnp.bfloat16))
    params["fc_b_pad"] = (jnp.zeros((1, H_PAD), jnp.float32)
                          .at[0, :HIDDEN_SIZE].set(fc_b))
    params["out_w_pad"] = (jnp.zeros((H_PAD, C_PAD), jnp.float32)
                           .at[:HIDDEN_SIZE, :NUM_CLASSES].set(out_w)
                           .astype(jnp.bfloat16))
    params["out_b_pad"] = (jnp.zeros((1, C_PAD), jnp.float32)
                           .at[0, :NUM_CLASSES].set(out_b))
    return params, keys[25]


def reference_forward(token_ids, p):
    """Pure-JAX f32 reference matching the PyTorch module semantics (eval mode)."""
    emb = p["embedding"][token_ids]                        # (B, L, E)
    feats = []
    for i, fs in enumerate(FILTER_SIZES):
        w = p[f"conv_w_raw_{i}"]                           # (fs, E, F)
        l_out = MAX_LEN - fs + 1
        y = jnp.zeros((emb.shape[0], l_out, NUM_FILTERS), jnp.float32)
        y = y + p[f"conv_b_raw_{i}"][None, None, :]
        for o in range(fs):
            y = y + jnp.einsum("ble,ef->blf", emb[:, o:o + l_out, :], w[o])
        feats.append(jnp.max(y, axis=1))                   # MaxPool over positions
    h = jnp.concatenate(feats, axis=-1)                    # (B, 320)
    h = jnp.maximum(h @ p["fc_w_raw"] + p["fc_b_raw"][None, :], 0.0)
    return h @ p["out_w_raw"] + p["out_b_raw"][None, :]    # dropout = identity


if __name__ == "__main__":
    params, data_key = init_params(jax.random.PRNGKey(0))
    token_ids = jax.random.randint(data_key, (BATCH, MAX_LEN), 0, VOCAB_SIZE)

    logits = cnn_forward(token_ids, params)
    jax.block_until_ready(logits)

    assert logits.shape == (BATCH, NUM_CLASSES)
    assert logits.dtype == jnp.float32

    ref = reference_forward(token_ids, params)
    assert jnp.allclose(logits, ref, rtol=2e-2, atol=2e-2), (logits, ref)

    print("KERNEL_OK")
</pallas_src>

<mosaic_0001>
module attributes {stable_mosaic.version = 11 : i64} {
  func.func @cnn_kernel(%arg0: memref<32xi32, #tpu.memory_space<smem>>, %arg1: memref<58559x256xf32, #tpu.memory_space<any>>, %arg2: memref<1536x384xbf16, #tpu.memory_space<vmem>>, %arg3: memref<32x384xf32, #tpu.memory_space<vmem>>, %arg4: memref<1x384xf32, #tpu.memory_space<vmem>>, %arg5: memref<384x128xbf16, #tpu.memory_space<vmem>>, %arg6: memref<1x128xf32, #tpu.memory_space<vmem>>, %arg7: memref<128x128xbf16, #tpu.memory_space<vmem>>, %arg8: memref<1x128xf32, #tpu.memory_space<vmem>>, %arg9: memref<2x128xf32, #tpu.memory_space<vmem>>, %arg10: memref<32x256xf32, #tpu.memory_space<vmem>>, %arg11: memref<!tpu.dma_semaphore, #tpu.memory_space<semaphore_mem>>) attributes {dimension_semantics = [], scalar_prefetch = 0 : i64, scratch_operands = 2 : i64, tpu.core_type = #tpu.core_type<tc>} {
    %c0 = arith.constant 0 : index
    %0 = memref.load %arg0[%c0] : memref<32xi32, #tpu.memory_space<smem>>
    %c0_i32 = arith.constant 0 : i32
    %c0_i32_0 = arith.constant 0 : i32
    %1 = tpu.memref_slice %arg1[%0, %c0_i32_0] : memref<58559x256xf32, #tpu.memory_space<any>> -> memref<1x256xf32, #tpu.memory_space<any>>
    %2 = tpu.memref_squeeze %1 : memref<1x256xf32, #tpu.memory_space<any>> -> memref<256xf32, #tpu.memory_space<any>>
    %c0_i32_1 = arith.constant 0 : i32
    %3 = tpu.memref_slice %arg10[%c0_i32, %c0_i32_1] : memref<32x256xf32, #tpu.memory_space<vmem>> -> memref<1x256xf32, #tpu.memory_space<vmem>>
    %4 = tpu.memref_squeeze %3 : memref<1x256xf32, #tpu.memory_space<vmem>> -> memref<256xf32, #tpu.memory_space<vmem>>
    tpu.enqueue_dma source(%2 : memref<256xf32, #tpu.memory_space<any>>) target(%4 : memref<256xf32, #tpu.memory_space<vmem>>) target_semaphore(%arg11 : memref<!tpu.dma_semaphore, #tpu.memory_space<semaphore_mem>>)
    %c1 = arith.constant 1 : index
    %5 = memref.load %arg0[%c1] : memref<32xi32, #tpu.memory_space<smem>>
    %c1_i32 = arith.constant 1 : i32
    %c0_i32_2 = arith.constant 0 : i32
    %6 = tpu.memref_slice %arg1[%5, %c0_i32_2] : memref<58559x256xf32, #tpu.memory_space<any>> -> memref<1x256xf32, #tpu.memory_space<any>>
    %7 = tpu.memref_squeeze %6 : memref<1x256xf32, #tpu.memory_space<any>> -> memref<256xf32, #tpu.memory_space<any>>
    %c0_i32_3 = arith.constant 0 : i32
    %8 = tpu.memref_slice %arg10[%c1_i32, %c0_i32_3] : memref<32x256xf32, #tpu.memory_space<vmem>> -> memref<1x256xf32, #tpu.memory_space<vmem>>
    %9 = tpu.memref_squeeze %8 : memref<1x256xf32, #tpu.memory_space<vmem>> -> memref<256xf32, #tpu.memory_space<vmem>>
    tpu.enqueue_dma source(%7 : memref<256xf32, #tpu.memory_space<any>>) target(%9 : memref<256xf32, #tpu.memory_space<vmem>>) target_semaphore(%arg11 : memref<!tpu.dma_semaphore, #tpu.memory_space<semaphore_mem>>)
    %c2 = arith.constant 2 : index
    %10 = memref.load %arg0[%c2] : memref<32xi32, #tpu.memory_space<smem>>
    %c2_i32 = arith.constant 2 : i32
    %c0_i32_4 = arith.constant 0 : i32
    %11 = tpu.memref_slice %arg1[%10, %c0_i32_4] : memref<58559x256xf32, #tpu.memory_space<any>> -> memref<1x256xf32, #tpu.memory_space<any>>
    %12 = tpu.memref_squeeze %11 : memref<1x256xf32, #tpu.memory_space<any>> -> memref<256xf32, #tpu.memory_space<any>>
    %c0_i32_5 = arith.constant 0 : i32
    %13 = tpu.memref_slice %arg10[%c2_i32, %c0_i32_5] : memref<32x256xf32, #tpu.memory_space<vmem>> -> memref<1x256xf32, #tpu.memory_space<vmem>>
    %14 = tpu.memref_squeeze %13 : memref<1x256xf32, #tpu.memory_space<vmem>> -> memref<256xf32, #tpu.memory_space<vmem>>
    tpu.enqueue_dma source(%12 : memref<256xf32, #tpu.memory_space<any>>) target(%14 : memref<256xf32, #tpu.memory_space<vmem>>) target_semaphore(%arg11 : memref<!tpu.dma_semaphore, #tpu.memory_space<semaphore_mem>>)
    %c3 = arith.constant 3 : index
    %15 = memref.load %arg0[%c3] : memref<32xi32, #tpu.memory_space<smem>>
    %c3_i32 = arith.constant 3 : i32
    %c0_i32_6 = arith.constant 0 : i32
    %16 = tpu.memref_slice %arg1[%15, %c0_i32_6] : memref<58559x256xf32, #tpu.memory_space<any>> -> memref<1x256xf32, #tpu.memory_space<any>>
    %17 = tpu.memref_squeeze %16 : memref<1x256xf32, #tpu.memory_space<any>> -> memref<256xf32, #tpu.memory_space<any>>
    %c0_i32_7 = arith.constant 0 : i32
    %18 = tpu.memref_slice %arg10[%c3_i32, %c0_i32_7] : memref<32x256xf32, #tpu.memory_space<vmem>> -> memref<1x256xf32, #tpu.memory_space<vmem>>
    %19 = tpu.memref_squeeze %18 : memref<1x256xf32, #tpu.memory_space<vmem>> -> memref<256xf32, #tpu.memory_space<vmem>>
    tpu.enqueue_dma source(%17 : memref<256xf32, #tpu.memory_space<any>>) target(%19 : memref<256xf32, #tpu.memory_space<vmem>>) target_semaphore(%arg11 : memref<!tpu.dma_semaphore, #tpu.memory_space<semaphore_mem>>)
    %c4 = arith.constant 4 : index
    %20 = memref.load %arg0[%c4] : memref<32xi32, #tpu.memory_space<smem>>
    %c4_i32 = arith.constant 4 : i32
    %c0_i32_8 = arith.constant 0 : i32
    %21 = tpu.memref_slice %arg1[%20, %c0_i32_8] : memref<58559x256xf32, #tpu.memory_space<any>> -> memref<1x256xf32, #tpu.memory_space<any>>
    %22 = tpu.memref_squeeze %21 : memref<1x256xf32, #tpu.memory_space<any>> -> memref<256xf32, #tpu.memory_space<any>>
    %c0_i32_9 = arith.constant 0 : i32
    %23 = tpu.memref_slice %arg10[%c4_i32, %c0_i32_9] : memref<32x256xf32, #tpu.memory_space<vmem>> -> memref<1x256xf32, #tpu.memory_space<vmem>>
    %24 = tpu.memref_squeeze %23 : memref<1x256xf32, #tpu.memory_space<vmem>> -> memref<256xf32, #tpu.memory_space<vmem>>
    tpu.enqueue_dma source(%22 : memref<256xf32, #tpu.memory_space<any>>) target(%24 : memref<256xf32, #tpu.memory_space<vmem>>) target_semaphore(%arg11 : memref<!tpu.dma_semaphore, #tpu.memory_space<semaphore_mem>>)
    %c5 = arith.constant 5 : index
    %25 = memref.load %arg0[%c5] : memref<32xi32, #tpu.memory_space<smem>>
    %c5_i32 = arith.constant 5 : i32
    %c0_i32_10 = arith.constant 0 : i32
    %26 = tpu.memref_slice %arg1[%25, %c0_i32_10] : memref<58559x256xf32, #tpu.memory_space<any>> -> memref<1x256xf32, #tpu.memory_space<any>>
    %27 = tpu.memref_squeeze %26 : memref<1x256xf32, #tpu.memory_space<any>> -> memref<256xf32, #tpu.memory_space<any>>
    %c0_i32_11 = arith.constant 0 : i32
    %28 = tpu.memref_slice %arg10[%c5_i32, %c0_i32_11] : memref<32x256xf32, #tpu.memory_space<vmem>> -> memref<1x256xf32, #tpu.memory_space<vmem>>
    %29 = tpu.memref_squeeze %28 : memref<1x256xf32, #tpu.memory_space<vmem>> -> memref<256xf32, #tpu.memory_space<vmem>>
    tpu.enqueue_dma source(%27 : memref<256xf32, #tpu.memory_space<any>>) target(%29 : memref<256xf32, #tpu.memory_space<vmem>>) target_semaphore(%arg11 : memref<!tpu.dma_semaphore, #tpu.memory_space<semaphore_mem>>)
    %c6 = arith.constant 6 : index
    %30 = memref.load %arg0[%c6] : memref<32xi32, #tpu.memory_space<smem>>
    %c6_i32 = arith.constant 6 : i32
    %c0_i32_12 = arith.constant 0 : i32
    %31 = tpu.memref_slice %arg1[%30, %c0_i32_12] : memref<58559x256xf32, #tpu.memory_space<any>> -> memref<1x256xf32, #tpu.memory_space<any>>
    %32 = tpu.memref_squeeze %31 : memref<1x256xf32, #tpu.memory_space<any>> -> memref<256xf32, #tpu.memory_space<any>>
    %c0_i32_13 = arith.constant 0 : i32
    %33 = tpu.memref_slice %arg10[%c6_i32, %c0_i32_13] : memref<32x256xf32, #tpu.memory_space<vmem>> -> memref<1x256xf32, #tpu.memory_space<vmem>>
    %34 = tpu.memref_squeeze %33 : memref<1x256xf32, #tpu.memory_space<vmem>> -> memref<256xf32, #tpu.memory_space<vmem>>
    tpu.enqueue_dma source(%32 : memref<256xf32, #tpu.memory_space<any>>) target(%34 : memref<256xf32, #tpu.memory_space<vmem>>) target_semaphore(%arg11 : memref<!tpu.dma_semaphore, #tpu.memory_space<semaphore_mem>>)
    %c7 = arith.constant 7 : index
    %35 = memref.load %arg0[%c7] : memref<32xi32, #tpu.memory_space<smem>>
    %c7_i32 = arith.constant 7 : i32
    %c0_i32_14 = arith.constant 0 : i32
    %36 = tpu.memref_slice %arg1[%35, %c0_i32_14] : memref<58559x256xf32, #tpu.memory_space<any>> -> memref<1x256xf32, #tpu.memory_space<any>>
    %37 = tpu.memref_squeeze %36 : memref<1x256xf32, #tpu.memory_space<any>> -> memref<256xf32, #tpu.memory_space<any>>
    %c0_i32_15 = arith.constant 0 : i32
    %38 = tpu.memref_slice %arg10[%c7_i32, %c0_i32_15] : memref<32x256xf32, #tpu.memory_space<vmem>> -> memref<1x256xf32, #tpu.memory_space<vmem>>
    %39 = tpu.memref_squeeze %38 : memref<1x256xf32, #tpu.memory_space<vmem>> -> memref<256xf32, #tpu.memory_space<vmem>>
    tpu.enqueue_dma source(%37 : memref<256xf32, #tpu.memory_space<any>>) target(%39 : memref<256xf32, #tpu.memory_space<vmem>>) target_semaphore(%arg11 : memref<!tpu.dma_semaphore, #tpu.memory_space<semaphore_mem>>)
    %c8 = arith.constant 8 : index
    %40 = memref.load %arg0[%c8] : memref<32xi32, #tpu.memory_space<smem>>
    %c8_i32 = arith.constant 8 : i32
    %c0_i32_16 = arith.constant 0 : i32
    %41 = tpu.memref_slice %arg1[%40, %c0_i32_16] : memref<58559x256xf32, #tpu.memory_space<any>> -> memref<1x256xf32, #tpu.memory_space<any>>
    %42 = tpu.memref_squeeze %41 : memref<1x256xf32, #tpu.memory_space<any>> -> memref<256xf32, #tpu.memory_space<any>>
    %c0_i32_17 = arith.constant 0 : i32
    %43 = tpu.memref_slice %arg10[%c8_i32, %c0_i32_17] : memref<32x256xf32, #tpu.memory_space<vmem>> -> memref<1x256xf32, #tpu.memory_space<vmem>>
    %44 = tpu.memref_squeeze %43 : memref<1x256xf32, #tpu.memory_space<vmem>> -> memref<256xf32, #tpu.memory_space<vmem>>
    tpu.enqueue_dma source(%42 : memref<256xf32, #tpu.memory_space<any>>) target(%44 : memref<256xf32, #tpu.memory_space<vmem>>) target_semaphore(%arg11 : memref<!tpu.dma_semaphore, #tpu.memory_space<semaphore_mem>>)
    %c9 = arith.constant 9 : index
    %45 = memref.load %arg0[%c9] : memref<32xi32, #tpu.memory_space<smem>>
    %c9_i32 = arith.constant 9 : i32
    %c0_i32_18 = arith.constant 0 : i32
    %46 = tpu.memref_slice %arg1[%45, %c0_i32_18] : memref<58559x256xf32, #tpu.memory_space<any>> -> memref<1x256xf32, #tpu.memory_space<any>>
    %47 = tpu.memref_squeeze %46 : memref<1x256xf32, #tpu.memory_space<any>> -> memref<256xf32, #tpu.memory_space<any>>
    %c0_i32_19 = arith.constant 0 : i32
    %48 = tpu.memref_slice %arg10[%c9_i32, %c0_i32_19] : memref<32x256xf32, #tpu.memory_space<vmem>> -> memref<1x256xf32, #tpu.memory_space<vmem>>
    %49 = tpu.memref_squeeze %48 : memref<1x256xf32, #tpu.memory_space<vmem>> -> memref<256xf32, #tpu.memory_space<vmem>>
    tpu.enqueue_dma source(%47 : memref<256xf32, #tpu.memory_space<any>>) target(%49 : memref<256xf32, #tpu.memory_space<vmem>>) target_semaphore(%arg11 : memref<!tpu.dma_semaphore, #tpu.memory_space<semaphore_mem>>)
    %c10 = arith.constant 10 : index
    %50 = memref.load %arg0[%c10] : memref<32xi32, #tpu.memory_space<smem>>
    %c10_i32 = arith.constant 10 : i32
    %c0_i32_20 = arith.constant 0 : i32
    %51 = tpu.memref_slice %arg1[%50, %c0_i32_20] : memref<58559x256xf32, #tpu.memory_space<any>> -> memref<1x256xf32, #tpu.memory_space<any>>
    %52 = tpu.memref_squeeze %51 : memref<1x256xf32, #tpu.memory_space<any>> -> memref<256xf32, #tpu.memory_space<any>>
    %c0_i32_21 = arith.constant 0 : i32
    %53 = tpu.memref_slice %arg10[%c10_i32, %c0_i32_21] : memref<32x256xf32, #tpu.memory_space<vmem>> -> memref<1x256xf32, #tpu.memory_space<vmem>>
    %54 = tpu.memref_squeeze %53 : memref<1x256xf32, #tpu.memory_space<vmem>> -> memref<256xf32, #tpu.memory_space<vmem>>
    tpu.enqueue_dma source(%52 : memref<256xf32, #tpu.memory_space<any>>) target(%54 : memref<256xf32, #tpu.memory_space<vmem>>) target_semaphore(%arg11 : memref<!tpu.dma_semaphore, #tpu.memory_space<semaphore_mem>>)
    %c11 = arith.constant 11 : index
    %55 = memref.load %arg0[%c11] : memref<32xi32, #tpu.memory_space<smem>>
    %c11_i32 = arith.constant 11 : i32
    %c0_i32_22 = arith.constant 0 : i32
    %56 = tpu.memref_slice %arg1[%55, %c0_i32_22] : memref<58559x256xf32, #tpu.memory_space<any>> -> memref<1x256xf32, #tpu.memory_space<any>>
    %57 = tpu.memref_squeeze %56 : memref<1x256xf32, #tpu.memory_space<any>> -> memref<256xf32, #tpu.memory_space<any>>
    %c0_i32_23 = arith.constant 0 : i32
    %58 = tpu.memref_slice %arg10[%c11_i32, %c0_i32_23] : memref<32x256xf32, #tpu.memory_space<vmem>> -> memref<1x256xf32, #tpu.memory_space<vmem>>
    %59 = tpu.memref_squeeze %58 : memref<1x256xf32, #tpu.memory_space<vmem>> -> memref<256xf32, #tpu.memory_space<vmem>>
    tpu.enqueue_dma source(%57 : memref<256xf32, #tpu.memory_space<any>>) target(%59 : memref<256xf32, #tpu.memory_space<vmem>>) target_semaphore(%arg11 : memref<!tpu.dma_semaphore, #tpu.memory_space<semaphore_mem>>)
    %c12 = arith.constant 12 : index
    %60 = memref.load %arg0[%c12] : memref<32xi32, #tpu.memory_space<smem>>
    %c12_i32 = arith.constant 12 : i32
    %c0_i32_24 = arith.constant 0 : i32
    %61 = tpu.memref_slice %arg1[%60, %c0_i32_24] : memref<58559x256xf32, #tpu.memory_space<any>> -> memref<1x256xf32, #tpu.memory_space<any>>
    %62 = tpu.memref_squeeze %61 : memref<1x256xf32, #tpu.memory_space<any>> -> memref<256xf32, #tpu.memory_space<any>>
    %c0_i32_25 = arith.constant 0 : i32
    %63 = tpu.memref_slice %arg10[%c12_i32, %c0_i32_25] : memref<32x256xf32, #tpu.memory_space<vmem>> -> memref<1x256xf32, #tpu.memory_space<vmem>>
    %64 = tpu.memref_squeeze %63 : memref<1x256xf32, #tpu.memory_space<vmem>> -> memref<256xf32, #tpu.memory_space<vmem>>
    tpu.enqueue_dma source(%62 : memref<256xf32, #tpu.memory_space<any>>) target(%64 : memref<256xf32, #tpu.memory_space<vmem>>) target_semaphore(%arg11 : memref<!tpu.dma_semaphore, #tpu.memory_space<semaphore_mem>>)
    %c13 = arith.constant 13 : index
    %65 = memref.load %arg0[%c13] : memref<32xi32, #tpu.memory_space<smem>>
    %c13_i32 = arith.constant 13 : i32
    %c0_i32_26 = arith.constant 0 : i32
    %66 = tpu.memref_slice %arg1[%65, %c0_i32_26] : memref<58559x256xf32, #tpu.memory_space<any>> -> memref<1x256xf32, #tpu.memory_space<any>>
    %67 = tpu.memref_squeeze %66 : memref<1x256xf32, #tpu.memory_space<any>> -> memref<256xf32, #tpu.memory_space<any>>
    %c0_i32_27 = arith.constant 0 : i32
    %68 = tpu.memref_slice %arg10[%c13_i32, %c0_i32_27] : memref<32x256xf32, #tpu.memory_space<vmem>> -> memref<1x256xf32, #tpu.memory_space<vmem>>
    %69 = tpu.memref_squeeze %68 : memref<1x256xf32, #tpu.memory_space<vmem>> -> memref<256xf32, #tpu.memory_space<vmem>>
    tpu.enqueue_dma source(%67 : memref<256xf32, #tpu.memory_space<any>>) target(%69 : memref<256xf32, #tpu.memory_space<vmem>>) target_semaphore(%arg11 : memref<!tpu.dma_semaphore, #tpu.memory_space<semaphore_mem>>)
    %c14 = arith.constant 14 : index
    %70 = memref.load %arg0[%c14] : memref<32xi32, #tpu.memory_space<smem>>
    %c14_i32 = arith.constant 14 : i32
    %c0_i32_28 = arith.constant 0 : i32
    %71 = tpu.memref_slice %arg1[%70, %c0_i32_28] : memref<58559x256xf32, #tpu.memory_space<any>> -> memref<1x256xf32, #tpu.memory_space<any>>
    %72 = tpu.memref_squeeze %71 : memref<1x256xf32, #tpu.memory_space<any>> -> memref<256xf32, #tpu.memory_space<any>>
    %c0_i32_29 = arith.constant 0 : i32
    %73 = tpu.memref_slice %arg10[%c14_i32, %c0_i32_29] : memref<32x256xf32, #tpu.memory_space<vmem>> -> memref<1x256xf32, #tpu.memory_space<vmem>>
    %74 = tpu.memref_squeeze %73 : memref<1x256xf32, #tpu.memory_space<vmem>> -> memref<256xf32, #tpu.memory_space<vmem>>
    tpu.enqueue_dma source(%72 : memref<256xf32, #tpu.memory_space<any>>) target(%74 : memref<256xf32, #tpu.memory_space<vmem>>) target_semaphore(%arg11 : memref<!tpu.dma_semaphore, #tpu.memory_space<semaphore_mem>>)
    %c15 = arith.constant 15 : index
    %75 = memref.load %arg0[%c15] : memref<32xi32, #tpu.memory_space<smem>>
    %c15_i32 = arith.constant 15 : i32
    %c0_i32_30 = arith.constant 0 : i32
    %76 = tpu.memref_slice %arg1[%75, %c0_i32_30] : memref<58559x256xf32, #tpu.memory_space<any>> -> memref<1x256xf32, #tpu.memory_space<any>>
    %77 = tpu.memref_squeeze %76 : memref<1x256xf32, #tpu.memory_space<any>> -> memref<256xf32, #tpu.memory_space<any>>
    %c0_i32_31 = arith.constant 0 : i32
    %78 = tpu.memref_slice %arg10[%c15_i32, %c0_i32_31] : memref<32x256xf32, #tpu.memory_space<vmem>> -> memref<1x256xf32, #tpu.memory_space<vmem>>
    %79 = tpu.memref_squeeze %78 : memref<1x256xf32, #tpu.memory_space<vmem>> -> memref<256xf32, #tpu.memory_space<vmem>>
    tpu.enqueue_dma source(%77 : memref<256xf32, #tpu.memory_space<any>>) target(%79 : memref<256xf32, #tpu.memory_space<vmem>>) target_semaphore(%arg11 : memref<!tpu.dma_semaphore, #tpu.memory_space<semaphore_mem>>)
    %c16 = arith.constant 16 : index
    %80 = memref.load %arg0[%c16] : memref<32xi32, #tpu.memory_space<smem>>
    %c16_i32 = arith.constant 16 : i32
    %c0_i32_32 = arith.constant 0 : i32
    %81 = tpu.memref_slice %arg1[%80, %c0_i32_32] : memref<58559x256xf32, #tpu.memory_space<any>> -> memref<1x256xf32, #tpu.memory_space<any>>
    %82 = tpu.memref_squeeze %81 : memref<1x256xf32, #tpu.memory_space<any>> -> memref<256xf32, #tpu.memory_space<any>>
    %c0_i32_33 = arith.constant 0 : i32
    %83 = tpu.memref_slice %arg10[%c16_i32, %c0_i32_33] : memref<32x256xf32, #tpu.memory_space<vmem>> -> memref<1x256xf32, #tpu.memory_space<vmem>>
    %84 = tpu.memref_squeeze %83 : memref<1x256xf32, #tpu.memory_space<vmem>> -> memref<256xf32, #tpu.memory_space<vmem>>
    tpu.enqueue_dma source(%82 : memref<256xf32, #tpu.memory_space<any>>) target(%84 : memref<256xf32, #tpu.memory_space<vmem>>) target_semaphore(%arg11 : memref<!tpu.dma_semaphore, #tpu.memory_space<semaphore_mem>>)
    %c17 = arith.constant 17 : index
    %85 = memref.load %arg0[%c17] : memref<32xi32, #tpu.memory_space<smem>>
    %c17_i32 = arith.constant 17 : i32
    %c0_i32_34 = arith.constant 0 : i32
    %86 = tpu.memref_slice %arg1[%85, %c0_i32_34] : memref<58559x256xf32, #tpu.memory_space<any>> -> memref<1x256xf32, #tpu.memory_space<any>>
    %87 = tpu.memref_squeeze %86 : memref<1x256xf32, #tpu.memory_space<any>> -> memref<256xf32, #tpu.memory_space<any>>
    %c0_i32_35 = arith.constant 0 : i32
    %88 = tpu.memref_slice %arg10[%c17_i32, %c0_i32_35] : memref<32x256xf32, #tpu.memory_space<vmem>> -> memref<1x256xf32, #tpu.memory_space<vmem>>
    %89 = tpu.memref_squeeze %88 : memref<1x256xf32, #tpu.memory_space<vmem>> -> memref<256xf32, #tpu.memory_space<vmem>>
    tpu.enqueue_dma source(%87 : memref<256xf32, #tpu.memory_space<any>>) target(%89 : memref<256xf32, #tpu.memory_space<vmem>>) target_semaphore(%arg11 : memref<!tpu.dma_semaphore, #tpu.memory_space<semaphore_mem>>)
    %c18 = arith.constant 18 : index
    %90 = memref.load %arg0[%c18] : memref<32xi32, #tpu.memory_space<smem>>
    %c18_i32 = arith.constant 18 : i32
    %c0_i32_36 = arith.constant 0 : i32
    %91 = tpu.memref_slice %arg1[%90, %c0_i32_36] : memref<58559x256xf32, #tpu.memory_space<any>> -> memref<1x256xf32, #tpu.memory_space<any>>
    %92 = tpu.memref_squeeze %91 : memref<1x256xf32, #tpu.memory_space<any>> -> memref<256xf32, #tpu.memory_space<any>>
    %c0_i32_37 = arith.constant 0 : i32
    %93 = tpu.memref_slice %arg10[%c18_i32, %c0_i32_37] : memref<32x256xf32, #tpu.memory_space<vmem>> -> memref<1x256xf32, #tpu.memory_space<vmem>>
    %94 = tpu.memref_squeeze %93 : memref<1x256xf32, #tpu.memory_space<vmem>> -> memref<256xf32, #tpu.memory_space<vmem>>
    tpu.enqueue_dma source(%92 : memref<256xf32, #tpu.memory_space<any>>) target(%94 : memref<256xf32, #tpu.memory_space<vmem>>) target_semaphore(%arg11 : memref<!tpu.dma_semaphore, #tpu.memory_space<semaphore_mem>>)
    %c19 = arith.constant 19 : index
    %95 = memref.load %arg0[%c19] : memref<32xi32, #tpu.memory_space<smem>>
    %c19_i32 = arith.constant 19 : i32
    %c0_i32_38 = arith.constant 0 : i32
    %96 = tpu.memref_slice %arg1[%95, %c0_i32_38] : memref<58559x256xf32, #tpu.memory_space<any>> -> memref<1x256xf32, #tpu.memory_space<any>>
    %97 = tpu.memref_squeeze %96 : memref<1x256xf32, #tpu.memory_space<any>> -> memref<256xf32, #tpu.memory_space<any>>
    %c0_i32_39 = arith.constant 0 : i32
    %98 = tpu.memref_slice %arg10[%c19_i32, %c0_i32_39] : memref<32x256xf32, #tpu.memory_space<vmem>> -> memref<1x256xf32, #tpu.memory_space<vmem>>
    %99 = tpu.memref_squeeze %98 : memref<1x256xf32, #tpu.memory_space<vmem>> -> memref<256xf32, #tpu.memory_space<vmem>>
    tpu.enqueue_dma source(%97 : memref<256xf32, #tpu.memory_space<any>>) target(%99 : memref<256xf32, #tpu.memory_space<vmem>>) target_semaphore(%arg11 : memref<!tpu.dma_semaphore, #tpu.memory_space<semaphore_mem>>)
    %c20 = arith.constant 20 : index
    %100 = memref.load %arg0[%c20] : memref<32xi32, #tpu.memory_space<smem>>
    %c20_i32 = arith.constant 20 : i32
    %c0_i32_40 = arith.constant 0 : i32
    %101 = tpu.memref_slice %arg1[%100, %c0_i32_40] : memref<58559x256xf32, #tpu.memory_space<any>> -> memref<1x256xf32, #tpu.memory_space<any>>
    %102 = tpu.memref_squeeze %101 : memref<1x256xf32, #tpu.memory_space<any>> -> memref<256xf32, #tpu.memory_space<any>>
    %c0_i32_41 = arith.constant 0 : i32
    %103 = tpu.memref_slice %arg10[%c20_i32, %c0_i32_41] : memref<32x256xf32, #tpu.memory_space<vmem>> -> memref<1x256xf32, #tpu.memory_space<vmem>>
    %104 = tpu.memref_squeeze %103 : memref<1x256xf32, #tpu.memory_space<vmem>> -> memref<256xf32, #tpu.memory_space<vmem>>
    tpu.enqueue_dma source(%102 : memref<256xf32, #tpu.memory_space<any>>) target(%104 : memref<256xf32, #tpu.memory_space<vmem>>) target_semaphore(%arg11 : memref<!tpu.dma_semaphore, #tpu.memory_space<semaphore_mem>>)
    %c21 = arith.constant 21 : index
    %105 = memref.load %arg0[%c21] : memref<32xi32, #tpu.memory_space<smem>>
    %c21_i32 = arith.constant 21 : i32
    %c0_i32_42 = arith.constant 0 : i32
    %106 = tpu.memref_slice %arg1[%105, %c0_i32_42] : memref<58559x256xf32, #tpu.memory_space<any>> -> memref<1x256xf32, #tpu.memory_space<any>>
    %107 = tpu.memref_squeeze %106 : memref<1x256xf32, #tpu.memory_space<any>> -> memref<256xf32, #tpu.memory_space<any>>
    %c0_i32_43 = arith.constant 0 : i32
    %108 = tpu.memref_slice %arg10[%c21_i32, %c0_i32_43] : memref<32x256xf32, #tpu.memory_space<vmem>> -> memref<1x256xf32, #tpu.memory_space<vmem>>
    %109 = tpu.memref_squeeze %108 : memref<1x256xf32, #tpu.memory_space<vmem>> -> memref<256xf32, #tpu.memory_space<vmem>>
    tpu.enqueue_dma source(%107 : memref<256xf32, #tpu.memory_space<any>>) target(%109 : memref<256xf32, #tpu.memory_space<vmem>>) target_semaphore(%arg11 : memref<!tpu.dma_semaphore, #tpu.memory_space<semaphore_mem>>)
    %c22 = arith.constant 22 : index
    %110 = memref.load %arg0[%c22] : memref<32xi32, #tpu.memory_space<smem>>
    %c22_i32 = arith.constant 22 : i32
    %c0_i32_44 = arith.constant 0 : i32
    %111 = tpu.memref_slice %arg1[%110, %c0_i32_44] : memref<58559x256xf32, #tpu.memory_space<any>> -> memref<1x256xf32, #tpu.memory_space<any>>
    %112 = tpu.memref_squeeze %111 : memref<1x256xf32, #tpu.memory_space<any>> -> memref<256xf32, #tpu.memory_space<any>>
    %c0_i32_45 = arith.constant 0 : i32
    %113 = tpu.memref_slice %arg10[%c22_i32, %c0_i32_45] : memref<32x256xf32, #tpu.memory_space<vmem>> -> memref<1x256xf32, #tpu.memory_space<vmem>>
    %114 = tpu.memref_squeeze %113 : memref<1x256xf32, #tpu.memory_space<vmem>> -> memref<256xf32, #tpu.memory_space<vmem>>
    tpu.enqueue_dma source(%112 : memref<256xf32, #tpu.memory_space<any>>) target(%114 : memref<256xf32, #tpu.memory_space<vmem>>) target_semaphore(%arg11 : memref<!tpu.dma_semaphore, #tpu.memory_space<semaphore_mem>>)
    %c23 = arith.constant 23 : index
    %115 = memref.load %arg0[%c23] : memref<32xi32, #tpu.memory_space<smem>>
    %c23_i32 = arith.constant 23 : i32
    %c0_i32_46 = arith.constant 0 : i32
    %116 = tpu.memref_slice %arg1[%115, %c0_i32_46] : memref<58559x256xf32, #tpu.memory_space<any>> -> memref<1x256xf32, #tpu.memory_space<any>>
    %117 = tpu.memref_squeeze %116 : memref<1x256xf32, #tpu.memory_space<any>> -> memref<256xf32, #tpu.memory_space<any>>
    %c0_i32_47 = arith.constant 0 : i32
    %118 = tpu.memref_slice %arg10[%c23_i32, %c0_i32_47] : memref<32x256xf32, #tpu.memory_space<vmem>> -> memref<1x256xf32, #tpu.memory_space<vmem>>
    %119 = tpu.memref_squeeze %118 : memref<1x256xf32, #tpu.memory_space<vmem>> -> memref<256xf32, #tpu.memory_space<vmem>>
    tpu.enqueue_dma source(%117 : memref<256xf32, #tpu.memory_space<any>>) target(%119 : memref<256xf32, #tpu.memory_space<vmem>>) target_semaphore(%arg11 : memref<!tpu.dma_semaphore, #tpu.memory_space<semaphore_mem>>)
    %c24 = arith.constant 24 : index
    %120 = memref.load %arg0[%c24] : memref<32xi32, #tpu.memory_space<smem>>
    %c24_i32 = arith.constant 24 : i32
    %c0_i32_48 = arith.constant 0 : i32
    %121 = tpu.memref_slice %arg1[%120, %c0_i32_48] : memref<58559x256xf32, #tpu.memory_space<any>> -> memref<1x256xf32, #tpu.memory_space<any>>
    %122 = tpu.memref_squeeze %121 : memref<1x256xf32, #tpu.memory_space<any>> -> memref<256xf32, #tpu.memory_space<any>>
    %c0_i32_49 = arith.constant 0 : i32
    %123 = tpu.memref_slice %arg10[%c24_i32, %c0_i32_49] : memref<32x256xf32, #tpu.memory_space<vmem>> -> memref<1x256xf32, #tpu.memory_space<vmem>>
    %124 = tpu.memref_squeeze %123 : memref<1x256xf32, #tpu.memory_space<vmem>> -> memref<256xf32, #tpu.memory_space<vmem>>
    tpu.enqueue_dma source(%122 : memref<256xf32, #tpu.memory_space<any>>) target(%124 : memref<256xf32, #tpu.memory_space<vmem>>) target_semaphore(%arg11 : memref<!tpu.dma_semaphore, #tpu.memory_space<semaphore_mem>>)
    %c25 = arith.constant 25 : index
    %125 = memref.load %arg0[%c25] : memref<32xi32, #tpu.memory_space<smem>>
    %c25_i32 = arith.constant 25 : i32
    %c0_i32_50 = arith.constant 0 : i32
    %126 = tpu.memref_slice %arg1[%125, %c0_i32_50] : memref<58559x256xf32, #tpu.memory_space<any>> -> memref<1x256xf32, #tpu.memory_space<any>>
    %127 = tpu.memref_squeeze %126 : memref<1x256xf32, #tpu.memory_space<any>> -> memref<256xf32, #tpu.memory_space<any>>
    %c0_i32_51 = arith.constant 0 : i32
    %128 = tpu.memref_slice %arg10[%c25_i32, %c0_i32_51] : memref<32x256xf32, #tpu.memory_space<vmem>> -> memref<1x256xf32, #tpu.memory_space<vmem>>
    %129 = tpu.memref_squeeze %128 : memref<1x256xf32, #tpu.memory_space<vmem>> -> memref<256xf32, #tpu.memory_space<vmem>>
    tpu.enqueue_dma source(%127 : memref<256xf32, #tpu.memory_space<any>>) target(%129 : memref<256xf32, #tpu.memory_space<vmem>>) target_semaphore(%arg11 : memref<!tpu.dma_semaphore, #tpu.memory_space<semaphore_mem>>)
    %c26 = arith.constant 26 : index
    %130 = memref.load %arg0[%c26] : memref<32xi32, #tpu.memory_space<smem>>
    %c26_i32 = arith.constant 26 : i32
    %c0_i32_52 = arith.constant 0 : i32
    %131 = tpu.memref_slice %arg1[%130, %c0_i32_52] : memref<58559x256xf32, #tpu.memory_space<any>> -> memref<1x256xf32, #tpu.memory_space<any>>
    %132 = tpu.memref_squeeze %131 : memref<1x256xf32, #tpu.memory_space<any>> -> memref<256xf32, #tpu.memory_space<any>>
    %c0_i32_53 = arith.constant 0 : i32
    %133 = tpu.memref_slice %arg10[%c26_i32, %c0_i32_53] : memref<32x256xf32, #tpu.memory_space<vmem>> -> memref<1x256xf32, #tpu.memory_space<vmem>>
    %134 = tpu.memref_squeeze %133 : memref<1x256xf32, #tpu.memory_space<vmem>> -> memref<256xf32, #tpu.memory_space<vmem>>
    tpu.enqueue_dma source(%132 : memref<256xf32, #tpu.memory_space<any>>) target(%134 : memref<256xf32, #tpu.memory_space<vmem>>) target_semaphore(%arg11 : memref<!tpu.dma_semaphore, #tpu.memory_space<semaphore_mem>>)
    %c27 = arith.constant 27 : index
    %135 = memref.load %arg0[%c27] : memref<32xi32, #tpu.memory_space<smem>>
    %c27_i32 = arith.constant 27 : i32
    %c0_i32_54 = arith.constant 0 : i32
    %136 = tpu.memref_slice %arg1[%135, %c0_i32_54] : memref<58559x256xf32, #tpu.memory_space<any>> -> memref<1x256xf32, #tpu.memory_space<any>>
    %137 = tpu.memref_squeeze %136 : memref<1x256xf32, #tpu.memory_space<any>> -> memref<256xf32, #tpu.memory_space<any>>
    %c0_i32_55 = arith.constant 0 : i32
    %138 = tpu.memref_slice %arg10[%c27_i32, %c0_i32_55] : memref<32x256xf32, #tpu.memory_space<vmem>> -> memref<1x256xf32, #tpu.memory_space<vmem>>
    %139 = tpu.memref_squeeze %138 : memref<1x256xf32, #tpu.memory_space<vmem>> -> memref<256xf32, #tpu.memory_space<vmem>>
    tpu.enqueue_dma source(%137 : memref<256xf32, #tpu.memory_space<any>>) target(%139 : memref<256xf32, #tpu.memory_space<vmem>>) target_semaphore(%arg11 : memref<!tpu.dma_semaphore, #tpu.memory_space<semaphore_mem>>)
    %c28 = arith.constant 28 : index
    %140 = memref.load %arg0[%c28] : memref<32xi32, #tpu.memory_space<smem>>
    %c28_i32 = arith.constant 28 : i32
    %c0_i32_56 = arith.constant 0 : i32
    %141 = tpu.memref_slice %arg1[%140, %c0_i32_56] : memref<58559x256xf32, #tpu.memory_space<any>> -> memref<1x256xf32, #tpu.memory_space<any>>
    %142 = tpu.memref_squeeze %141 : memref<1x256xf32, #tpu.memory_space<any>> -> memref<256xf32, #tpu.memory_space<any>>
    %c0_i32_57 = arith.constant 0 : i32
    %143 = tpu.memref_slice %arg10[%c28_i32, %c0_i32_57] : memref<32x256xf32, #tpu.memory_space<vmem>> -> memref<1x256xf32, #tpu.memory_space<vmem>>
    %144 = tpu.memref_squeeze %143 : memref<1x256xf32, #tpu.memory_space<vmem>> -> memref<256xf32, #tpu.memory_space<vmem>>
    tpu.enqueue_dma source(%142 : memref<256xf32, #tpu.memory_space<any>>) target(%144 : memref<256xf32, #tpu.memory_space<vmem>>) target_semaphore(%arg11 : memref<!tpu.dma_semaphore, #tpu.memory_space<semaphore_mem>>)
    %c29 = arith.constant 29 : index
    %145 = memref.load %arg0[%c29] : memref<32xi32, #tpu.memory_space<smem>>
    %c29_i32 = arith.constant 29 : i32
    %c0_i32_58 = arith.constant 0 : i32
    %146 = tpu.memref_slice %arg1[%145, %c0_i32_58] : memref<58559x256xf32, #tpu.memory_space<any>> -> memref<1x256xf32, #tpu.memory_space<any>>
    %147 = tpu.memref_squeeze %146 : memref<1x256xf32, #tpu.memory_space<any>> -> memref<256xf32, #tpu.memory_space<any>>
    %c0_i32_59 = arith.constant 0 : i32
    %148 = tpu.memref_slice %arg10[%c29_i32, %c0_i32_59] : memref<32x256xf32, #tpu.memory_space<vmem>> -> memref<1x256xf32, #tpu.memory_space<vmem>>
    %149 = tpu.memref_squeeze %148 : memref<1x256xf32, #tpu.memory_space<vmem>> -> memref<256xf32, #tpu.memory_space<vmem>>
    tpu.enqueue_dma source(%147 : memref<256xf32, #tpu.memory_space<any>>) target(%149 : memref<256xf32, #tpu.memory_space<vmem>>) target_semaphore(%arg11 : memref<!tpu.dma_semaphore, #tpu.memory_space<semaphore_mem>>)
    %c30 = arith.constant 30 : index
    %150 = memref.load %arg0[%c30] : memref<32xi32, #tpu.memory_space<smem>>
    %c30_i32 = arith.constant 30 : i32
    %c0_i32_60 = arith.constant 0 : i32
    %151 = tpu.memref_slice %arg1[%150, %c0_i32_60] : memref<58559x256xf32, #tpu.memory_space<any>> -> memref<1x256xf32, #tpu.memory_space<any>>
    %152 = tpu.memref_squeeze %151 : memref<1x256xf32, #tpu.memory_space<any>> -> memref<256xf32, #tpu.memory_space<any>>
    %c0_i32_61 = arith.constant 0 : i32
    %153 = tpu.memref_slice %arg10[%c30_i32, %c0_i32_61] : memref<32x256xf32, #tpu.memory_space<vmem>> -> memref<1x256xf32, #tpu.memory_space<vmem>>
    %154 = tpu.memref_squeeze %153 : memref<1x256xf32, #tpu.memory_space<vmem>> -> memref<256xf32, #tpu.memory_space<vmem>>
    tpu.enqueue_dma source(%152 : memref<256xf32, #tpu.memory_space<any>>) target(%154 : memref<256xf32, #tpu.memory_space<vmem>>) target_semaphore(%arg11 : memref<!tpu.dma_semaphore, #tpu.memory_space<semaphore_mem>>)
    %c31 = arith.constant 31 : index
    %155 = memref.load %arg0[%c31] : memref<32xi32, #tpu.memory_space<smem>>
    %c31_i32 = arith.constant 31 : i32
    %c0_i32_62 = arith.constant 0 : i32
    %156 = tpu.memref_slice %arg1[%155, %c0_i32_62] : memref<58559x256xf32, #tpu.memory_space<any>> -> memref<1x256xf32, #tpu.memory_space<any>>
    %157 = tpu.memref_squeeze %156 : memref<1x256xf32, #tpu.memory_space<any>> -> memref<256xf32, #tpu.memory_space<any>>
    %c0_i32_63 = arith.constant 0 : i32
    %158 = tpu.memref_slice %arg10[%c31_i32, %c0_i32_63] : memref<32x256xf32, #tpu.memory_space<vmem>> -> memref<1x256xf32, #tpu.memory_space<vmem>>
    %159 = tpu.memref_squeeze %158 : memref<1x256xf32, #tpu.memory_space<vmem>> -> memref<256xf32, #tpu.memory_space<vmem>>
    tpu.enqueue_dma source(%157 : memref<256xf32, #tpu.memory_space<any>>) target(%159 : memref<256xf32, #tpu.memory_space<vmem>>) target_semaphore(%arg11 : memref<!tpu.dma_semaphore, #tpu.memory_space<semaphore_mem>>)
    %c0_i32_64 = arith.constant 0 : i32
    %c0_i32_65 = arith.constant 0 : i32
    %160 = tpu.memref_slice %arg1[%0, %c0_i32_65] : memref<58559x256xf32, #tpu.memory_space<any>> -> memref<1x256xf32, #tpu.memory_space<any>>
    %161 = tpu.memref_squeeze %160 : memref<1x256xf32, #tpu.memory_space<any>> -> memref<256xf32, #tpu.memory_space<any>>
    %c0_i32_66 = arith.constant 0 : i32
    %162 = tpu.memref_slice %arg10[%c0_i32_64, %c0_i32_66] : memref<32x256xf32, #tpu.memory_space<vmem>> -> memref<1x256xf32, #tpu.memory_space<vmem>>
    %163 = tpu.memref_squeeze %162 : memref<1x256xf32, #tpu.memory_space<vmem>> -> memref<256xf32, #tpu.memory_space<vmem>>
    tpu.wait_dma2 semaphore(%arg11 : memref<!tpu.dma_semaphore, #tpu.memory_space<semaphore_mem>>) src(%161 : memref<256xf32, #tpu.memory_space<any>>) dst(%163 : memref<256xf32, #tpu.memory_space<vmem>>)
    %c1_i32_67 = arith.constant 1 : i32
    %c0_i32_68 = arith.constant 0 : i32
    %164 = tpu.memref_slice %arg1[%5, %c0_i32_68] : memref<58559x256xf32, #tpu.memory_space<any>> -> memref<1x256xf32, #tpu.memory_space<any>>
    %165 = tpu.memref_squeeze %164 : memref<1x256xf32, #tpu.memory_space<any>> -> memref<256xf32, #tpu.memory_space<any>>
    %c0_i32_69 = arith.constant 0 : i32
    %166 = tpu.memref_slice %arg10[%c1_i32_67, %c0_i32_69] : memref<32x256xf32, #tpu.memory_space<vmem>> -> memref<1x256xf32, #tpu.memory_space<vmem>>
    %167 = tpu.memref_squeeze %166 : memref<1x256xf32, #tpu.memory_space<vmem>> -> memref<256xf32, #tpu.memory_space<vmem>>
    tpu.wait_dma2 semaphore(%arg11 : memref<!tpu.dma_semaphore, #tpu.memory_space<semaphore_mem>>) src(%165 : memref<256xf32, #tpu.memory_space<any>>) dst(%167 : memref<256xf32, #tpu.memory_space<vmem>>)
    %c2_i32_70 = arith.constant 2 : i32
    %c0_i32_71 = arith.constant 0 : i32
    %168 = tpu.memref_slice %arg1[%10, %c0_i32_71] : memref<58559x256xf32, #tpu.memory_space<any>> -> memref<1x256xf32, #tpu.memory_space<any>>
    %169 = tpu.memref_squeeze %168 : memref<1x256xf32, #tpu.memory_space<any>> -> memref<256xf32, #tpu.memory_space<any>>
    %c0_i32_72 = arith.constant 0 : i32
    %170 = tpu.memref_slice %arg10[%c2_i32_70, %c0_i32_72] : memref<32x256xf32, #tpu.memory_space<vmem>> -> memref<1x256xf32, #tpu.memory_space<vmem>>
    %171 = tpu.memref_squeeze %170 : memref<1x256xf32, #tpu.memory_space<vmem>> -> memref<256xf32, #tpu.memory_space<vmem>>
    tpu.wait_dma2 semaphore(%arg11 : memref<!tpu.dma_semaphore, #tpu.memory_space<semaphore_mem>>) src(%169 : memref<256xf32, #tpu.memory_space<any>>) dst(%171 : memref<256xf32, #tpu.memory_space<vmem>>)
    %c3_i32_73 = arith.constant 3 : i32
    %c0_i32_74 = arith.constant 0 : i32
    %172 = tpu.memref_slice %arg1[%15, %c0_i32_74] : memref<58559x256xf32, #tpu.memory_space<any>> -> memref<1x256xf32, #tpu.memory_space<any>>
    %173 = tpu.memref_squeeze %172 : memref<1x256xf32, #tpu.memory_space<any>> -> memref<256xf32, #tpu.memory_space<any>>
    %c0_i32_75 = arith.constant 0 : i32
    %174 = tpu.memref_slice %arg10[%c3_i32_73, %c0_i32_75] : memref<32x256xf32, #tpu.memory_space<vmem>> -> memref<1x256xf32, #tpu.memory_space<vmem>>
    %175 = tpu.memref_squeeze %174 : memref<1x256xf32, #tpu.memory_space<vmem>> -> memref<256xf32, #tpu.memory_space<vmem>>
    tpu.wait_dma2 semaphore(%arg11 : memref<!tpu.dma_semaphore, #tpu.memory_space<semaphore_mem>>) src(%173 : memref<256xf32, #tpu.memory_space<any>>) dst(%175 : memref<256xf32, #tpu.memory_space<vmem>>)
    %c4_i32_76 = arith.constant 4 : i32
    %c0_i32_77 = arith.constant 0 : i32
    %176 = tpu.memref_slice %arg1[%20, %c0_i32_77] : memref<58559x256xf32, #tpu.memory_space<any>> -> memref<1x256xf32, #tpu.memory_space<any>>
    %177 = tpu.memref_squeeze %176 : memref<1x256xf32, #tpu.memory_space<any>> -> memref<256xf32, #tpu.memory_space<any>>
    %c0_i32_78 = arith.constant 0 : i32
    %178 = tpu.memref_slice %arg10[%c4_i32_76, %c0_i32_78] : memref<32x256xf32, #tpu.memory_space<vmem>> -> memref<1x256xf32, #tpu.memory_space<vmem>>
    %179 = tpu.memref_squeeze %178 : memref<1x256xf32, #tpu.memory_space<vmem>> -> memref<256xf32, #tpu.memory_space<vmem>>
    tpu.wait_dma2 semaphore(%arg11 : memref<!tpu.dma_semaphore, #tpu.memory_space<semaphore_mem>>) src(%177 : memref<256xf32, #tpu.memory_space<any>>) dst(%179 : memref<256xf32, #tpu.memory_space<vmem>>)
    %c5_i32_79 = arith.constant 5 : i32
    %c0_i32_80 = arith.constant 0 : i32
    %180 = tpu.memref_slice %arg1[%25, %c0_i32_80] : memref<58559x256xf32, #tpu.memory_space<any>> -> memref<1x256xf32, #tpu.memory_space<any>>
    %181 = tpu.memref_squeeze %180 : memref<1x256xf32, #tpu.memory_space<any>> -> memref<256xf32, #tpu.memory_space<any>>
    %c0_i32_81 = arith.constant 0 : i32
    %182 = tpu.memref_slice %arg10[%c5_i32_79, %c0_i32_81] : memref<32x256xf32, #tpu.memory_space<vmem>> -> memref<1x256xf32, #tpu.memory_space<vmem>>
    %183 = tpu.memref_squeeze %182 : memref<1x256xf32, #tpu.memory_space<vmem>> -> memref<256xf32, #tpu.memory_space<vmem>>
    tpu.wait_dma2 semaphore(%arg11 : memref<!tpu.dma_semaphore, #tpu.memory_space<semaphore_mem>>) src(%181 : memref<256xf32, #tpu.memory_space<any>>) dst(%183 : memref<256xf32, #tpu.memory_space<vmem>>)
    %c6_i32_82 = arith.constant 6 : i32
    %c0_i32_83 = arith.constant 0 : i32
    %184 = tpu.memref_slice %arg1[%30, %c0_i32_83] : memref<58559x256xf32, #tpu.memory_space<any>> -> memref<1x256xf32, #tpu.memory_space<any>>
    %185 = tpu.memref_squeeze %184 : memref<1x256xf32, #tpu.memory_space<any>> -> memref<256xf32, #tpu.memory_space<any>>
    %c0_i32_84 = arith.constant 0 : i32
    %186 = tpu.memref_slice %arg10[%c6_i32_82, %c0_i32_84] : memref<32x256xf32, #tpu.memory_space<vmem>> -> memref<1x256xf32, #tpu.memory_space<vmem>>
    %187 = tpu.memref_squeeze %186 : memref<1x256xf32, #tpu.memory_space<vmem>> -> memref<256xf32, #tpu.memory_space<vmem>>
    tpu.wait_dma2 semaphore(%arg11 : memref<!tpu.dma_semaphore, #tpu.memory_space<semaphore_mem>>) src(%185 : memref<256xf32, #tpu.memory_space<any>>) dst(%187 : memref<256xf32, #tpu.memory_space<vmem>>)
    %c7_i32_85 = arith.constant 7 : i32
    %c0_i32_86 = arith.constant 0 : i32
    %188 = tpu.memref_slice %arg1[%35, %c0_i32_86] : memref<58559x256xf32, #tpu.memory_space<any>> -> memref<1x256xf32, #tpu.memory_space<any>>
    %189 = tpu.memref_squeeze %188 : memref<1x256xf32, #tpu.memory_space<any>> -> memref<256xf32, #tpu.memory_space<any>>
    %c0_i32_87 = arith.constant 0 : i32
    %190 = tpu.memref_slice %arg10[%c7_i32_85, %c0_i32_87] : memref<32x256xf32, #tpu.memory_space<vmem>> -> memref<1x256xf32, #tpu.memory_space<vmem>>
    %191 = tpu.memref_squeeze %190 : memref<1x256xf32, #tpu.memory_space<vmem>> -> memref<256xf32, #tpu.memory_space<vmem>>
    tpu.wait_dma2 semaphore(%arg11 : memref<!tpu.dma_semaphore, #tpu.memory_space<semaphore_mem>>) src(%189 : memref<256xf32, #tpu.memory_space<any>>) dst(%191 : memref<256xf32, #tpu.memory_space<vmem>>)
    %c8_i32_88 = arith.constant 8 : i32
    %c0_i32_89 = arith.constant 0 : i32
    %192 = tpu.memref_slice %arg1[%40, %c0_i32_89] : memref<58559x256xf32, #tpu.memory_space<any>> -> memref<1x256xf32, #tpu.memory_space<any>>
    %193 = tpu.memref_squeeze %192 : memref<1x256xf32, #tpu.memory_space<any>> -> memref<256xf32, #tpu.memory_space<any>>
    %c0_i32_90 = arith.constant 0 : i32
    %194 = tpu.memref_slice %arg10[%c8_i32_88, %c0_i32_90] : memref<32x256xf32, #tpu.memory_space<vmem>> -> memref<1x256xf32, #tpu.memory_space<vmem>>
    %195 = tpu.memref_squeeze %194 : memref<1x256xf32, #tpu.memory_space<vmem>> -> memref<256xf32, #tpu.memory_space<vmem>>
    tpu.wait_dma2 semaphore(%arg11 : memref<!tpu.dma_semaphore, #tpu.memory_space<semaphore_mem>>) src(%193 : memref<256xf32, #tpu.memory_space<any>>) dst(%195 : memref<256xf32, #tpu.memory_space<vmem>>)
    %c9_i32_91 = arith.constant 9 : i32
    %c0_i32_92 = arith.constant 0 : i32
    %196 = tpu.memref_slice %arg1[%45, %c0_i32_92] : memref<58559x256xf32, #tpu.memory_space<any>> -> memref<1x256xf32, #tpu.memory_space<any>>
    %197 = tpu.memref_squeeze %196 : memref<1x256xf32, #tpu.memory_space<any>> -> memref<256xf32, #tpu.memory_space<any>>
    %c0_i32_93 = arith.constant 0 : i32
    %198 = tpu.memref_slice %arg10[%c9_i32_91, %c0_i32_93] : memref<32x256xf32, #tpu.memory_space<vmem>> -> memref<1x256xf32, #tpu.memory_space<vmem>>
    %199 = tpu.memref_squeeze %198 : memref<1x256xf32, #tpu.memory_space<vmem>> -> memref<256xf32, #tpu.memory_space<vmem>>
    tpu.wait_dma2 semaphore(%arg11 : memref<!tpu.dma_semaphore, #tpu.memory_space<semaphore_mem>>) src(%197 : memref<256xf32, #tpu.memory_space<any>>) dst(%199 : memref<256xf32, #tpu.memory_space<vmem>>)
    %c10_i32_94 = arith.constant 10 : i32
    %c0_i32_95 = arith.constant 0 : i32
    %200 = tpu.memref_slice %arg1[%50, %c0_i32_95] : memref<58559x256xf32, #tpu.memory_space<any>> -> memref<1x256xf32, #tpu.memory_space<any>>
    %201 = tpu.memref_squeeze %200 : memref<1x256xf32, #tpu.memory_space<any>> -> memref<256xf32, #tpu.memory_space<any>>
    %c0_i32_96 = arith.constant 0 : i32
    %202 = tpu.memref_slice %arg10[%c10_i32_94, %c0_i32_96] : memref<32x256xf32, #tpu.memory_space<vmem>> -> memref<1x256xf32, #tpu.memory_space<vmem>>
    %203 = tpu.memref_squeeze %202 : memref<1x256xf32, #tpu.memory_space<vmem>> -> memref<256xf32, #tpu.memory_space<vmem>>
    tpu.wait_dma2 semaphore(%arg11 : memref<!tpu.dma_semaphore, #tpu.memory_space<semaphore_mem>>) src(%201 : memref<256xf32, #tpu.memory_space<any>>) dst(%203 : memref<256xf32, #tpu.memory_space<vmem>>)
    %c11_i32_97 = arith.constant 11 : i32
    %c0_i32_98 = arith.constant 0 : i32
    %204 = tpu.memref_slice %arg1[%55, %c0_i32_98] : memref<58559x256xf32, #tpu.memory_space<any>> -> memref<1x256xf32, #tpu.memory_space<any>>
    %205 = tpu.memref_squeeze %204 : memref<1x256xf32, #tpu.memory_space<any>> -> memref<256xf32, #tpu.memory_space<any>>
    %c0_i32_99 = arith.constant 0 : i32
    %206 = tpu.memref_slice %arg10[%c11_i32_97, %c0_i32_99] : memref<32x256xf32, #tpu.memory_space<vmem>> -> memref<1x256xf32, #tpu.memory_space<vmem>>
    %207 = tpu.memref_squeeze %206 : memref<1x256xf32, #tpu.memory_space<vmem>> -> memref<256xf32, #tpu.memory_space<vmem>>
    tpu.wait_dma2 semaphore(%arg11 : memref<!tpu.dma_semaphore, #tpu.memory_space<semaphore_mem>>) src(%205 : memref<256xf32, #tpu.memory_space<any>>) dst(%207 : memref<256xf32, #tpu.memory_space<vmem>>)
    %c12_i32_100 = arith.constant 12 : i32
    %c0_i32_101 = arith.constant 0 : i32
    %208 = tpu.memref_slice %arg1[%60, %c0_i32_101] : memref<58559x256xf32, #tpu.memory_space<any>> -> memref<1x256xf32, #tpu.memory_space<any>>
    %209 = tpu.memref_squeeze %208 : memref<1x256xf32, #tpu.memory_space<any>> -> memref<256xf32, #tpu.memory_space<any>>
    %c0_i32_102 = arith.constant 0 : i32
    %210 = tpu.memref_slice %arg10[%c12_i32_100, %c0_i32_102] : memref<32x256xf32, #tpu.memory_space<vmem>> -> memref<1x256xf32, #tpu.memory_space<vmem>>
    %211 = tpu.memref_squeeze %210 : memref<1x256xf32, #tpu.memory_space<vmem>> -> memref<256xf32, #tpu.memory_space<vmem>>
    tpu.wait_dma2 semaphore(%arg11 : memref<!tpu.dma_semaphore, #tpu.memory_space<semaphore_mem>>) src(%209 : memref<256xf32, #tpu.memory_space<any>>) dst(%211 : memref<256xf32, #tpu.memory_space<vmem>>)
    %c13_i32_103 = arith.constant 13 : i32
    %c0_i32_104 = arith.constant 0 : i32
    %212 = tpu.memref_slice %arg1[%65, %c0_i32_104] : memref<58559x256xf32, #tpu.memory_space<any>> -> memref<1x256xf32, #tpu.memory_space<any>>
    %213 = tpu.memref_squeeze %212 : memref<1x256xf32, #tpu.memory_space<any>> -> memref<256xf32, #tpu.memory_space<any>>
    %c0_i32_105 = arith.constant 0 : i32
    %214 = tpu.memref_slice %arg10[%c13_i32_103, %c0_i32_105] : memref<32x256xf32, #tpu.memory_space<vmem>> -> memref<1x256xf32, #tpu.memory_space<vmem>>
    %215 = tpu.memref_squeeze %214 : memref<1x256xf32, #tpu.memory_space<vmem>> -> memref<256xf32, #tpu.memory_space<vmem>>
    tpu.wait_dma2 semaphore(%arg11 : memref<!tpu.dma_semaphore, #tpu.memory_space<semaphore_mem>>) src(%213 : memref<256xf32, #tpu.memory_space<any>>) dst(%215 : memref<256xf32, #tpu.memory_space<vmem>>)
    %c14_i32_106 = arith.constant 14 : i32
    %c0_i32_107 = arith.constant 0 : i32
    %216 = tpu.memref_slice %arg1[%70, %c0_i32_107] : memref<58559x256xf32, #tpu.memory_space<any>> -> memref<1x256xf32, #tpu.memory_space<any>>
    %217 = tpu.memref_squeeze %216 : memref<1x256xf32, #tpu.memory_space<any>> -> memref<256xf32, #tpu.memory_space<any>>
    %c0_i32_108 = arith.constant 0 : i32
    %218 = tpu.memref_slice %arg10[%c14_i32_106, %c0_i32_108] : memref<32x256xf32, #tpu.memory_space<vmem>> -> memref<1x256xf32, #tpu.memory_space<vmem>>
    %219 = tpu.memref_squeeze %218 : memref<1x256xf32, #tpu.memory_space<vmem>> -> memref<256xf32, #tpu.memory_space<vmem>>
    tpu.wait_dma2 semaphore(%arg11 : memref<!tpu.dma_semaphore, #tpu.memory_space<semaphore_mem>>) src(%217 : memref<256xf32, #tpu.memory_space<any>>) dst(%219 : memref<256xf32, #tpu.memory_space<vmem>>)
    %c15_i32_109 = arith.constant 15 : i32
    %c0_i32_110 = arith.constant 0 : i32
    %220 = tpu.memref_slice %arg1[%75, %c0_i32_110] : memref<58559x256xf32, #tpu.memory_space<any>> -> memref<1x256xf32, #tpu.memory_space<any>>
    %221 = tpu.memref_squeeze %220 : memref<1x256xf32, #tpu.memory_space<any>> -> memref<256xf32, #tpu.memory_space<any>>
    %c0_i32_111 = arith.constant 0 : i32
    %222 = tpu.memref_slice %arg10[%c15_i32_109, %c0_i32_111] : memref<32x256xf32, #tpu.memory_space<vmem>> -> memref<1x256xf32, #tpu.memory_space<vmem>>
    %223 = tpu.memref_squeeze %222 : memref<1x256xf32, #tpu.memory_space<vmem>> -> memref<256xf32, #tpu.memory_space<vmem>>
    tpu.wait_dma2 semaphore(%arg11 : memref<!tpu.dma_semaphore, #tpu.memory_space<semaphore_mem>>) src(%221 : memref<256xf32, #tpu.memory_space<any>>) dst(%223 : memref<256xf32, #tpu.memory_space<vmem>>)
    %c16_i32_112 = arith.constant 16 : i32
    %c0_i32_113 = arith.constant 0 : i32
    %224 = tpu.memref_slice %arg1[%80, %c0_i32_113] : memref<58559x256xf32, #tpu.memory_space<any>> -> memref<1x256xf32, #tpu.memory_space<any>>
    %225 = tpu.memref_squeeze %224 : memref<1x256xf32, #tpu.memory_space<any>> -> memref<256xf32, #tpu.memory_space<any>>
    %c0_i32_114 = arith.constant 0 : i32
    %226 = tpu.memref_slice %arg10[%c16_i32_112, %c0_i32_114] : memref<32x256xf32, #tpu.memory_space<vmem>> -> memref<1x256xf32, #tpu.memory_space<vmem>>
    %227 = tpu.memref_squeeze %226 : memref<1x256xf32, #tpu.memory_space<vmem>> -> memref<256xf32, #tpu.memory_space<vmem>>
    tpu.wait_dma2 semaphore(%arg11 : memref<!tpu.dma_semaphore, #tpu.memory_space<semaphore_mem>>) src(%225 : memref<256xf32, #tpu.memory_space<any>>) dst(%227 : memref<256xf32, #tpu.memory_space<vmem>>)
    %c17_i32_115 = arith.constant 17 : i32
    %c0_i32_116 = arith.constant 0 : i32
    %228 = tpu.memref_slice %arg1[%85, %c0_i32_116] : memref<58559x256xf32, #tpu.memory_space<any>> -> memref<1x256xf32, #tpu.memory_space<any>>
    %229 = tpu.memref_squeeze %228 : memref<1x256xf32, #tpu.memory_space<any>> -> memref<256xf32, #tpu.memory_space<any>>
    %c0_i32_117 = arith.constant 0 : i32
    %230 = tpu.memref_slice %arg10[%c17_i32_115, %c0_i32_117] : memref<32x256xf32, #tpu.memory_space<vmem>> -> memref<1x256xf32, #tpu.memory_space<vmem>>
    %231 = tpu.memref_squeeze %230 : memref<1x256xf32, #tpu.memory_space<vmem>> -> memref<256xf32, #tpu.memory_space<vmem>>
    tpu.wait_dma2 semaphore(%arg11 : memref<!tpu.dma_semaphore, #tpu.memory_space<semaphore_mem>>) src(%229 : memref<256xf32, #tpu.memory_space<any>>) dst(%231 : memref<256xf32, #tpu.memory_space<vmem>>)
    %c18_i32_118 = arith.constant 18 : i32
    %c0_i32_119 = arith.constant 0 : i32
    %232 = tpu.memref_slice %arg1[%90, %c0_i32_119] : memref<58559x256xf32, #tpu.memory_space<any>> -> memref<1x256xf32, #tpu.memory_space<any>>
    %233 = tpu.memref_squeeze %232 : memref<1x256xf32, #tpu.memory_space<any>> -> memref<256xf32, #tpu.memory_space<any>>
    %c0_i32_120 = arith.constant 0 : i32
    %234 = tpu.memref_slice %arg10[%c18_i32_118, %c0_i32_120] : memref<32x256xf32, #tpu.memory_space<vmem>> -> memref<1x256xf32, #tpu.memory_space<vmem>>
    %235 = tpu.memref_squeeze %234 : memref<1x256xf32, #tpu.memory_space<vmem>> -> memref<256xf32, #tpu.memory_space<vmem>>
    tpu.wait_dma2 semaphore(%arg11 : memref<!tpu.dma_semaphore, #tpu.memory_space<semaphore_mem>>) src(%233 : memref<256xf32, #tpu.memory_space<any>>) dst(%235 : memref<256xf32, #tpu.memory_space<vmem>>)
    %c19_i32_121 = arith.constant 19 : i32
    %c0_i32_122 = arith.constant 0 : i32
    %236 = tpu.memref_slice %arg1[%95, %c0_i32_122] : memref<58559x256xf32, #tpu.memory_space<any>> -> memref<1x256xf32, #tpu.memory_space<any>>
    %237 = tpu.memref_squeeze %236 : memref<1x256xf32, #tpu.memory_space<any>> -> memref<256xf32, #tpu.memory_space<any>>
    %c0_i32_123 = arith.constant 0 : i32
    %238 = tpu.memref_slice %arg10[%c19_i32_121, %c0_i32_123] : memref<32x256xf32, #tpu.memory_space<vmem>> -> memref<1x256xf32, #tpu.memory_space<vmem>>
    %239 = tpu.memref_squeeze %238 : memref<1x256xf32, #tpu.memory_space<vmem>> -> memref<256xf32, #tpu.memory_space<vmem>>
    tpu.wait_dma2 semaphore(%arg11 : memref<!tpu.dma_semaphore, #tpu.memory_space<semaphore_mem>>) src(%237 : memref<256xf32, #tpu.memory_space<any>>) dst(%239 : memref<256xf32, #tpu.memory_space<vmem>>)
    %c20_i32_124 = arith.constant 20 : i32
    %c0_i32_125 = arith.constant 0 : i32
    %240 = tpu.memref_slice %arg1[%100, %c0_i32_125] : memref<58559x256xf32, #tpu.memory_space<any>> -> memref<1x256xf32, #tpu.memory_space<any>>
    %241 = tpu.memref_squeeze %240 : memref<1x256xf32, #tpu.memory_space<any>> -> memref<256xf32, #tpu.memory_space<any>>
    %c0_i32_126 = arith.constant 0 : i32
    %242 = tpu.memref_slice %arg10[%c20_i32_124, %c0_i32_126] : memref<32x256xf32, #tpu.memory_space<vmem>> -> memref<1x256xf32, #tpu.memory_space<vmem>>
    %243 = tpu.memref_squeeze %242 : memref<1x256xf32, #tpu.memory_space<vmem>> -> memref<256xf32, #tpu.memory_space<vmem>>
    tpu.wait_dma2 semaphore(%arg11 : memref<!tpu.dma_semaphore, #tpu.memory_space<semaphore_mem>>) src(%241 : memref<256xf32, #tpu.memory_space<any>>) dst(%243 : memref<256xf32, #tpu.memory_space<vmem>>)
    %c21_i32_127 = arith.constant 21 : i32
    %c0_i32_128 = arith.constant 0 : i32
    %244 = tpu.memref_slice %arg1[%105, %c0_i32_128] : memref<58559x256xf32, #tpu.memory_space<any>> -> memref<1x256xf32, #tpu.memory_space<any>>
    %245 = tpu.memref_squeeze %244 : memref<1x256xf32, #tpu.memory_space<any>> -> memref<256xf32, #tpu.memory_space<any>>
    %c0_i32_129 = arith.constant 0 : i32
    %246 = tpu.memref_slice %arg10[%c21_i32_127, %c0_i32_129] : memref<32x256xf32, #tpu.memory_space<vmem>> -> memref<1x256xf32, #tpu.memory_space<vmem>>
    %247 = tpu.memref_squeeze %246 : memref<1x256xf32, #tpu.memory_space<vmem>> -> memref<256xf32, #tpu.memory_space<vmem>>
    tpu.wait_dma2 semaphore(%arg11 : memref<!tpu.dma_semaphore, #tpu.memory_space<semaphore_mem>>) src(%245 : memref<256xf32, #tpu.memory_space<any>>) dst(%247 : memref<256xf32, #tpu.memory_space<vmem>>)
    %c22_i32_130 = arith.constant 22 : i32
    %c0_i32_131 = arith.constant 0 : i32
    %248 = tpu.memref_slice %arg1[%110, %c0_i32_131] : memref<58559x256xf32, #tpu.memory_space<any>> -> memref<1x256xf32, #tpu.memory_space<any>>
    %249 = tpu.memref_squeeze %248 : memref<1x256xf32, #tpu.memory_space<any>> -> memref<256xf32, #tpu.memory_space<any>>
    %c0_i32_132 = arith.constant 0 : i32
    %250 = tpu.memref_slice %arg10[%c22_i32_130, %c0_i32_132] : memref<32x256xf32, #tpu.memory_space<vmem>> -> memref<1x256xf32, #tpu.memory_space<vmem>>
    %251 = tpu.memref_squeeze %250 : memref<1x256xf32, #tpu.memory_space<vmem>> -> memref<256xf32, #tpu.memory_space<vmem>>
    tpu.wait_dma2 semaphore(%arg11 : memref<!tpu.dma_semaphore, #tpu.memory_space<semaphore_mem>>) src(%249 : memref<256xf32, #tpu.memory_space<any>>) dst(%251 : memref<256xf32, #tpu.memory_space<vmem>>)
    %c23_i32_133 = arith.constant 23 : i32
    %c0_i32_134 = arith.constant 0 : i32
    %252 = tpu.memref_slice %arg1[%115, %c0_i32_134] : memref<58559x256xf32, #tpu.memory_space<any>> -> memref<1x256xf32, #tpu.memory_space<any>>
    %253 = tpu.memref_squeeze %252 : memref<1x256xf32, #tpu.memory_space<any>> -> memref<256xf32, #tpu.memory_space<any>>
    %c0_i32_135 = arith.constant 0 : i32
    %254 = tpu.memref_slice %arg10[%c23_i32_133, %c0_i32_135] : memref<32x256xf32, #tpu.memory_space<vmem>> -> memref<1x256xf32, #tpu.memory_space<vmem>>
    %255 = tpu.memref_squeeze %254 : memref<1x256xf32, #tpu.memory_space<vmem>> -> memref<256xf32, #tpu.memory_space<vmem>>
    tpu.wait_dma2 semaphore(%arg11 : memref<!tpu.dma_semaphore, #tpu.memory_space<semaphore_mem>>) src(%253 : memref<256xf32, #tpu.memory_space<any>>) dst(%255 : memref<256xf32, #tpu.memory_space<vmem>>)
    %c24_i32_136 = arith.constant 24 : i32
    %c0_i32_137 = arith.constant 0 : i32
    %256 = tpu.memref_slice %arg1[%120, %c0_i32_137] : memref<58559x256xf32, #tpu.memory_space<any>> -> memref<1x256xf32, #tpu.memory_space<any>>
    %257 = tpu.memref_squeeze %256 : memref<1x256xf32, #tpu.memory_space<any>> -> memref<256xf32, #tpu.memory_space<any>>
    %c0_i32_138 = arith.constant 0 : i32
    %258 = tpu.memref_slice %arg10[%c24_i32_136, %c0_i32_138] : memref<32x256xf32, #tpu.memory_space<vmem>> -> memref<1x256xf32, #tpu.memory_space<vmem>>
    %259 = tpu.memref_squeeze %258 : memref<1x256xf32, #tpu.memory_space<vmem>> -> memref<256xf32, #tpu.memory_space<vmem>>
    tpu.wait_dma2 semaphore(%arg11 : memref<!tpu.dma_semaphore, #tpu.memory_space<semaphore_mem>>) src(%257 : memref<256xf32, #tpu.memory_space<any>>) dst(%259 : memref<256xf32, #tpu.memory_space<vmem>>)
    %c25_i32_139 = arith.constant 25 : i32
    %c0_i32_140 = arith.constant 0 : i32
    %260 = tpu.memref_slice %arg1[%125, %c0_i32_140] : memref<58559x256xf32, #tpu.memory_space<any>> -> memref<1x256xf32, #tpu.memory_space<any>>
    %261 = tpu.memref_squeeze %260 : memref<1x256xf32, #tpu.memory_space<any>> -> memref<256xf32, #tpu.memory_space<any>>
    %c0_i32_141 = arith.constant 0 : i32
    %262 = tpu.memref_slice %arg10[%c25_i32_139, %c0_i32_141] : memref<32x256xf32, #tpu.memory_space<vmem>> -> memref<1x256xf32, #tpu.memory_space<vmem>>
    %263 = tpu.memref_squeeze %262 : memref<1x256xf32, #tpu.memory_space<vmem>> -> memref<256xf32, #tpu.memory_space<vmem>>
    tpu.wait_dma2 semaphore(%arg11 : memref<!tpu.dma_semaphore, #tpu.memory_space<semaphore_mem>>) src(%261 : memref<256xf32, #tpu.memory_space<any>>) dst(%263 : memref<256xf32, #tpu.memory_space<vmem>>)
    %c26_i32_142 = arith.constant 26 : i32
    %c0_i32_143 = arith.constant 0 : i32
    %264 = tpu.memref_slice %arg1[%130, %c0_i32_143] : memref<58559x256xf32, #tpu.memory_space<any>> -> memref<1x256xf32, #tpu.memory_space<any>>
    %265 = tpu.memref_squeeze %264 : memref<1x256xf32, #tpu.memory_space<any>> -> memref<256xf32, #tpu.memory_space<any>>
    %c0_i32_144 = arith.constant 0 : i32
    %266 = tpu.memref_slice %arg10[%c26_i32_142, %c0_i32_144] : memref<32x256xf32, #tpu.memory_space<vmem>> -> memref<1x256xf32, #tpu.memory_space<vmem>>
    %267 = tpu.memref_squeeze %266 : memref<1x256xf32, #tpu.memory_space<vmem>> -> memref<256xf32, #tpu.memory_space<vmem>>
    tpu.wait_dma2 semaphore(%arg11 : memref<!tpu.dma_semaphore, #tpu.memory_space<semaphore_mem>>) src(%265 : memref<256xf32, #tpu.memory_space<any>>) dst(%267 : memref<256xf32, #tpu.memory_space<vmem>>)
    %c27_i32_145 = arith.constant 27 : i32
    %c0_i32_146 = arith.constant 0 : i32
    %268 = tpu.memref_slice %arg1[%135, %c0_i32_146] : memref<58559x256xf32, #tpu.memory_space<any>> -> memref<1x256xf32, #tpu.memory_space<any>>
    %269 = tpu.memref_squeeze %268 : memref<1x256xf32, #tpu.memory_space<any>> -> memref<256xf32, #tpu.memory_space<any>>
    %c0_i32_147 = arith.constant 0 : i32
    %270 = tpu.memref_slice %arg10[%c27_i32_145, %c0_i32_147] : memref<32x256xf32, #tpu.memory_space<vmem>> -> memref<1x256xf32, #tpu.memory_space<vmem>>
    %271 = tpu.memref_squeeze %270 : memref<1x256xf32, #tpu.memory_space<vmem>> -> memref<256xf32, #tpu.memory_space<vmem>>
    tpu.wait_dma2 semaphore(%arg11 : memref<!tpu.dma_semaphore, #tpu.memory_space<semaphore_mem>>) src(%269 : memref<256xf32, #tpu.memory_space<any>>) dst(%271 : memref<256xf32, #tpu.memory_space<vmem>>)
    %c28_i32_148 = arith.constant 28 : i32
    %c0_i32_149 = arith.constant 0 : i32
    %272 = tpu.memref_slice %arg1[%140, %c0_i32_149] : memref<58559x256xf32, #tpu.memory_space<any>> -> memref<1x256xf32, #tpu.memory_space<any>>
    %273 = tpu.memref_squeeze %272 : memref<1x256xf32, #tpu.memory_space<any>> -> memref<256xf32, #tpu.memory_space<any>>
    %c0_i32_150 = arith.constant 0 : i32
    %274 = tpu.memref_slice %arg10[%c28_i32_148, %c0_i32_150] : memref<32x256xf32, #tpu.memory_space<vmem>> -> memref<1x256xf32, #tpu.memory_space<vmem>>
    %275 = tpu.memref_squeeze %274 : memref<1x256xf32, #tpu.memory_space<vmem>> -> memref<256xf32, #tpu.memory_space<vmem>>
    tpu.wait_dma2 semaphore(%arg11 : memref<!tpu.dma_semaphore, #tpu.memory_space<semaphore_mem>>) src(%273 : memref<256xf32, #tpu.memory_space<any>>) dst(%275 : memref<256xf32, #tpu.memory_space<vmem>>)
    %c29_i32_151 = arith.constant 29 : i32
    %c0_i32_152 = arith.constant 0 : i32
    %276 = tpu.memref_slice %arg1[%145, %c0_i32_152] : memref<58559x256xf32, #tpu.memory_space<any>> -> memref<1x256xf32, #tpu.memory_space<any>>
    %277 = tpu.memref_squeeze %276 : memref<1x256xf32, #tpu.memory_space<any>> -> memref<256xf32, #tpu.memory_space<any>>
    %c0_i32_153 = arith.constant 0 : i32
    %278 = tpu.memref_slice %arg10[%c29_i32_151, %c0_i32_153] : memref<32x256xf32, #tpu.memory_space<vmem>> -> memref<1x256xf32, #tpu.memory_space<vmem>>
    %279 = tpu.memref_squeeze %278 : memref<1x256xf32, #tpu.memory_space<vmem>> -> memref<256xf32, #tpu.memory_space<vmem>>
    tpu.wait_dma2 semaphore(%arg11 : memref<!tpu.dma_semaphore, #tpu.memory_space<semaphore_mem>>) src(%277 : memref<256xf32, #tpu.memory_space<any>>) dst(%279 : memref<256xf32, #tpu.memory_space<vmem>>)
    %c30_i32_154 = arith.constant 30 : i32
    %c0_i32_155 = arith.constant 0 : i32
    %280 = tpu.memref_slice %arg1[%150, %c0_i32_155] : memref<58559x256xf32, #tpu.memory_space<any>> -> memref<1x256xf32, #tpu.memory_space<any>>
    %281 = tpu.memref_squeeze %280 : memref<1x256xf32, #tpu.memory_space<any>> -> memref<256xf32, #tpu.memory_space<any>>
    %c0_i32_156 = arith.constant 0 : i32
    %282 = tpu.memref_slice %arg10[%c30_i32_154, %c0_i32_156] : memref<32x256xf32, #tpu.memory_space<vmem>> -> memref<1x256xf32, #tpu.memory_space<vmem>>
    %283 = tpu.memref_squeeze %282 : memref<1x256xf32, #tpu.memory_space<vmem>> -> memref<256xf32, #tpu.memory_space<vmem>>
    tpu.wait_dma2 semaphore(%arg11 : memref<!tpu.dma_semaphore, #tpu.memory_space<semaphore_mem>>) src(%281 : memref<256xf32, #tpu.memory_space<any>>) dst(%283 : memref<256xf32, #tpu.memory_space<vmem>>)
    %c31_i32_157 = arith.constant 31 : i32
    %c0_i32_158 = arith.constant 0 : i32
    %284 = tpu.memref_slice %arg1[%155, %c0_i32_158] : memref<58559x256xf32, #tpu.memory_space<any>> -> memref<1x256xf32, #tpu.memory_space<any>>
    %285 = tpu.memref_squeeze %284 : memref<1x256xf32, #tpu.memory_space<any>> -> memref<256xf32, #tpu.memory_space<any>>
    %c0_i32_159 = arith.constant 0 : i32
    %286 = tpu.memref_slice %arg10[%c31_i32_157, %c0_i32_159] : memref<32x256xf32, #tpu.memory_space<vmem>> -> memref<1x256xf32, #tpu.memory_space<vmem>>
    %287 = tpu.memref_squeeze %286 : memref<1x256xf32, #tpu.memory_space<vmem>> -> memref<256xf32, #tpu.memory_space<vmem>>
    tpu.wait_dma2 semaphore(%arg11 : memref<!tpu.dma_semaphore, #tpu.memory_space<semaphore_mem>>) src(%285 : memref<256xf32, #tpu.memory_space<any>>) dst(%287 : memref<256xf32, #tpu.memory_space<vmem>>)
    %c0_160 = arith.constant 0 : index
    %c0_161 = arith.constant 0 : index
    %288 = vector.load %arg10[%c0_160, %c0_161] : memref<32x256xf32, #tpu.memory_space<vmem>>, vector<32x256xf32>
    %c31_i32_162 = arith.constant 31 : i32
    %289 = tpu.dynamic_rotate %288 by %c31_i32_162 dim 0 : vector<32x256xf32>, i32 -> vector<32x256xf32>
    %c30_i32_163 = arith.constant 30 : i32
    %290 = tpu.dynamic_rotate %288 by %c30_i32_163 dim 0 : vector<32x256xf32>, i32 -> vector<32x256xf32>
    %c29_i32_164 = arith.constant 29 : i32
    %291 = tpu.dynamic_rotate %288 by %c29_i32_164 dim 0 : vector<32x256xf32>, i32 -> vector<32x256xf32>
    %c28_i32_165 = arith.constant 28 : i32
    %292 = tpu.dynamic_rotate %288 by %c28_i32_165 dim 0 : vector<32x256xf32>, i32 -> vector<32x256xf32>
    %c27_i32_166 = arith.constant 27 : i32
    %293 = tpu.dynamic_rotate %288 by %c27_i32_166 dim 0 : vector<32x256xf32>, i32 -> vector<32x256xf32>
    %294 = tpu.concatenate %288, %289, %290, %291, %292, %293 in 1 : vector<32x256xf32>, vector<32x256xf32>, vector<32x256xf32>, vector<32x256xf32>, vector<32x256xf32>, vector<32x256xf32> -> vector<32x1536xf32>
    %295 = arith.truncf %294 : vector<32x1536xf32> to vector<32x1536xbf16>
    %c0_167 = arith.constant 0 : index
    %c0_168 = arith.constant 0 : index
    %296 = vector.load %arg2[%c0_167, %c0_168] : memref<1536x384xbf16, #tpu.memory_space<vmem>>, vector<1536x384xbf16>
    %cst = arith.constant dense<0.000000e+00> : vector<32x384xf32>
    %297 = tpu.matmul %295, %296, %cst {dimension_numbers = #tpu.dot_dimension_numbers<[1], [0], [0], [1], [0, 0, 1, 1], [], []>} : vector<32x1536xbf16>, vector<1536x384xbf16>, vector<32x384xf32> -> vector<32x384xf32>
    %c0_169 = arith.constant 0 : index
    %c0_170 = arith.constant 0 : index
    %298 = vector.load %arg3[%c0_169, %c0_170] : memref<32x384xf32, #tpu.memory_space<vmem>>, vector<32x384xf32>
    %299 = arith.addf %297, %298 : vector<32x384xf32>
    %300 = vector.extract_strided_slice %299 {offsets = [0, 0], sizes = [16, 384], strides = [1, 1]} : vector<32x384xf32> to vector<16x384xf32>
    %cst_171 = arith.constant dense<0xFF800000> : vector<384xf32>
    %301 = vector.multi_reduction <maximumf>, %300, %cst_171 [0] : vector<16x384xf32> to vector<384xf32>
    %302 = vector.shape_cast %301 : vector<384xf32> to vector<1x384xf32>
    %303 = vector.extract_strided_slice %299 {offsets = [16, 0], sizes = [16, 384], strides = [1, 1]} : vector<32x384xf32> to vector<16x384xf32>
    %cst_172 = arith.constant dense<0xFF800000> : vector<384xf32>
    %304 = vector.multi_reduction <maximumf>, %303, %cst_172 [0] : vector<16x384xf32> to vector<384xf32>
    %305 = vector.shape_cast %304 : vector<384xf32> to vector<1x384xf32>
    %306 = tpu.concatenate %302, %305 in 0 : vector<1x384xf32>, vector<1x384xf32> -> vector<2x384xf32>
    %c0_173 = arith.constant 0 : index
    %c0_174 = arith.constant 0 : index
    %307 = vector.load %arg4[%c0_173, %c0_174] : memref<1x384xf32, #tpu.memory_space<vmem>>, vector<1x384xf32>
    %308 = vector.broadcast %307 : vector<1x384xf32> to vector<2x384xf32>
    %309 = arith.addf %306, %308 : vector<2x384xf32>
    %310 = arith.truncf %309 : vector<2x384xf32> to vector<2x384xbf16>
    %c0_175 = arith.constant 0 : index
    %c0_176 = arith.constant 0 : index
    %311 = vector.load %arg5[%c0_175, %c0_176] : memref<384x128xbf16, #tpu.memory_space<vmem>>, vector<384x128xbf16>
    %cst_177 = arith.constant dense<0.000000e+00> : vector<2x128xf32>
    %312 = tpu.matmul %310, %311, %cst_177 {dimension_numbers = #tpu.dot_dimension_numbers<[1], [0], [0], [1], [0, 0, 1, 1], [], []>} : vector<2x384xbf16>, vector<384x128xbf16>, vector<2x128xf32> -> vector<2x128xf32>
    %c0_178 = arith.constant 0 : index
    %c0_179 = arith.constant 0 : index
    %313 = vector.load %arg6[%c0_178, %c0_179] : memref<1x128xf32, #tpu.memory_space<vmem>>, vector<1x128xf32>
    %314 = vector.broadcast %313 : vector<1x128xf32> to vector<2x128xf32>
    %315 = arith.addf %312, %314 : vector<2x128xf32>
    %cst_180 = arith.constant 0.000000e+00 : f32
    %316 = vector.broadcast %cst_180 : f32 to vector<2x128xf32>
    %317 = arith.maximumf %315, %316 : vector<2x128xf32>
    %318 = arith.truncf %317 : vector<2x128xf32> to vector<2x128xbf16>
    %c0_181 = arith.constant 0 : index
    %c0_182 = arith.constant 0 : index
    %319 = vector.load %arg7[%c0_181, %c0_182] : memref<128x128xbf16, #tpu.memory_space<vmem>>, vector<128x128xbf16>
    %cst_183 = arith.constant dense<0.000000e+00> : vector<2x128xf32>
    %320 = tpu.matmul %318, %319, %cst_183 {dimension_numbers = #tpu.dot_dimension_numbers<[1], [0], [0], [1], [0, 0, 1, 1], [], []>} : vector<2x128xbf16>, vector<128x128xbf16>, vector<2x128xf32> -> vector<2x128xf32>
    %c0_184 = arith.constant 0 : index
    %c0_185 = arith.constant 0 : index
    %321 = vector.load %arg8[%c0_184, %c0_185] : memref<1x128xf32, #tpu.memory_space<vmem>>, vector<1x128xf32>
    %322 = vector.broadcast %321 : vector<1x128xf32> to vector<2x128xf32>
    %323 = arith.addf %320, %322 : vector<2x128xf32>
    %c0_186 = arith.constant 0 : index
    %c0_187 = arith.constant 0 : index
    %324 = vector.load %arg9[%c0_186, %c0_187] : memref<2x128xf32, #tpu.memory_space<vmem>>, vector<2x128xf32>
    tpu.vector_store %arg9[%c0_186, %c0_187], %323 {strides = array<i32>} : memref<2x128xf32, #tpu.memory_space<vmem>>, vector<2x128xf32>,
    return
  }
}

</mosaic_0001>

<llo_original>
// kernel: tpu_custom_call.1
$region0: #{tpu_custom_call.1}
  #allocation0 [shape = 'u32[]', space=smem, size = 0x4, offset = 0x4, fixed_abs, tag = 'smem constant byte address 0x4 - core index']
  #allocation1 [shape = 'u32[144,128]{1,0:T(1,128)}', space=vmem, size = 0x12000, scoped, tag = 'internal scratch']
  #allocation2 [shape = 'f32[32,256]{1,0:T(8,128)}', space=vmem, size = 0x8000, scoped, tag = 'scratch operand']
  #allocation3 [shape = 's32[1]{0}', space=sflag, size = 0x4, scoped, tag = 'scratch operand']
  #allocation19 [shape = 's32[]', space=sflag, size = 0x4, offset = 0, fixed_abs, tag = 'sflag constant byte address 0x0 - dummy sync flag']
  #allocation20 [shape = 's32[]', space=sflag, size = 0x4, offset = 0, fixed_abs, tag = 'sflag constant byte address 0x0 - dummy sync flag']
  #allocation21 [shape = 's32[]', space=sflag, size = 0x4, offset = 0, fixed_abs, tag = 'sflag constant byte address 0x0 - dummy sync flag']
  #allocation22 [shape = 's32[]', space=sflag, size = 0x4, offset = 0, fixed_abs, tag = 'sflag constant byte address 0x0 - dummy sync flag']
  #allocation23 [shape = 's32[]', space=sflag, size = 0x4, offset = 0, fixed_abs, tag = 'sflag constant byte address 0x0 - dummy sync flag']
  #allocation24 [shape = 's32[]', space=sflag, size = 0x4, offset = 0, fixed_abs, tag = 'sflag constant byte address 0x0 - dummy sync flag']
  #allocation25 [shape = 's32[]', space=sflag, size = 0x4, offset = 0, fixed_abs, tag = 'sflag constant byte address 0x0 - dummy sync flag']
  #allocation26 [shape = 's32[]', space=sflag, size = 0x4, offset = 0, fixed_abs, tag = 'sflag constant byte address 0x0 - dummy sync flag']
  #allocation27 [shape = 's32[]', space=sflag, size = 0x4, offset = 0, fixed_abs, tag = 'sflag constant byte address 0x0 - dummy sync flag']
  #allocation28 [shape = 's32[]', space=sflag, size = 0x4, offset = 0, fixed_abs, tag = 'sflag constant byte address 0x0 - dummy sync flag']
  #allocation29 [shape = 's32[]', space=sflag, size = 0x4, offset = 0, fixed_abs, tag = 'sflag constant byte address 0x0 - dummy sync flag']
  #allocation30 [shape = 's32[]', space=sflag, size = 0x4, offset = 0, fixed_abs, tag = 'sflag constant byte address 0x0 - dummy sync flag']
  #allocation31 [shape = 's32[]', space=sflag, size = 0x4, offset = 0, fixed_abs, tag = 'sflag constant byte address 0x0 - dummy sync flag']
  #allocation32 [shape = 's32[]', space=sflag, size = 0x4, offset = 0, fixed_abs, tag = 'sflag constant byte address 0x0 - dummy sync flag']
  #allocation33 [shape = 's32[]', space=sflag, size = 0x4, offset = 0, fixed_abs, tag = 'sflag constant byte address 0x0 - dummy sync flag']
  #allocation34 [shape = 's32[]', space=sflag, size = 0x4, offset = 0, fixed_abs, tag = 'sflag constant byte address 0x0 - dummy sync flag']
  #allocation35 [shape = 's32[]', space=sflag, size = 0x4, offset = 0, fixed_abs, tag = 'sflag constant byte address 0x0 - dummy sync flag']
  #allocation36 [shape = 's32[]', space=sflag, size = 0x4, offset = 0, fixed_abs, tag = 'sflag constant byte address 0x0 - dummy sync flag']
  #allocation37 [shape = 's32[]', space=sflag, size = 0x4, offset = 0, fixed_abs, tag = 'sflag constant byte address 0x0 - dummy sync flag']
  #allocation38 [shape = 's32[]', space=sflag, size = 0x4, offset = 0, fixed_abs, tag = 'sflag constant byte address 0x0 - dummy sync flag']
  #allocation39 [shape = 's32[]', space=sflag, size = 0x4, offset = 0, fixed_abs, tag = 'sflag constant byte address 0x0 - dummy sync flag']
  #allocation40 [shape = 's32[]', space=sflag, size = 0x4, offset = 0, fixed_abs, tag = 'sflag constant byte address 0x0 - dummy sync flag']
  #allocation41 [shape = 's32[]', space=sflag, size = 0x4, offset = 0, fixed_abs, tag = 'sflag constant byte address 0x0 - dummy sync flag']
  #allocation42 [shape = 's32[]', space=sflag, size = 0x4, offset = 0, fixed_abs, tag = 'sflag constant byte address 0x0 - dummy sync flag']
  #allocation43 [shape = 's32[]', space=sflag, size = 0x4, offset = 0, fixed_abs, tag = 'sflag constant byte address 0x0 - dummy sync flag']
  #allocation44 [shape = 's32[]', space=sflag, size = 0x4, offset = 0, fixed_abs, tag = 'sflag constant byte address 0x0 - dummy sync flag']
  #allocation45 [shape = 's32[]', space=sflag, size = 0x4, offset = 0, fixed_abs, tag = 'sflag constant byte address 0x0 - dummy sync flag']
  #allocation46 [shape = 's32[]', space=sflag, size = 0x4, offset = 0, fixed_abs, tag = 'sflag constant byte address 0x0 - dummy sync flag']
  #allocation47 [shape = 's32[]', space=sflag, size = 0x4, offset = 0, fixed_abs, tag = 'sflag constant byte address 0x0 - dummy sync flag']
  #allocation48 [shape = 's32[]', space=sflag, size = 0x4, offset = 0, fixed_abs, tag = 'sflag constant byte address 0x0 - dummy sync flag']
  #allocation49 [shape = 's32[]', space=sflag, size = 0x4, offset = 0, fixed_abs, tag = 'sflag constant byte address 0x0 - dummy sync flag']
  #allocation50 [shape = 's32[]', space=sflag, size = 0x4, offset = 0, fixed_abs, tag = 'sflag constant byte address 0x0 - dummy sync flag']
  %s0 = inlined_call_operand.hbm [shape: s32[32], index: 0, kind: input, shape index: {}]
  %s1 = inlined_call_operand.hbm [shape: f32[58559,256], index: 1, kind: input, shape index: {}]
  %s2 = inlined_call_operand.hbm [shape: bf16[1536,384], index: 2, kind: input, shape index: {}]
  %s3 = inlined_call_operand.hbm [shape: f32[32,384], index: 3, kind: input, shape index: {}]
  %s4 = inlined_call_operand.hbm [shape: f32[1,384], index: 4, kind: input, shape index: {}]
  %s5 = inlined_call_operand.hbm [shape: bf16[384,128], index: 5, kind: input, shape index: {}]
  %s6 = inlined_call_operand.hbm [shape: f32[1,128], index: 6, kind: input, shape index: {}]
  %s7 = inlined_call_operand.hbm [shape: bf16[128,128], index: 7, kind: input, shape index: {}]
  %s8 = inlined_call_operand.hbm [shape: f32[1,128], index: 8, kind: input, shape index: {}]
  %s9 = inlined_call_operand.hbm [shape: f32[2,128], index: 9, kind: output, shape index: {}]
  %s10 = sld [smem:[#allocation0]]
  $region74: #{tpu_custom_call.1} parent=0
    _
  %s12 = ssub.s32 1, %s10
  %s13 = scalar_select 0, %s12, %s10
  $region1: #{tpu_custom_call.1} parent=0
    #allocation4 [shape = 'u8[512]{0}', space=smem, size = 0x200, scoped, tag = 'input window, operand 0, single buffered']
    #allocation5 [shape = 's32[1]{0}', space=sflag, size = 0x4, scoped, tag = 'scoped memory for tpu_custom_call.1']
    #allocation6 [shape = 's32[1]{0}', space=sflag, size = 0x4, scoped, tag = 'scoped memory for tpu_custom_call.1']
    #allocation7 [shape = 's32[1]{0}', space=sflag, size = 0x4, scoped, tag = 'scoped memory for tpu_custom_call.1']
    #allocation8 [shape = 'u8[1179648]{0}', space=vmem, size = 0x120000, scoped, tag = 'input window, operand 2, single buffered']
    #allocation9 [shape = 'u8[49152]{0}', space=vmem, size = 0xc000, scoped, tag = 'input window, operand 3, single buffered']
    #allocation10 [shape = 's32[1]{0}', space=sflag, size = 0x4, scoped, tag = 'scoped memory for tpu_custom_call.1']
    #allocation11 [shape = 'u8[1536]{0}', space=vmem, size = 0x800, scoped, tag = 'input window, operand 4, single buffered']
    #allocation12 [shape = 'u8[98304]{0}', space=vmem, size = 0x18000, scoped, tag = 'input window, operand 5, single buffered']
    #allocation13 [shape = 's32[1]{0}', space=sflag, size = 0x4, scoped, tag = 'scoped memory for tpu_custom_call.1']
    #allocation14 [shape = 'u8[512]{0}', space=vmem, size = 0x400, scoped, tag = 'input window, operand 6, single buffered']
    #allocation15 [shape = 'u8[32768]{0}', space=vmem, size = 0x8000, scoped, tag = 'input window, operand 7, single buffered']
    #allocation16 [shape = 's32[1]{0}', space=sflag, size = 0x4, scoped, tag = 'scoped memory for tpu_custom_call.1']
    #allocation17 [shape = 'u8[512]{0}', space=vmem, size = 0x400, scoped, tag = 'input window, operand 8, single buffered']
    #allocation18 [shape = 'u8[1024]{0}', space=vmem, size = 0x400, scoped, tag = 'output window, operand 0, single buffered']
    %14 = vsyncpa [#allocation7], 0
    %15 = vsyncpa [#allocation5], 0
    %16 = vsyncpa [#allocation10], 0
    %17 = vsyncpa [#allocation13], 0
    %18 = vsyncpa [#allocation16], 0
    %19 = vsyncpa [#allocation6], 0
    // Predicated region
    $region2: #{tpu_custom_call.1} parent=1 // pred_check
      _
    $region3: #{tpu_custom_call.1} parent=1 // pred_check_branch
      %21 = sbr.rel (0) target = $region5
    $region4: #{tpu_custom_call.1} parent=1 // pred_region
      %s23 = ssub.s32 16, 16
      %24 = vsyncadd [#allocation7], %s23
      %27 = dma.hbm_to_smem %s0, 16, [#allocation4], [#allocation7]
    $region5: #{tpu_custom_call.1} parent=1 // pred_fallthru
      _
    // Predicated region
    $region6: #{tpu_custom_call.1} parent=1 // pred_check
      _
    $region7: #{tpu_custom_call.1} parent=1 // pred_check_branch
      %29 = sbr.rel (0) target = $region9
    $region8: #{tpu_custom_call.1} parent=1 // pred_region
      %s31 = ssub.s32 36864, 36864
      %32 = vsyncadd [#allocation5], %s31
      %s33 = sshll.u32 [#allocation8], 4
      %s34 = int_to_ptr.vmem [resolvable:$true] %s33
      %39 = dma.hbm_to_vmem [thread:$0]  %s2, 36864, %s34, [#allocation5], 192, 192, 12
    $region9: #{tpu_custom_call.1} parent=1 // pred_fallthru
      _
    // Predicated region
    $region10: #{tpu_custom_call.1} parent=1 // pred_check
      _
    $region11: #{tpu_custom_call.1} parent=1 // pred_check_branch
      %41 = sbr.rel (0) target = $region13
    $region12: #{tpu_custom_call.1} parent=1 // pred_region
      %s43 = ssub.s32 1536, 1536
      %44 = vsyncadd [#allocation10], %s43
      %s45 = sshll.u32 [#allocation9], 4
      %s46 = int_to_ptr.vmem [resolvable:$true] %s45
      %51 = dma.hbm_to_vmem [thread:$0]  %s3, 1536, %s46, [#allocation10], 384, 384, 24
    $region13: #{tpu_custom_call.1} parent=1 // pred_fallthru
      _
    // Predicated region
    $region14: #{tpu_custom_call.1} parent=1 // pred_check
      _
    $region15: #{tpu_custom_call.1} parent=1 // pred_check_branch
      %53 = sbr.rel (0) target = $region17
    $region16: #{tpu_custom_call.1} parent=1 // pred_region
      %s55 = ssub.s32 48, 48
      %56 = vsyncadd [#allocation10], %s55
      %s58 = sshll.u32 [#allocation11], 4
      %s59 = int_to_ptr.vmem [resolvable:$true] %s58
      %61 = dma.hbm_to_vmem [thread:$0]  %s4, 48, %s59, [#allocation10]
    $region17: #{tpu_custom_call.1} parent=1 // pred_fallthru
      _
    // Predicated region
    $region18: #{tpu_custom_call.1} parent=1 // pred_check
      _
    $region19: #{tpu_custom_call.1} parent=1 // pred_check_branch
      %63 = sbr.rel (0) target = $region21
    $region20: #{tpu_custom_call.1} parent=1 // pred_region
      %s65 = ssub.s32 3072, 3072
      %66 = vsyncadd [#allocation13], %s65
      %s67 = sshll.u32 [#allocation12], 4
      %s68 = int_to_ptr.vmem [resolvable:$true] %s67
      %73 = dma.hbm_to_vmem [thread:$0]  %s5, 3072, %s68, [#allocation13], 64, 64, 4
    $region21: #{tpu_custom_call.1} parent=1 // pred_fallthru
      _
    // Predicated region
    $region22: #{tpu_custom_call.1} parent=1 // pred_check
      _
    $region23: #{tpu_custom_call.1} parent=1 // pred_check_branch
      %75 = sbr.rel (0) target = $region25
    $region24: #{tpu_custom_call.1} parent=1 // pred_region
      %s77 = ssub.s32 16, 16
      %78 = vsyncadd [#allocation13], %s77
      %s80 = sshll.u32 [#allocation14], 4
      %s81 = int_to_ptr.vmem [resolvable:$true] %s80
      %83 = dma.hbm_to_vmem [thread:$0]  %s6, 16, %s81, [#allocation13]
    $region25: #{tpu_custom_call.1} parent=1 // pred_fallthru
      _
    // Predicated region
    $region26: #{tpu_custom_call.1} parent=1 // pred_check
      _
    $region27: #{tpu_custom_call.1} parent=1 // pred_check_branch
      %85 = sbr.rel (0) target = $region29
    $region28: #{tpu_custom_call.1} parent=1 // pred_region
      %s87 = ssub.s32 1024, 1024
      %88 = vsyncadd [#allocation16], %s87
      %s89 = sshll.u32 [#allocation15], 4
      %s90 = int_to_ptr.vmem [resolvable:$true] %s89
      %95 = dma.hbm_to_vmem [thread:$0]  %s7, 1024, %s90, [#allocation16], 64, 64, 4
    $region29: #{tpu_custom_call.1} parent=1 // pred_fallthru
      _
    // Predicated region
    $region30: #{tpu_custom_call.1} parent=1 // pred_check
      _
    $region31: #{tpu_custom_call.1} parent=1 // pred_check_branch
      %97 = sbr.rel (0) target = $region33
    $region32: #{tpu_custom_call.1} parent=1 // pred_region
      %s99 = ssub.s32 16, 16
      %100 = vsyncadd [#allocation16], %s99
      %s102 = sshll.u32 [#allocation17], 4
      %s103 = int_to_ptr.vmem [resolvable:$true] %s102
      %105 = dma.hbm_to_vmem [thread:$0]  %s8, 16, %s103, [#allocation16]
    $region33: #{tpu_custom_call.1} parent=1 // pred_fallthru
      _
    // Predicated region
    $region34: #{tpu_custom_call.1} parent=1 // pred_check
      _
    $region35: #{tpu_custom_call.1} parent=1 // pred_check_branch
      %107 = sbr.rel (0) target = $region37
    $region36: #{tpu_custom_call.1} parent=1 // pred_region
      %108 = dma.done [#allocation7], 16
    $region37: #{tpu_custom_call.1} parent=1 // pred_fallthru
      _
    // Predicated region
    $region38: #{tpu_custom_call.1} parent=1 // pred_check
      _
    $region39: #{tpu_custom_call.1} parent=1 // pred_check_branch
      %110 = sbr.rel (0) target = $region41
    $region40: #{tpu_custom_call.1} parent=1 // pred_region
      %111 = dma.done [#allocation5], 36864
    $region41: #{tpu_custom_call.1} parent=1 // pred_fallthru
      _
    // Predicated region
    $region42: #{tpu_custom_call.1} parent=1 // pred_check
      _
    $region43: #{tpu_custom_call.1} parent=1 // pred_check_branch
      %113 = sbr.rel (0) target = $region45
    $region44: #{tpu_custom_call.1} parent=1 // pred_region
      %114 = dma.done [#allocation10], 1536
    $region45: #{tpu_custom_call.1} parent=1 // pred_fallthru
      _
    // Predicated region
    $region46: #{tpu_custom_call.1} parent=1 // pred_check
      _
    $region47: #{tpu_custom_call.1} parent=1 // pred_check_branch
      %116 = sbr.rel (0) target = $region49
    $region48: #{tpu_custom_call.1} parent=1 // pred_region
      %117 = dma.done [#allocation10], 48
    $region49: #{tpu_custom_call.1} parent=1 // pred_fallthru
      _
    // Predicated region
    $region50: #{tpu_custom_call.1} parent=1 // pred_check
      _
    $region51: #{tpu_custom_call.1} parent=1 // pred_check_branch
      %119 = sbr.rel (0) target = $region53
    $region52: #{tpu_custom_call.1} parent=1 // pred_region
      %120 = dma.done [#allocation13], 3072
    $region53: #{tpu_custom_call.1} parent=1 // pred_fallthru
      _
    // Predicated region
    $region54: #{tpu_custom_call.1} parent=1 // pred_check
      _
    $region55: #{tpu_custom_call.1} parent=1 // pred_check_branch
      %122 = sbr.rel (0) target = $region57
    $region56: #{tpu_custom_call.1} parent=1 // pred_region
      %123 = dma.done [#allocation13], 16
    $region57: #{tpu_custom_call.1} parent=1 // pred_fallthru
      _
    // Predicated region
    $region58: #{tpu_custom_call.1} parent=1 // pred_check
      _
    $region59: #{tpu_custom_call.1} parent=1 // pred_check_branch
      %125 = sbr.rel (0) target = $region61
    $region60: #{tpu_custom_call.1} parent=1 // pred_region
      %126 = dma.done [#allocation16], 1024
    $region61: #{tpu_custom_call.1} parent=1 // pred_fallthru
      _
    // Predicated region
    $region62: #{tpu_custom_call.1} parent=1 // pred_check
      _
    $region63: #{tpu_custom_call.1} parent=1 // pred_check_branch
      %128 = sbr.rel (0) target = $region65
    $region64: #{tpu_custom_call.1} parent=1 // pred_region
      %129 = dma.done [#allocation16], 16
    $region65: #{tpu_custom_call.1} parent=1 // pred_fallthru
      _
    %130 = sfence
    %s132 = sld [smem:[#allocation4]]
    %s133 = sshrl.u32 %s132, 3
    %s134 = sand.u32 %s132, 7
    %s135 = smul.u32 %s133, 16
    %s136 = sadd.s32 %s134, %s135
    %s137 = smul.addr %s136, 16
    %s138 = scalar_lea.hbm %s1, %s137
    %s140 = sshll.u32 [#allocation2], 4
    %s141 = int_to_ptr.vmem [resolvable:$true] %s140
    %143 = dma.hbm_to_vmem [thread:$0]  %s138, 32, %s141, [#allocation3], 128, 128, 1
    %s144 = sld [smem:[#allocation4 + $0x1]]
    %s145 = sshrl.u32 %s144, 3
    %s146 = sand.u32 %s144, 7
    %s147 = smul.u32 %s145, 16
    %s148 = sadd.s32 %s146, %s147
    %s149 = smul.addr %s148, 16
    %s150 = scalar_lea.hbm %s1, %s149
    %s151 = scalar_lea.vmem [#allocation2], 1
    %s153 = sshll.u32 %s151, 4
    %s154 = int_to_ptr.vmem [resolvable:$true] %s153
    %156 = dma.hbm_to_vmem [thread:$0]  %s150, 32, %s154, [#allocation3], 128, 128, 1
    %s157 = sld [smem:[#allocation4 + $0x2]]
    %s158 = sshrl.u32 %s157, 3
    %s159 = sand.u32 %s157, 7
    %s160 = smul.u32 %s158, 16
    %s161 = sadd.s32 %s159, %s160
    %s162 = smul.addr %s161, 16
    %s163 = scalar_lea.hbm %s1, %s162
    %s164 = scalar_lea.vmem [#allocation2], 2
    %s166 = sshll.u32 %s164, 4
    %s167 = int_to_ptr.vmem [resolvable:$true] %s166
    %169 = dma.hbm_to_vmem [thread:$0]  %s163, 32, %s167, [#allocation3], 128, 128, 1
    %s170 = sld [smem:[#allocation4 + $0x3]]
    %s171 = sshrl.u32 %s170, 3
    %s172 = sand.u32 %s170, 7
    %s173 = smul.u32 %s171, 16
    %s174 = sadd.s32 %s172, %s173
    %s175 = smul.addr %s174, 16
    %s176 = scalar_lea.hbm %s1, %s175
    %s177 = scalar_lea.vmem [#allocation2], 3
    %s179 = sshll.u32 %s177, 4
    %s180 = int_to_ptr.vmem [resolvable:$true] %s179
    %182 = dma.hbm_to_vmem [thread:$0]  %s176, 32, %s180, [#allocation3], 128, 128, 1
    %s183 = sld [smem:[#allocation4 + $0x4]]
    %s184 = sshrl.u32 %s183, 3
    %s185 = sand.u32 %s183, 7
    %s186 = smul.u32 %s184, 16
    %s187 = sadd.s32 %s185, %s186
    %s188 = smul.addr %s187, 16
    %s189 = scalar_lea.hbm %s1, %s188
    %s190 = scalar_lea.vmem [#allocation2], 4
    %s192 = sshll.u32 %s190, 4
    %s193 = int_to_ptr.vmem [resolvable:$true] %s192
    %195 = dma.hbm_to_vmem [thread:$0]  %s189, 32, %s193, [#allocation3], 128, 128, 1
    %s196 = sld [smem:[#allocation4 + $0x5]]
    %s197 = sshrl.u32 %s196, 3
    %s198 = sand.u32 %s196, 7
    %s199 = smul.u32 %s197, 16
    %s200 = sadd.s32 %s198, %s199
    %s201 = smul.addr %s200, 16
    %s202 = scalar_lea.hbm %s1, %s201
    %s203 = scalar_lea.vmem [#allocation2], 5
    %s205 = sshll.u32 %s203, 4
    %s206 = int_to_ptr.vmem [resolvable:$true] %s205
    %208 = dma.hbm_to_vmem [thread:$0]  %s202, 32, %s206, [#allocation3], 128, 128, 1
    %s209 = sld [smem:[#allocation4 + $0x6]]
    %s210 = sshrl.u32 %s209, 3
    %s211 = sand.u32 %s209, 7
    %s212 = smul.u32 %s210, 16
    %s213 = sadd.s32 %s211, %s212
    %s214 = smul.addr %s213, 16
    %s215 = scalar_lea.hbm %s1, %s214
    %s216 = scalar_lea.vmem [#allocation2], 6
    %s218 = sshll.u32 %s216, 4
    %s219 = int_to_ptr.vmem [resolvable:$true] %s218
    %221 = dma.hbm_to_vmem [thread:$0]  %s215, 32, %s219, [#allocation3], 128, 128, 1
    %s222 = sld [smem:[#allocation4 + $0x7]]
    %s223 = sshrl.u32 %s222, 3
    %s224 = sand.u32 %s222, 7
    %s225 = smul.u32 %s223, 16
    %s226 = sadd.s32 %s224, %s225
    %s227 = smul.addr %s226, 16
    %s228 = scalar_lea.hbm %s1, %s227
    %s229 = scalar_lea.vmem [#allocation2], 7
    %s231 = sshll.u32 %s229, 4
    %s232 = int_to_ptr.vmem [resolvable:$true] %s231
    %234 = dma.hbm_to_vmem [thread:$0]  %s228, 32, %s232, [#allocation3], 128, 128, 1
    %s235 = sld [smem:[#allocation4 + $0x8]]
    %s236 = sshrl.u32 %s235, 3
    %s237 = sand.u32 %s235, 7
    %s238 = smul.u32 %s236, 16
    %s239 = sadd.s32 %s237, %s238
    %s240 = smul.addr %s239, 16
    %s241 = scalar_lea.hbm %s1, %s240
    %s242 = scalar_lea.vmem [#allocation2], 16
    %s244 = sshll.u32 %s242, 4
    %s245 = int_to_ptr.vmem [resolvable:$true] %s244
    %247 = dma.hbm_to_vmem [thread:$0]  %s241, 32, %s245, [#allocation3], 128, 128, 1
    %s248 = sld [smem:[#allocation4 + $0x9]]
    %s249 = sshrl.u32 %s248, 3
    %s250 = sand.u32 %s248, 7
    %s251 = smul.u32 %s249, 16
    %s252 = sadd.s32 %s250, %s251
    %s253 = smul.addr %s252, 16
    %s254 = scalar_lea.hbm %s1, %s253
    %s255 = scalar_lea.vmem [#allocation2], 17
    %s257 = sshll.u32 %s255, 4
    %s258 = int_to_ptr.vmem [resolvable:$true] %s257
    %260 = dma.hbm_to_vmem [thread:$0]  %s254, 32, %s258, [#allocation3], 128, 128, 1
    %s261 = sld [smem:[#allocation4 + $0xa]]
    %s262 = sshrl.u32 %s261, 3
    %s263 = sand.u32 %s261, 7
    %s264 = smul.u32 %s262, 16
    %s265 = sadd.s32 %s263, %s264
    %s266 = smul.addr %s265, 16
    %s267 = scalar_lea.hbm %s1, %s266
    %s268 = scalar_lea.vmem [#allocation2], 18
    %s270 = sshll.u32 %s268, 4
    %s271 = int_to_ptr.vmem [resolvable:$true] %s270
    %273 = dma.hbm_to_vmem [thread:$0]  %s267, 32, %s271, [#allocation3], 128, 128, 1
    %s274 = sld [smem:[#allocation4 + $0xb]]
    %s275 = sshrl.u32 %s274, 3
    %s276 = sand.u32 %s274, 7
    %s277 = smul.u32 %s275, 16
    %s278 = sadd.s32 %s276, %s277
    %s279 = smul.addr %s278, 16
    %s280 = scalar_lea.hbm %s1, %s279
    %s281 = scalar_lea.vmem [#allocation2], 19
    %s283 = sshll.u32 %s281, 4
    %s284 = int_to_ptr.vmem [resolvable:$true] %s283
    %286 = dma.hbm_to_vmem [thread:$0]  %s280, 32, %s284, [#allocation3], 128, 128, 1
    %s287 = sld [smem:[#allocation4 + $0xc]]
    %s288 = sshrl.u32 %s287, 3
    %s289 = sand.u32 %s287, 7
    %s290 = smul.u32 %s288, 16
    %s291 = sadd.s32 %s289, %s290
    %s292 = smul.addr %s291, 16
    %s293 = scalar_lea.hbm %s1, %s292
    %s294 = scalar_lea.vmem [#allocation2], 20
    %s296 = sshll.u32 %s294, 4
    %s297 = int_to_ptr.vmem [resolvable:$true] %s296
    %299 = dma.hbm_to_vmem [thread:$0]  %s293, 32, %s297, [#allocation3], 128, 128, 1
    %s300 = sld [smem:[#allocation4 + $0xd]]
    %s301 = sshrl.u32 %s300, 3
    %s302 = sand.u32 %s300, 7
    %s303 = smul.u32 %s301, 16
    %s304 = sadd.s32 %s302, %s303
    %s305 = smul.addr %s304, 16
    %s306 = scalar_lea.hbm %s1, %s305
    %s307 = scalar_lea.vmem [#allocation2], 21
    %s309 = sshll.u32 %s307, 4
    %s310 = int_to_ptr.vmem [resolvable:$true] %s309
    %312 = dma.hbm_to_vmem [thread:$0]  %s306, 32, %s310, [#allocation3], 128, 128, 1
    %s313 = sld [smem:[#allocation4 + $0xe]]
    %s314 = sshrl.u32 %s313, 3
    %s315 = sand.u32 %s313, 7
    %s316 = smul.u32 %s314, 16
    %s317 = sadd.s32 %s315, %s316
    %s318 = smul.addr %s317, 16
    %s319 = scalar_lea.hbm %s1, %s318
    %s320 = scalar_lea.vmem [#allocation2], 22
    %s322 = sshll.u32 %s320, 4
    %s323 = int_to_ptr.vmem [resolvable:$true] %s322
    %325 = dma.hbm_to_vmem [thread:$0]  %s319, 32, %s323, [#allocation3], 128, 128, 1
    %s326 = sld [smem:[#allocation4 + $0xf]]
    %s327 = sshrl.u32 %s326, 3
    %s328 = sand.u32 %s326, 7
    %s329 = smul.u32 %s327, 16
    %s330 = sadd.s32 %s328, %s329
    %s331 = smul.addr %s330, 16
    %s332 = scalar_lea.hbm %s1, %s331
    %s333 = scalar_lea.vmem [#allocation2], 23
    %s335 = sshll.u32 %s333, 4
    %s336 = int_to_ptr.vmem [resolvable:$true] %s335
    %338 = dma.hbm_to_vmem [thread:$0]  %s332, 32, %s336, [#allocation3], 128, 128, 1
    %s339 = sld [smem:[#allocation4 + $0x10]]
    %s340 = sshrl.u32 %s339, 3
    %s341 = sand.u32 %s339, 7
    %s342 = smul.u32 %s340, 16
    %s343 = sadd.s32 %s341, %s342
    %s344 = smul.addr %s343, 16
    %s345 = scalar_lea.hbm %s1, %s344
    %s346 = scalar_lea.vmem [#allocation2], 32
    %s348 = sshll.u32 %s346, 4
    %s349 = int_to_ptr.vmem [resolvable:$true] %s348
    %351 = dma.hbm_to_vmem [thread:$0]  %s345, 32, %s349, [#allocation3], 128, 128, 1
    %s352 = sld [smem:[#allocation4 + $0x11]]
    %s353 = sshrl.u32 %s352, 3
    %s354 = sand.u32 %s352, 7
    %s355 = smul.u32 %s353, 16
    %s356 = sadd.s32 %s354, %s355
    %s357 = smul.addr %s356, 16
    %s358 = scalar_lea.hbm %s1, %s357
    %s359 = scalar_lea.vmem [#allocation2], 33
    %s361 = sshll.u32 %s359, 4
    %s362 = int_to_ptr.vmem [resolvable:$true] %s361
    %364 = dma.hbm_to_vmem [thread:$0]  %s358, 32, %s362, [#allocation3], 128, 128, 1
    %s365 = sld [smem:[#allocation4 + $0x12]]
    %s366 = sshrl.u32 %s365, 3
    %s367 = sand.u32 %s365, 7
    %s368 = smul.u32 %s366, 16
    %s369 = sadd.s32 %s367, %s368
    %s370 = smul.addr %s369, 16
    %s371 = scalar_lea.hbm %s1, %s370
    %s372 = scalar_lea.vmem [#allocation2], 34
    %s374 = sshll.u32 %s372, 4
    %s375 = int_to_ptr.vmem [resolvable:$true] %s374
    %377 = dma.hbm_to_vmem [thread:$0]  %s371, 32, %s375, [#allocation3], 128, 128, 1
    %s378 = sld [smem:[#allocation4 + $0x13]]
    %s379 = sshrl.u32 %s378, 3
    %s380 = sand.u32 %s378, 7
    %s381 = smul.u32 %s379, 16
    %s382 = sadd.s32 %s380, %s381
    %s383 = smul.addr %s382, 16
    %s384 = scalar_lea.hbm %s1, %s383
    %s385 = scalar_lea.vmem [#allocation2], 35
    %s387 = sshll.u32 %s385, 4
    %s388 = int_to_ptr.vmem [resolvable:$true] %s387
    %390 = dma.hbm_to_vmem [thread:$0]  %s384, 32, %s388, [#allocation3], 128, 128, 1
    %s391 = sld [smem:[#allocation4 + $0x14]]
    %s392 = sshrl.u32 %s391, 3
    %s393 = sand.u32 %s391, 7
    %s394 = smul.u32 %s392, 16
    %s395 = sadd.s32 %s393, %s394
    %s396 = smul.addr %s395, 16
    %s397 = scalar_lea.hbm %s1, %s396
    %s398 = scalar_lea.vmem [#allocation2], 36
    %s400 = sshll.u32 %s398, 4
    %s401 = int_to_ptr.vmem [resolvable:$true] %s400
    %403 = dma.hbm_to_vmem [thread:$0]  %s397, 32, %s401, [#allocation3], 128, 128, 1
    %s404 = sld [smem:[#allocation4 + $0x15]]
    %s405 = sshrl.u32 %s404, 3
    %s406 = sand.u32 %s404, 7
    %s407 = smul.u32 %s405, 16
    %s408 = sadd.s32 %s406, %s407
    %s409 = smul.addr %s408, 16
    %s410 = scalar_lea.hbm %s1, %s409
    %s411 = scalar_lea.vmem [#allocation2], 37
    %s413 = sshll.u32 %s411, 4
    %s414 = int_to_ptr.vmem [resolvable:$true] %s413
    %416 = dma.hbm_to_vmem [thread:$0]  %s410, 32, %s414, [#allocation3], 128, 128, 1
    %s417 = sld [smem:[#allocation4 + $0x16]]
    %s418 = sshrl.u32 %s417, 3
    %s419 = sand.u32 %s417, 7
    %s420 = smul.u32 %s418, 16
    %s421 = sadd.s32 %s419, %s420
    %s422 = smul.addr %s421, 16
    %s423 = scalar_lea.hbm %s1, %s422
    %s424 = scalar_lea.vmem [#allocation2], 38
    %s426 = sshll.u32 %s424, 4
    %s427 = int_to_ptr.vmem [resolvable:$true] %s426
    %429 = dma.hbm_to_vmem [thread:$0]  %s423, 32, %s427, [#allocation3], 128, 128, 1
    %s430 = sld [smem:[#allocation4 + $0x17]]
    %s431 = sshrl.u32 %s430, 3
    %s432 = sand.u32 %s430, 7
    %s433 = smul.u32 %s431, 16
    %s434 = sadd.s32 %s432, %s433
    %s435 = smul.addr %s434, 16
    %s436 = scalar_lea.hbm %s1, %s435
    %s437 = scalar_lea.vmem [#allocation2], 39
    %s439 = sshll.u32 %s437, 4
    %s440 = int_to_ptr.vmem [resolvable:$true] %s439
    %442 = dma.hbm_to_vmem [thread:$0]  %s436, 32, %s440, [#allocation3], 128, 128, 1
    %s443 = sld [smem:[#allocation4 + $0x18]]
    %s444 = sshrl.u32 %s443, 3
    %s445 = sand.u32 %s443, 7
    %s446 = smul.u32 %s444, 16
    %s447 = sadd.s32 %s445, %s446
    %s448 = smul.addr %s447, 16
    %s449 = scalar_lea.hbm %s1, %s448
    %s450 = scalar_lea.vmem [#allocation2], 48
    %s452 = sshll.u32 %s450, 4
    %s453 = int_to_ptr.vmem [resolvable:$true] %s452
    %455 = dma.hbm_to_vmem [thread:$0]  %s449, 32, %s453, [#allocation3], 128, 128, 1
    %s456 = sld [smem:[#allocation4 + $0x19]]
    %s457 = sshrl.u32 %s456, 3
    %s458 = sand.u32 %s456, 7
    %s459 = smul.u32 %s457, 16
    %s460 = sadd.s32 %s458, %s459
    %s461 = smul.addr %s460, 16
    %s462 = scalar_lea.hbm %s1, %s461
    %s463 = scalar_lea.vmem [#allocation2], 49
    %s465 = sshll.u32 %s463, 4
    %s466 = int_to_ptr.vmem [resolvable:$true] %s465
    %468 = dma.hbm_to_vmem [thread:$0]  %s462, 32, %s466, [#allocation3], 128, 128, 1
    %s469 = sld [smem:[#allocation4 + $0x1a]]
    %s470 = sshrl.u32 %s469, 3
    %s471 = sand.u32 %s469, 7
    %s472 = smul.u32 %s470, 16
    %s473 = sadd.s32 %s471, %s472
    %s474 = smul.addr %s473, 16
    %s475 = scalar_lea.hbm %s1, %s474
    %s476 = scalar_lea.vmem [#allocation2], 50
    %s478 = sshll.u32 %s476, 4
    %s479 = int_to_ptr.vmem [resolvable:$true] %s478
    %481 = dma.hbm_to_vmem [thread:$0]  %s475, 32, %s479, [#allocation3], 128, 128, 1
    %s482 = sld [smem:[#allocation4 + $0x1b]]
    %s483 = sshrl.u32 %s482, 3
    %s484 = sand.u32 %s482, 7
    %s485 = smul.u32 %s483, 16
    %s486 = sadd.s32 %s484, %s485
    %s487 = smul.addr %s486, 16
    %s488 = scalar_lea.hbm %s1, %s487
    %s489 = scalar_lea.vmem [#allocation2], 51
    %s491 = sshll.u32 %s489, 4
    %s492 = int_to_ptr.vmem [resolvable:$true] %s491
    %494 = dma.hbm_to_vmem [thread:$0]  %s488, 32, %s492, [#allocation3], 128, 128, 1
    %s495 = sld [smem:[#allocation4 + $0x1c]]
    %s496 = sshrl.u32 %s495, 3
    %s497 = sand.u32 %s495, 7
    %s498 = smul.u32 %s496, 16
    %s499 = sadd.s32 %s497, %s498
    %s500 = smul.addr %s499, 16
    %s501 = scalar_lea.hbm %s1, %s500
    %s502 = scalar_lea.vmem [#allocation2], 52
    %s504 = sshll.u32 %s502, 4
    %s505 = int_to_ptr.vmem [resolvable:$true] %s504
    %507 = dma.hbm_to_vmem [thread:$0]  %s501, 32, %s505, [#allocation3], 128, 128, 1
    %s508 = sld [smem:[#allocation4 + $0x1d]]
    %s509 = sshrl.u32 %s508, 3
    %s510 = sand.u32 %s508, 7
    %s511 = smul.u32 %s509, 16
    %s512 = sadd.s32 %s510, %s511
    %s513 = smul.addr %s512, 16
    %s514 = scalar_lea.hbm %s1, %s513
    %s515 = scalar_lea.vmem [#allocation2], 53
    %s517 = sshll.u32 %s515, 4
    %s518 = int_to_ptr.vmem [resolvable:$true] %s517
    %520 = dma.hbm_to_vmem [thread:$0]  %s514, 32, %s518, [#allocation3], 128, 128, 1
    %s521 = sld [smem:[#allocation4 + $0x1e]]
    %s522 = sshrl.u32 %s521, 3
    %s523 = sand.u32 %s521, 7
    %s524 = smul.u32 %s522, 16
    %s525 = sadd.s32 %s523, %s524
    %s526 = smul.addr %s525, 16
    %s527 = scalar_lea.hbm %s1, %s526
    %s528 = scalar_lea.vmem [#allocation2], 54
    %s530 = sshll.u32 %s528, 4
    %s531 = int_to_ptr.vmem [resolvable:$true] %s530
    %533 = dma.hbm_to_vmem [thread:$0]  %s527, 32, %s531, [#allocation3], 128, 128, 1
    %s534 = sld [smem:[#allocation4 + $0x1f]]
    %s535 = sshrl.u32 %s534, 3
    %s536 = sand.u32 %s534, 7
    %s537 = smul.u32 %s535, 16
    %s538 = sadd.s32 %s536, %s537
    %s539 = smul.addr %s538, 16
    %s540 = scalar_lea.hbm %s1, %s539
    %s541 = scalar_lea.vmem [#allocation2], 55
    %s543 = sshll.u32 %s541, 4
    %s544 = int_to_ptr.vmem [resolvable:$true] %s543
    %546 = dma.hbm_to_vmem [thread:$0]  %s540, 32, %s544, [#allocation3], 128, 128, 1
    %548 = dma.done [#allocation3], 32
    %550 = dma.done [#allocation3], 32
    %552 = dma.done [#allocation3], 32
    %554 = dma.done [#allocation3], 32
    %556 = dma.done [#allocation3], 32
    %558 = dma.done [#allocation3], 32
    %560 = dma.done [#allocation3], 32
    %562 = dma.done [#allocation3], 32
    %564 = dma.done [#allocation3], 32
    %566 = dma.done [#allocation3], 32
    %568 = dma.done [#allocation3], 32
    %570 = dma.done [#allocation3], 32
    %572 = dma.done [#allocation3], 32
    %574 = dma.done [#allocation3], 32
    %576 = dma.done [#allocation3], 32
    %578 = dma.done [#allocation3], 32
    %580 = dma.done [#allocation3], 32
    %582 = dma.done [#allocation3], 32
    %584 = dma.done [#allocation3], 32
    %586 = dma.done [#allocation3], 32
    %588 = dma.done [#allocation3], 32
    %590 = dma.done [#allocation3], 32
    %592 = dma.done [#allocation3], 32
    %594 = dma.done [#allocation3], 32
    %596 = dma.done [#allocation3], 32
    %598 = dma.done [#allocation3], 32
    %600 = dma.done [#allocation3], 32
    %602 = dma.done [#allocation3], 32
    %604 = dma.done [#allocation3], 32
    %606 = dma.done [#allocation3], 32
    %608 = dma.done [#allocation3], 32
    %610 = dma.done [#allocation3], 32
    %v611 = vld [vmem:[#allocation2] sm:$0xff]
    %v612 = vld [vmem:[#allocation2 + $0x8] sm:$0xff]
    %v613 = vld [vmem:[#allocation2 + $0x10] sm:$0xff]
    %v614 = vld [vmem:[#allocation2 + $0x18] sm:$0xff]
    %v615 = vld [vmem:[#allocation2 + $0x20] sm:$0xff]
    %v616 = vld [vmem:[#allocation2 + $0x28] sm:$0xff]
    %v617 = vld [vmem:[#allocation2 + $0x30] sm:$0xff]
    %v618 = vld [vmem:[#allocation2 + $0x38] sm:$0xff]
    %v619 = vrot.slane %v611, 1
    %v620 = vrot.slane %v612, 1
    %v621 = vrot.slane %v613, 1
    %v622 = vrot.slane %v614, 1
    %v623 = vrot.slane %v615, 1
    %v624 = vrot.slane %v616, 1
    %v625 = vrot.slane %v617, 1
    %v626 = vrot.slane %v618, 1
    %v627 = vlaneseq
    %v628 = vshrl.u32 %v627, 7
    %vm629 = vcmp.lt.s32.totalorder %v628, 7
    %v630 = vsel %vm629, %v623, %v625
    %v631 = vsel %vm629, %v624, %v626
    %v632 = vsel %vm629, %v621, %v623
    %v633 = vsel %vm629, %v622, %v624
    %v634 = vsel %vm629, %v619, %v621
    %v635 = vsel %vm629, %v620, %v622
    %v636 = vsel %vm629, %v625, %v619
    %v637 = vsel %vm629, %v626, %v620
    %v638 = vrot.slane %v611, 2
    %v639 = vrot.slane %v612, 2
    %v640 = vrot.slane %v613, 2
    %v641 = vrot.slane %v614, 2
    %v642 = vrot.slane %v615, 2
    %v643 = vrot.slane %v616, 2
    %v644 = vrot.slane %v617, 2
    %v645 = vrot.slane %v618, 2
    %vm646 = vcmp.lt.s32.totalorder %v628, 6
    %v647 = vsel %vm646, %v642, %v644
    %v648 = vsel %vm646, %v643, %v645
    %v649 = vsel %vm646, %v640, %v642
    %v650 = vsel %vm646, %v641, %v643
    %v651 = vsel %vm646, %v638, %v640
    %v652 = vsel %vm646, %v639, %v641
    %v653 = vsel %vm646, %v644, %v638
    %v654 = vsel %vm646, %v645, %v639
    %v655 = vrot.slane %v611, 3
    %v656 = vrot.slane %v612, 3
    %v657 = vrot.slane %v613, 3
    %v658 = vrot.slane %v614, 3
    %v659 = vrot.slane %v615, 3
    %v660 = vrot.slane %v616, 3
    %v661 = vrot.slane %v617, 3
    %v662 = vrot.slane %v618, 3
    %vm663 = vcmp.lt.s32.totalorder %v628, 5
    %v664 = vsel %vm663, %v659, %v661
    %v665 = vsel %vm663, %v660, %v662
    %v666 = vsel %vm663, %v657, %v659
    %v667 = vsel %vm663, %v658, %v660
    %v668 = vsel %vm663, %v655, %v657
    %v669 = vsel %vm663, %v656, %v658
    %v670 = vsel %vm663, %v661, %v655
    %v671 = vsel %vm663, %v662, %v656
    %v672 = vrot.slane %v611, 4
    %v673 = vrot.slane %v612, 4
    %v674 = vrot.slane %v613, 4
    %v675 = vrot.slane %v614, 4
    %v676 = vrot.slane %v615, 4
    %v677 = vrot.slane %v616, 4
    %v678 = vrot.slane %v617, 4
    %v679 = vrot.slane %v618, 4
    %vm680 = vcmp.lt.s32.totalorder %v628, 4
    %v681 = vsel %vm680, %v676, %v678
    %v682 = vsel %vm680, %v677, %v679
    %v683 = vsel %vm680, %v674, %v676
    %v684 = vsel %vm680, %v675, %v677
    %v685 = vsel %vm680, %v672, %v674
    %v686 = vsel %vm680, %v673, %v675
    %v687 = vsel %vm680, %v678, %v672
    %v688 = vsel %vm680, %v679, %v673
    %v689 = vrot.slane %v611, 5
    %v690 = vrot.slane %v612, 5
    %v691 = vrot.slane %v613, 5
    %v692 = vrot.slane %v614, 5
    %v693 = vrot.slane %v615, 5
    %v694 = vrot.slane %v616, 5
    %v695 = vrot.slane %v617, 5
    %v696 = vrot.slane %v618, 5
    %vm697 = vcmp.lt.s32.totalorder %v628, 3
    %v698 = vsel %vm697, %v693, %v695
    %v699 = vsel %vm697, %v694, %v696
    %v700 = vsel %vm697, %v691, %v693
    %v701 = vsel %vm697, %v692, %v694
    %v702 = vsel %vm697, %v689, %v691
    %v703 = vsel %vm697, %v690, %v692
    %v704 = vsel %vm697, %v695, %v689
    %v705 = vsel %vm697, %v696, %v690
    %v706 = vpack.c.bf16 %v613, %v611
    %v707 = vpack.c.bf16 %v614, %v612
    %v708 = vpack.c.bf16 %v632, %v634
    %v709 = vpack.c.bf16 %v633, %v635
    %v710 = vpack.c.bf16 %v649, %v651
    %v711 = vpack.c.bf16 %v650, %v652
    %v712 = vpack.c.bf16 %v666, %v668
    %v713 = vpack.c.bf16 %v667, %v669
    %v714 = vpack.c.bf16 %v683, %v685
    %v715 = vpack.c.bf16 %v684, %v686
    %v716 = vpack.c.bf16 %v700, %v702
    %v717 = vpack.c.bf16 %v701, %v703
    %v718 = vpack.c.bf16 %v617, %v615
    %v719 = vpack.c.bf16 %v618, %v616
    %v720 = vpack.c.bf16 %v636, %v630
    %v721 = vpack.c.bf16 %v637, %v631
    %v722 = vpack.c.bf16 %v653, %v647
    %v723 = vpack.c.bf16 %v654, %v648
    %v724 = vpack.c.bf16 %v670, %v664
    %v725 = vpack.c.bf16 %v671, %v665
    %v726 = vpack.c.bf16 %v687, %v681
    %v727 = vpack.c.bf16 %v688, %v682
    %v728 = vpack.c.bf16 %v704, %v698
    %v729 = vpack.c.bf16 %v705, %v699
    %v730 = vld [vmem:[#allocation8] sm:$0xff]
    %v731 = vld [vmem:[#allocation8 + $0x8] sm:$0xf]
    %v732 = vld [vmem:[#allocation8 + $0xc] sm:$0xff]
    %v733 = vld [vmem:[#allocation8 + $0x14] sm:$0xf]
    %v734 = vld [vmem:[#allocation8 + $0x18] sm:$0xff]
    %v735 = vld [vmem:[#allocation8 + $0x20] sm:$0xf]
    %v736 = vld [vmem:[#allocation8 + $0x24] sm:$0xff]
    %v737 = vld [vmem:[#allocation8 + $0x2c] sm:$0xf]
    %v738 = vld [vmem:[#allocation8 + $0x30] sm:$0xff]
    %v739 = vld [vmem:[#allocation8 + $0x38] sm:$0xf]
    %v740 = vld [vmem:[#allocation8 + $0x3c] sm:$0xff]
    %v741 = vld [vmem:[#allocation8 + $0x44] sm:$0xf]
    %v742 = vld [vmem:[#allocation8 + $0x48] sm:$0xff]
    %v743 = vld [vmem:[#allocation8 + $0x50] sm:$0xf]
    %v744 = vld [vmem:[#allocation8 + $0x54] sm:$0xff]
    %v745 = vld [vmem:[#allocation8 + $0x5c] sm:$0xf]
    %v746 = vld [vmem:[#allocation8 + $0x60] sm:$0xff]
    %v747 = vld [vmem:[#allocation8 + $0x68] sm:$0xf]
    %v748 = vld [vmem:[#allocation8 + $0x6c] sm:$0xff]
    %v749 = vld [vmem:[#allocation8 + $0x74] sm:$0xf]
    %v750 = vld [vmem:[#allocation8 + $0x78] sm:$0xff]
    %v751 = vld [vmem:[#allocation8 + $0x80] sm:$0xf]
    %v752 = vld [vmem:[#allocation8 + $0x84] sm:$0xff]
    %v753 = vld [vmem:[#allocation8 + $0x8c] sm:$0xf]
    %v754 = vld [vmem:[#allocation8 + $0x90] sm:$0xff]
    %v755 = vld [vmem:[#allocation8 + $0x98] sm:$0xf]
    %v756 = vld [vmem:[#allocation8 + $0x9c] sm:$0xff]
    %v757 = vld [vmem:[#allocation8 + $0xa4] sm:$0xf]
    %v758 = vld [vmem:[#allocation8 + $0xa8] sm:$0xff]
    %v759 = vld [vmem:[#allocation8 + $0xb0] sm:$0xf]
    %v760 = vld [vmem:[#allocation8 + $0xb4] sm:$0xff]
    %v761 = vld [vmem:[#allocation8 + $0xbc] sm:$0xf]
    %v762 = vld [vmem:[#allocation8 + $0xc0] sm:$0xff]
    %v763 = vld [vmem:[#allocation8 + $0xc8] sm:$0xf]
    %v764 = vld [vmem:[#allocation8 + $0xcc] sm:$0xff]
    %v765 = vld [vmem:[#allocation8 + $0xd4] sm:$0xf]
    %v766 = vld [vmem:[#allocation8 + $0xd8] sm:$0xff]
    %v767 = vld [vmem:[#allocation8 + $0xe0] sm:$0xf]
    %v768 = vld [vmem:[#allocation8 + $0xe4] sm:$0xff]
    %v769 = vld [vmem:[#allocation8 + $0xec] sm:$0xf]
    %v770 = vld [vmem:[#allocation8 + $0xf0] sm:$0xff]
    %v771 = vld [vmem:[#allocation8 + $0xf8] sm:$0xf]
    %v772 = vld [vmem:[#allocation8 + $0xfc] sm:$0xff]
    %v773 = vld [vmem:[#allocation8 + $0x104] sm:$0xf]
    %v774 = vld [vmem:[#allocation8 + $0x108] sm:$0xff]
    %v775 = vld [vmem:[#allocation8 + $0x110] sm:$0xf]
    %v776 = vld [vmem:[#allocation8 + $0x114] sm:$0xff]
    %v777 = vld [vmem:[#allocation8 + $0x11c] sm:$0xf]
    %v778 = vld [vmem:[#allocation8 + $0x120] sm:$0xff]
    %v779 = vld [vmem:[#allocation8 + $0x128] sm:$0xf]
    %v780 = vld [vmem:[#allocation8 + $0x12c] sm:$0xff]
    %v781 = vld [vmem:[#allocation8 + $0x134] sm:$0xf]
    %v782 = vld [vmem:[#allocation8 + $0x138] sm:$0xff]
    %v783 = vld [vmem:[#allocation8 + $0x140] sm:$0xf]
    %v784 = vld [vmem:[#allocation8 + $0x144] sm:$0xff]
    %v785 = vld [vmem:[#allocation8 + $0x14c] sm:$0xf]
    %v786 = vld [vmem:[#allocation8 + $0x150] sm:$0xff]
    %v787 = vld [vmem:[#allocation8 + $0x158] sm:$0xf]
    %v788 = vld [vmem:[#allocation8 + $0x15c] sm:$0xff]
    %v789 = vld [vmem:[#allocation8 + $0x164] sm:$0xf]
    %v790 = vld [vmem:[#allocation8 + $0x168] sm:$0xff]
    %v791 = vld [vmem:[#allocation8 + $0x170] sm:$0xf]
    %v792 = vld [vmem:[#allocation8 + $0x174] sm:$0xff]
    %v793 = vld [vmem:[#allocation8 + $0x17c] sm:$0xf]
    %v794 = vld [vmem:[#allocation8 + $0x180] sm:$0xff]
    %v795 = vld [vmem:[#allocation8 + $0x188] sm:$0xf]
    %v796 = vld [vmem:[#allocation8 + $0x18c] sm:$0xff]
    %v797 = vld [vmem:[#allocation8 + $0x194] sm:$0xf]
    %v798 = vld [vmem:[#allocation8 + $0x198] sm:$0xff]
    %v799 = vld [vmem:[#allocation8 + $0x1a0] sm:$0xf]
    %v800 = vld [vmem:[#allocation8 + $0x1a4] sm:$0xff]
    %v801 = vld [vmem:[#allocation8 + $0x1ac] sm:$0xf]
    %v802 = vld [vmem:[#allocation8 + $0x1b0] sm:$0xff]
    %v803 = vld [vmem:[#allocation8 + $0x1b8] sm:$0xf]
    %v804 = vld [vmem:[#allocation8 + $0x1bc] sm:$0xff]
    %v805 = vld [vmem:[#allocation8 + $0x1c4] sm:$0xf]
    %v806 = vld [vmem:[#allocation8 + $0x1c8] sm:$0xff]
    %v807 = vld [vmem:[#allocation8 + $0x1d0] sm:$0xf]
    %v808 = vld [vmem:[#allocation8 + $0x1d4] sm:$0xff]
    %v809 = vld [vmem:[#allocation8 + $0x1dc] sm:$0xf]
    %v810 = vld [vmem:[#allocation8 + $0x1e0] sm:$0xff]
    %v811 = vld [vmem:[#allocation8 + $0x1e8] sm:$0xf]
    %v812 = vld [vmem:[#allocation8 + $0x1ec] sm:$0xff]
    %v813 = vld [vmem:[#allocation8 + $0x1f4] sm:$0xf]
    %v814 = vld [vmem:[#allocation8 + $0x1f8] sm:$0xff]
    %v815 = vld [vmem:[#allocation8 + $0x200] sm:$0xf]
    %v816 = vld [vmem:[#allocation8 + $0x204] sm:$0xff]
    %v817 = vld [vmem:[#allocation8 + $0x20c] sm:$0xf]
    %v818 = vld [vmem:[#allocation8 + $0x210] sm:$0xff]
    %v819 = vld [vmem:[#allocation8 + $0x218] sm:$0xf]
    %v820 = vld [vmem:[#allocation8 + $0x21c] sm:$0xff]
    %v821 = vld [vmem:[#allocation8 + $0x224] sm:$0xf]
    %v822 = vld [vmem:[#allocation8 + $0x228] sm:$0xff]
    %v823 = vld [vmem:[#allocation8 + $0x230] sm:$0xf]
    %v824 = vld [vmem:[#allocation8 + $0x234] sm:$0xff]
    %v825 = vld [vmem:[#allocation8 + $0x23c] sm:$0xf]
    %v826 = vld [vmem:[#allocation8 + $0x240] sm:$0xff]
    %v827 = vld [vmem:[#allocation8 + $0x248] sm:$0xf]
    %v828 = vld [vmem:[#allocation8 + $0x24c] sm:$0xff]
    %v829 = vld [vmem:[#allocation8 + $0x254] sm:$0xf]
    %v830 = vld [vmem:[#allocation8 + $0x258] sm:$0xff]
    %v831 = vld [vmem:[#allocation8 + $0x260] sm:$0xf]
    %v832 = vld [vmem:[#allocation8 + $0x264] sm:$0xff]
    %v833 = vld [vmem:[#allocation8 + $0x26c] sm:$0xf]
    %v834 = vld [vmem:[#allocation8 + $0x270] sm:$0xff]
    %v835 = vld [vmem:[#allocation8 + $0x278] sm:$0xf]
    %v836 = vld [vmem:[#allocation8 + $0x27c] sm:$0xff]
    %v837 = vld [vmem:[#allocation8 + $0x284] sm:$0xf]
    %v838 = vld [vmem:[#allocation8 + $0x288] sm:$0xff]
    %v839 = vld [vmem:[#allocation8 + $0x290] sm:$0xf]
    %v840 = vld [vmem:[#allocation8 + $0x294] sm:$0xff]
    %v841 = vld [vmem:[#allocation8 + $0x29c] sm:$0xf]
    %v842 = vld [vmem:[#allocation8 + $0x2a0] sm:$0xff]
    %v843 = vld [vmem:[#allocation8 + $0x2a8] sm:$0xf]
    %v844 = vld [vmem:[#allocation8 + $0x2ac] sm:$0xff]
    %v845 = vld [vmem:[#allocation8 + $0x2b4] sm:$0xf]
    %v846 = vld [vmem:[#allocation8 + $0x2b8] sm:$0xff]
    %v847 = vld [vmem:[#allocation8 + $0x2c0] sm:$0xf]
    %v848 = vld [vmem:[#allocation8 + $0x2c4] sm:$0xff]
    %v849 = vld [vmem:[#allocation8 + $0x2cc] sm:$0xf]
    %v850 = vld [vmem:[#allocation8 + $0x2d0] sm:$0xff]
    %v851 = vld [vmem:[#allocation8 + $0x2d8] sm:$0xf]
    %v852 = vld [vmem:[#allocation8 + $0x2dc] sm:$0xff]
    %v853 = vld [vmem:[#allocation8 + $0x2e4] sm:$0xf]
    %v854 = vld [vmem:[#allocation8 + $0x2e8] sm:$0xff]
    %v855 = vld [vmem:[#allocation8 + $0x2f0] sm:$0xf]
    %v856 = vld [vmem:[#allocation8 + $0x2f4] sm:$0xff]
    %v857 = vld [vmem:[#allocation8 + $0x2fc] sm:$0xf]
    %v858 = vld [vmem:[#allocation8 + $0x300] sm:$0xff]
    %v859 = vld [vmem:[#allocation8 + $0x308] sm:$0xf]
    %v860 = vld [vmem:[#allocation8 + $0x30c] sm:$0xff]
    %v861 = vld [vmem:[#allocation8 + $0x314] sm:$0xf]
    %v862 = vld [vmem:[#allocation8 + $0x318] sm:$0xff]
    %v863 = vld [vmem:[#allocation8 + $0x320] sm:$0xf]
    %v864 = vld [vmem:[#allocation8 + $0x324] sm:$0xff]
    %v865 = vld [vmem:[#allocation8 + $0x32c] sm:$0xf]
    %v866 = vld [vmem:[#allocation8 + $0x330] sm:$0xff]
    %v867 = vld [vmem:[#allocation8 + $0x338] sm:$0xf]
    %v868 = vld [vmem:[#allocation8 + $0x33c] sm:$0xff]
    %v869 = vld [vmem:[#allocation8 + $0x344] sm:$0xf]
    %v870 = vld [vmem:[#allocation8 + $0x348] sm:$0xff]
    %v871 = vld [vmem:[#allocation8 + $0x350] sm:$0xf]
    %v872 = vld [vmem:[#allocation8 + $0x354] sm:$0xff]
    %v873 = vld [vmem:[#allocation8 + $0x35c] sm:$0xf]
    %v874 = vld [vmem:[#allocation8 + $0x360] sm:$0xff]
    %v875 = vld [vmem:[#allocation8 + $0x368] sm:$0xf]
    %v876 = vld [vmem:[#allocation8 + $0x36c] sm:$0xff]
    %v877 = vld [vmem:[#allocation8 + $0x374] sm:$0xf]
    %v878 = vld [vmem:[#allocation8 + $0x378] sm:$0xff]
    %v879 = vld [vmem:[#allocation8 + $0x380] sm:$0xf]
    %v880 = vld [vmem:[#allocation8 + $0x384] sm:$0xff]
    %v881 = vld [vmem:[#allocation8 + $0x38c] sm:$0xf]
    %v882 = vld [vmem:[#allocation8 + $0x390] sm:$0xff]
    %v883 = vld [vmem:[#allocation8 + $0x398] sm:$0xf]
    %v884 = vld [vmem:[#allocation8 + $0x39c] sm:$0xff]
    %v885 = vld [vmem:[#allocation8 + $0x3a4] sm:$0xf]
    %v886 = vld [vmem:[#allocation8 + $0x3a8] sm:$0xff]
    %v887 = vld [vmem:[#allocation8 + $0x3b0] sm:$0xf]
    %v888 = vld [vmem:[#allocation8 + $0x3b4] sm:$0xff]
    %v889 = vld [vmem:[#allocation8 + $0x3bc] sm:$0xf]
    %v890 = vld [vmem:[#allocation8 + $0x3c0] sm:$0xff]
    %v891 = vld [vmem:[#allocation8 + $0x3c8] sm:$0xf]
    %v892 = vld [vmem:[#allocation8 + $0x3cc] sm:$0xff]
    %v893 = vld [vmem:[#allocation8 + $0x3d4] sm:$0xf]
    %v894 = vld [vmem:[#allocation8 + $0x3d8] sm:$0xff]
    %v895 = vld [vmem:[#allocation8 + $0x3e0] sm:$0xf]
    %v896 = vld [vmem:[#allocation8 + $0x3e4] sm:$0xff]
    %v897 = vld [vmem:[#allocation8 + $0x3ec] sm:$0xf]
    %v898 = vld [vmem:[#allocation8 + $0x3f0] sm:$0xff]
    %v899 = vld [vmem:[#allocation8 + $0x3f8] sm:$0xf]
    %v900 = vld [vmem:[#allocation8 + $0x3fc] sm:$0xff]
    %v901 = vld [vmem:[#allocation8 + $0x404] sm:$0xf]
    %v902 = vld [vmem:[#allocation8 + $0x408] sm:$0xff]
    %v903 = vld [vmem:[#allocation8 + $0x410] sm:$0xf]
    %v904 = vld [vmem:[#allocation8 + $0x414] sm:$0xff]
    %v905 = vld [vmem:[#allocation8 + $0x41c] sm:$0xf]
    %v906 = vld [vmem:[#allocation8 + $0x420] sm:$0xff]
    %v907 = vld [vmem:[#allocation8 + $0x428] sm:$0xf]
    %v908 = vld [vmem:[#allocation8 + $0x42c] sm:$0xff]
    %v909 = vld [vmem:[#allocation8 + $0x434] sm:$0xf]
    %v910 = vld [vmem:[#allocation8 + $0x438] sm:$0xff]
    %v911 = vld [vmem:[#allocation8 + $0x440] sm:$0xf]
    %v912 = vld [vmem:[#allocation8 + $0x444] sm:$0xff]
    %v913 = vld [vmem:[#allocation8 + $0x44c] sm:$0xf]
    %v914 = vld [vmem:[#allocation8 + $0x450] sm:$0xff]
    %v915 = vld [vmem:[#allocation8 + $0x458] sm:$0xf]
    %v916 = vld [vmem:[#allocation8 + $0x45c] sm:$0xff]
    %v917 = vld [vmem:[#allocation8 + $0x464] sm:$0xf]
    %v918 = vld [vmem:[#allocation8 + $0x468] sm:$0xff]
    %v919 = vld [vmem:[#allocation8 + $0x470] sm:$0xf]
    %v920 = vld [vmem:[#allocation8 + $0x474] sm:$0xff]
    %v921 = vld [vmem:[#allocation8 + $0x47c] sm:$0xf]
    %v922 = vld [vmem:[#allocation8 + $0x480] sm:$0xff]
    %v923 = vld [vmem:[#allocation8 + $0x488] sm:$0xf]
    %v924 = vld [vmem:[#allocation8 + $0x48c] sm:$0xff]
    %v925 = vld [vmem:[#allocation8 + $0x494] sm:$0xf]
    %v926 = vld [vmem:[#allocation8 + $0x498] sm:$0xff]
    %v927 = vld [vmem:[#allocation8 + $0x4a0] sm:$0xf]
    %v928 = vld [vmem:[#allocation8 + $0x4a4] sm:$0xff]
    %v929 = vld [vmem:[#allocation8 + $0x4ac] sm:$0xf]
    %v930 = vld [vmem:[#allocation8 + $0x4b0] sm:$0xff]
    %v931 = vld [vmem:[#allocation8 + $0x4b8] sm:$0xf]
    %v932 = vld [vmem:[#allocation8 + $0x4bc] sm:$0xff]
    %v933 = vld [vmem:[#allocation8 + $0x4c4] sm:$0xf]
    %v934 = vld [vmem:[#allocation8 + $0x4c8] sm:$0xff]
    %v935 = vld [vmem:[#allocation8 + $0x4d0] sm:$0xf]
    %v936 = vld [vmem:[#allocation8 + $0x4d4] sm:$0xff]
    %v937 = vld [vmem:[#allocation8 + $0x4dc] sm:$0xf]
    %v938 = vld [vmem:[#allocation8 + $0x4e0] sm:$0xff]
    %v939 = vld [vmem:[#allocation8 + $0x4e8] sm:$0xf]
    %v940 = vld [vmem:[#allocation8 + $0x4ec] sm:$0xff]
    %v941 = vld [vmem:[#allocation8 + $0x4f4] sm:$0xf]
    %v942 = vld [vmem:[#allocation8 + $0x4f8] sm:$0xff]
    %v943 = vld [vmem:[#allocation8 + $0x500] sm:$0xf]
    %v944 = vld [vmem:[#allocation8 + $0x504] sm:$0xff]
    %v945 = vld [vmem:[#allocation8 + $0x50c] sm:$0xf]
    %v946 = vld [vmem:[#allocation8 + $0x510] sm:$0xff]
    %v947 = vld [vmem:[#allocation8 + $0x518] sm:$0xf]
    %v948 = vld [vmem:[#allocation8 + $0x51c] sm:$0xff]
    %v949 = vld [vmem:[#allocation8 + $0x524] sm:$0xf]
    %v950 = vld [vmem:[#allocation8 + $0x528] sm:$0xff]
    %v951 = vld [vmem:[#allocation8 + $0x530] sm:$0xf]
    %v952 = vld [vmem:[#allocation8 + $0x534] sm:$0xff]
    %v953 = vld [vmem:[#allocation8 + $0x53c] sm:$0xf]
    %v954 = vld [vmem:[#allocation8 + $0x540] sm:$0xff]
    %v955 = vld [vmem:[#allocation8 + $0x548] sm:$0xf]
    %v956 = vld [vmem:[#allocation8 + $0x54c] sm:$0xff]
    %v957 = vld [vmem:[#allocation8 + $0x554] sm:$0xf]
    %v958 = vld [vmem:[#allocation8 + $0x558] sm:$0xff]
    %v959 = vld [vmem:[#allocation8 + $0x560] sm:$0xf]
    %v960 = vld [vmem:[#allocation8 + $0x564] sm:$0xff]
    %v961 = vld [vmem:[#allocation8 + $0x56c] sm:$0xf]
    %v962 = vld [vmem:[#allocation8 + $0x570] sm:$0xff]
    %v963 = vld [vmem:[#allocation8 + $0x578] sm:$0xf]
    %v964 = vld [vmem:[#allocation8 + $0x57c] sm:$0xff]
    %v965 = vld [vmem:[#allocation8 + $0x584] sm:$0xf]
    %v966 = vld [vmem:[#allocation8 + $0x588] sm:$0xff]
    %v967 = vld [vmem:[#allocation8 + $0x590] sm:$0xf]
    %v968 = vld [vmem:[#allocation8 + $0x594] sm:$0xff]
    %v969 = vld [vmem:[#allocation8 + $0x59c] sm:$0xf]
    %v970 = vld [vmem:[#allocation8 + $0x5a0] sm:$0xff]
    %v971 = vld [vmem:[#allocation8 + $0x5a8] sm:$0xf]
    %v972 = vld [vmem:[#allocation8 + $0x5ac] sm:$0xff]
    %v973 = vld [vmem:[#allocation8 + $0x5b4] sm:$0xf]
    %v974 = vld [vmem:[#allocation8 + $0x5b8] sm:$0xff]
    %v975 = vld [vmem:[#allocation8 + $0x5c0] sm:$0xf]
    %v976 = vld [vmem:[#allocation8 + $0x5c4] sm:$0xff]
    %v977 = vld [vmem:[#allocation8 + $0x5cc] sm:$0xf]
    %v978 = vld [vmem:[#allocation8 + $0x5d0] sm:$0xff]
    %v979 = vld [vmem:[#allocation8 + $0x5d8] sm:$0xf]
    %v980 = vld [vmem:[#allocation8 + $0x5dc] sm:$0xff]
    %v981 = vld [vmem:[#allocation8 + $0x5e4] sm:$0xf]
    %v982 = vld [vmem:[#allocation8 + $0x5e8] sm:$0xff]
    %v983 = vld [vmem:[#allocation8 + $0x5f0] sm:$0xf]
    %v984 = vld [vmem:[#allocation8 + $0x5f4] sm:$0xff]
    %v985 = vld [vmem:[#allocation8 + $0x5fc] sm:$0xf]
    %v986 = vld [vmem:[#allocation8 + $0x600] sm:$0xff]
    %v987 = vld [vmem:[#allocation8 + $0x608] sm:$0xf]
    %v988 = vld [vmem:[#allocation8 + $0x60c] sm:$0xff]
    %v989 = vld [vmem:[#allocation8 + $0x614] sm:$0xf]
    %v990 = vld [vmem:[#allocation8 + $0x618] sm:$0xff]
    %v991 = vld [vmem:[#allocation8 + $0x620] sm:$0xf]
    %v992 = vld [vmem:[#allocation8 + $0x624] sm:$0xff]
    %v993 = vld [vmem:[#allocation8 + $0x62c] sm:$0xf]
    %v994 = vld [vmem:[#allocation8 + $0x630] sm:$0xff]
    %v995 = vld [vmem:[#allocation8 + $0x638] sm:$0xf]
    %v996 = vld [vmem:[#allocation8 + $0x63c] sm:$0xff]
    %v997 = vld [vmem:[#allocation8 + $0x644] sm:$0xf]
    %v998 = vld [vmem:[#allocation8 + $0x648] sm:$0xff]
    %v999 = vld [vmem:[#allocation8 + $0x650] sm:$0xf]
    %v1000 = vld [vmem:[#allocation8 + $0x654] sm:$0xff]
    %v1001 = vld [vmem:[#allocation8 + $0x65c] sm:$0xf]
    %v1002 = vld [vmem:[#allocation8 + $0x660] sm:$0xff]
    %v1003 = vld [vmem:[#allocation8 + $0x668] sm:$0xf]
    %v1004 = vld [vmem:[#allocation8 + $0x66c] sm:$0xff]
    %v1005 = vld [vmem:[#allocation8 + $0x674] sm:$0xf]
    %v1006 = vld [vmem:[#allocation8 + $0x678] sm:$0xff]
    %v1007 = vld [vmem:[#allocation8 + $0x680] sm:$0xf]
    %v1008 = vld [vmem:[#allocation8 + $0x684] sm:$0xff]
    %v1009 = vld [vmem:[#allocation8 + $0x68c] sm:$0xf]
    %v1010 = vld [vmem:[#allocation8 + $0x690] sm:$0xff]
    %v1011 = vld [vmem:[#allocation8 + $0x698] sm:$0xf]
    %v1012 = vld [vmem:[#allocation8 + $0x69c] sm:$0xff]
    %v1013 = vld [vmem:[#allocation8 + $0x6a4] sm:$0xf]
    %v1014 = vld [vmem:[#allocation8 + $0x6a8] sm:$0xff]
    %v1015 = vld [vmem:[#allocation8 + $0x6b0] sm:$0xf]
    %v1016 = vld [vmem:[#allocation8 + $0x6b4] sm:$0xff]
    %v1017 = vld [vmem:[#allocation8 + $0x6bc] sm:$0xf]
    %v1018 = vld [vmem:[#allocation8 + $0x6c0] sm:$0xff]
    %v1019 = vld [vmem:[#allocation8 + $0x6c8] sm:$0xf]
    %v1020 = vld [vmem:[#allocation8 + $0x6cc] sm:$0xff]
    %v1021 = vld [vmem:[#allocation8 + $0x6d4] sm:$0xf]
    %v1022 = vld [vmem:[#allocation8 + $0x6d8] sm:$0xff]
    %v1023 = vld [vmem:[#allocation8 + $0x6e0] sm:$0xf]
    %v1024 = vld [vmem:[#allocation8 + $0x6e4] sm:$0xff]
    %v1025 = vld [vmem:[#allocation8 + $0x6ec] sm:$0xf]
    %v1026 = vld [vmem:[#allocation8 + $0x6f0] sm:$0xff]
    %v1027 = vld [vmem:[#allocation8 + $0x6f8] sm:$0xf]
    %v1028 = vld [vmem:[#allocation8 + $0x6fc] sm:$0xff]
    %v1029 = vld [vmem:[#allocation8 + $0x704] sm:$0xf]
    %v1030 = vld [vmem:[#allocation8 + $0x708] sm:$0xff]
    %v1031 = vld [vmem:[#allocation8 + $0x710] sm:$0xf]
    %v1032 = vld [vmem:[#allocation8 + $0x714] sm:$0xff]
    %v1033 = vld [vmem:[#allocation8 + $0x71c] sm:$0xf]
    %v1034 = vld [vmem:[#allocation8 + $0x720] sm:$0xff]
    %v1035 = vld [vmem:[#allocation8 + $0x728] sm:$0xf]
    %v1036 = vld [vmem:[#allocation8 + $0x72c] sm:$0xff]
    %v1037 = vld [vmem:[#allocation8 + $0x734] sm:$0xf]
    %v1038 = vld [vmem:[#allocation8 + $0x738] sm:$0xff]
    %v1039 = vld [vmem:[#allocation8 + $0x740] sm:$0xf]
    %v1040 = vld [vmem:[#allocation8 + $0x744] sm:$0xff]
    %v1041 = vld [vmem:[#allocation8 + $0x74c] sm:$0xf]
    %v1042 = vld [vmem:[#allocation8 + $0x750] sm:$0xff]
    %v1043 = vld [vmem:[#allocation8 + $0x758] sm:$0xf]
    %v1044 = vld [vmem:[#allocation8 + $0x75c] sm:$0xff]
    %v1045 = vld [vmem:[#allocation8 + $0x764] sm:$0xf]
    %v1046 = vld [vmem:[#allocation8 + $0x768] sm:$0xff]
    %v1047 = vld [vmem:[#allocation8 + $0x770] sm:$0xf]
    %v1048 = vld [vmem:[#allocation8 + $0x774] sm:$0xff]
    %v1049 = vld [vmem:[#allocation8 + $0x77c] sm:$0xf]
    %v1050 = vld [vmem:[#allocation8 + $0x780] sm:$0xff]
    %v1051 = vld [vmem:[#allocation8 + $0x788] sm:$0xf]
    %v1052 = vld [vmem:[#allocation8 + $0x78c] sm:$0xff]
    %v1053 = vld [vmem:[#allocation8 + $0x794] sm:$0xf]
    %v1054 = vld [vmem:[#allocation8 + $0x798] sm:$0xff]
    %v1055 = vld [vmem:[#allocation8 + $0x7a0] sm:$0xf]
    %v1056 = vld [vmem:[#allocation8 + $0x7a4] sm:$0xff]
    %v1057 = vld [vmem:[#allocation8 + $0x7ac] sm:$0xf]
    %v1058 = vld [vmem:[#allocation8 + $0x7b0] sm:$0xff]
    %v1059 = vld [vmem:[#allocation8 + $0x7b8] sm:$0xf]
    %v1060 = vld [vmem:[#allocation8 + $0x7bc] sm:$0xff]
    %v1061 = vld [vmem:[#allocation8 + $0x7c4] sm:$0xf]
    %v1062 = vld [vmem:[#allocation8 + $0x7c8] sm:$0xff]
    %v1063 = vld [vmem:[#allocation8 + $0x7d0] sm:$0xf]
    %v1064 = vld [vmem:[#allocation8 + $0x7d4] sm:$0xff]
    %v1065 = vld [vmem:[#allocation8 + $0x7dc] sm:$0xf]
    %v1066 = vld [vmem:[#allocation8 + $0x7e0] sm:$0xff]
    %v1067 = vld [vmem:[#allocation8 + $0x7e8] sm:$0xf]
    %v1068 = vld [vmem:[#allocation8 + $0x7ec] sm:$0xff]
    %v1069 = vld [vmem:[#allocation8 + $0x7f4] sm:$0xf]
    %v1070 = vld [vmem:[#allocation8 + $0x7f8] sm:$0xff]
    %v1071 = vld [vmem:[#allocation8 + $0x800] sm:$0xf]
    %v1072 = vld [vmem:[#allocation8 + $0x804] sm:$0xff]
    %v1073 = vld [vmem:[#allocation8 + $0x80c] sm:$0xf]
    %v1074 = vld [vmem:[#allocation8 + $0x810] sm:$0xff]
    %v1075 = vld [vmem:[#allocation8 + $0x818] sm:$0xf]
    %v1076 = vld [vmem:[#allocation8 + $0x81c] sm:$0xff]
    %v1077 = vld [vmem:[#allocation8 + $0x824] sm:$0xf]
    %v1078 = vld [vmem:[#allocation8 + $0x828] sm:$0xff]
    %v1079 = vld [vmem:[#allocation8 + $0x830] sm:$0xf]
    %v1080 = vld [vmem:[#allocation8 + $0x834] sm:$0xff]
    %v1081 = vld [vmem:[#allocation8 + $0x83c] sm:$0xf]
    %v1082 = vld [vmem:[#allocation8 + $0x840] sm:$0xff]
    %v1083 = vld [vmem:[#allocation8 + $0x848] sm:$0xf]
    %v1084 = vld [vmem:[#allocation8 + $0x84c] sm:$0xff]
    %v1085 = vld [vmem:[#allocation8 + $0x854] sm:$0xf]
    %v1086 = vld [vmem:[#allocation8 + $0x858] sm:$0xff]
    %v1087 = vld [vmem:[#allocation8 + $0x860] sm:$0xf]
    %v1088 = vld [vmem:[#allocation8 + $0x864] sm:$0xff]
    %v1089 = vld [vmem:[#allocation8 + $0x86c] sm:$0xf]
    %v1090 = vld [vmem:[#allocation8 + $0x870] sm:$0xff]
    %v1091 = vld [vmem:[#allocation8 + $0x878] sm:$0xf]
    %v1092 = vld [vmem:[#allocation8 + $0x87c] sm:$0xff]
    %v1093 = vld [vmem:[#allocation8 + $0x884] sm:$0xf]
    %v1094 = vld [vmem:[#allocation8 + $0x888] sm:$0xff]
    %v1095 = vld [vmem:[#allocation8 + $0x890] sm:$0xf]
    %v1096 = vld [vmem:[#allocation8 + $0x894] sm:$0xff]
    %v1097 = vld [vmem:[#allocation8 + $0x89c] sm:$0xf]
    %v1098 = vld [vmem:[#allocation8 + $0x8a0] sm:$0xff]
    %v1099 = vld [vmem:[#allocation8 + $0x8a8] sm:$0xf]
    %v1100 = vld [vmem:[#allocation8 + $0x8ac] sm:$0xff]
    %v1101 = vld [vmem:[#allocation8 + $0x8b4] sm:$0xf]
    %v1102 = vld [vmem:[#allocation8 + $0x8b8] sm:$0xff]
    %v1103 = vld [vmem:[#allocation8 + $0x8c0] sm:$0xf]
    %v1104 = vld [vmem:[#allocation8 + $0x8c4] sm:$0xff]
    %v1105 = vld [vmem:[#allocation8 + $0x8cc] sm:$0xf]
    %v1106 = vld [vmem:[#allocation8 + $0x8d0] sm:$0xff]
    %v1107 = vld [vmem:[#allocation8 + $0x8d8] sm:$0xf]
    %v1108 = vld [vmem:[#allocation8 + $0x8dc] sm:$0xff]
    %v1109 = vld [vmem:[#allocation8 + $0x8e4] sm:$0xf]
    %v1110 = vld [vmem:[#allocation8 + $0x8e8] sm:$0xff]
    %v1111 = vld [vmem:[#allocation8 + $0x8f0] sm:$0xf]
    %v1112 = vld [vmem:[#allocation8 + $0x8f4] sm:$0xff]
    %v1113 = vld [vmem:[#allocation8 + $0x8fc] sm:$0xf]
    %v1114 = vld [vmem:[#allocation9] sm:$0xff]
    %v1115 = vld [vmem:[#allocation9 + $0x8] sm:$0xff]
    %v1116 = vld [vmem:[#allocation9 + $0x10] sm:$0xff]
    %v1117 = vld [vmem:[#allocation9 + $0x18] sm:$0xff]
    %v1118 = vld [vmem:[#allocation9 + $0x20] sm:$0xff]
    %v1119 = vld [vmem:[#allocation9 + $0x28] sm:$0xff]
    %v1120 = vld [vmem:[#allocation9 + $0x30] sm:$0xff]
    %v1121 = vld [vmem:[#allocation9 + $0x38] sm:$0xff]
    %v1122 = vld [vmem:[#allocation9 + $0x40] sm:$0xff]
    %v1123 = vld [vmem:[#allocation9 + $0x48] sm:$0xff]
    %v1124 = vld [vmem:[#allocation9 + $0x50] sm:$0xff]
    %v1125 = vld [vmem:[#allocation9 + $0x58] sm:$0xff]
    %v1510 = vunpack.c.l.b16 %v730
    %v1511 = vunpack.c.h.b16 %v730
    %v1512 = vunpack.c.l.b16 %v731
    %v1513 = vunpack.c.l.b16 %v732
    %v1514 = vunpack.c.h.b16 %v732
    %v1515 = vunpack.c.l.b16 %v733
    %v1516 = vunpack.c.l.b16 %v734
    %v1517 = vunpack.c.h.b16 %v734
    %v1518 = vunpack.c.l.b16 %v735
    %v1519 = vunpack.c.l.b16 %v736
    %v1520 = vunpack.c.h.b16 %v736
    %v1521 = vunpack.c.l.b16 %v737
    %v1522 = vunpack.c.l.b16 %v738
    %v1523 = vunpack.c.h.b16 %v738
    %v1524 = vunpack.c.l.b16 %v739
    %v1525 = vunpack.c.l.b16 %v740
    %v1526 = vunpack.c.h.b16 %v740
    %v1527 = vunpack.c.l.b16 %v741
    %v1528 = vunpack.c.l.b16 %v742
    %v1529 = vunpack.c.h.b16 %v742
    %v1530 = vunpack.c.l.b16 %v743
    %v1531 = vunpack.c.l.b16 %v744
    %v1532 = vunpack.c.h.b16 %v744
    %v1533 = vunpack.c.l.b16 %v745
    %v1534 = vunpack.c.l.b16 %v746
    %v1535 = vunpack.c.h.b16 %v746
    %v1536 = vunpack.c.l.b16 %v747
    %v1537 = vunpack.c.l.b16 %v748
    %v1538 = vunpack.c.h.b16 %v748
    %v1539 = vunpack.c.l.b16 %v749
    %v1540 = vunpack.c.l.b16 %v750
    %v1541 = vunpack.c.h.b16 %v750
    %v1542 = vunpack.c.l.b16 %v751
    %v1543 = vunpack.c.l.b16 %v752
    %v1544 = vunpack.c.h.b16 %v752
    %v1545 = vunpack.c.l.b16 %v753
    %v1546 = vunpack.c.l.b16 %v754
    %v1547 = vunpack.c.h.b16 %v754
    %v1548 = vunpack.c.l.b16 %v755
    %v1549 = vunpack.c.l.b16 %v756
    %v1550 = vunpack.c.h.b16 %v756
    %v1551 = vunpack.c.l.b16 %v757
    %v1552 = vunpack.c.l.b16 %v758
    %v1553 = vunpack.c.h.b16 %v758
    %v1554 = vunpack.c.l.b16 %v759
    %v1555 = vunpack.c.l.b16 %v760
    %v1556 = vunpack.c.h.b16 %v760
    %v1557 = vunpack.c.l.b16 %v761
    %v1558 = vunpack.c.l.b16 %v762
    %v1559 = vunpack.c.h.b16 %v762
    %v1560 = vunpack.c.l.b16 %v763
    %v1561 = vunpack.c.l.b16 %v764
    %v1562 = vunpack.c.h.b16 %v764
    %v1563 = vunpack.c.l.b16 %v765
    %v1564 = vunpack.c.l.b16 %v766
    %v1565 = vunpack.c.h.b16 %v766
    %v1566 = vunpack.c.l.b16 %v767
    %v1567 = vunpack.c.l.b16 %v768
    %v1568 = vunpack.c.h.b16 %v768
    %v1569 = vunpack.c.l.b16 %v769
    %v1570 = vunpack.c.l.b16 %v770
    %v1571 = vunpack.c.h.b16 %v770
    %v1572 = vunpack.c.l.b16 %v771
    %v1573 = vunpack.c.l.b16 %v772
    %v1574 = vunpack.c.h.b16 %v772
    %v1575 = vunpack.c.l.b16 %v773
    %v1576 = vunpack.c.l.b16 %v774
    %v1577 = vunpack.c.h.b16 %v774
    %v1578 = vunpack.c.l.b16 %v775
    %v1579 = vunpack.c.l.b16 %v776
    %v1580 = vunpack.c.h.b16 %v776
    %v1581 = vunpack.c.l.b16 %v777
    %v1582 = vunpack.c.l.b16 %v778
    %v1583 = vunpack.c.h.b16 %v778
    %v1584 = vunpack.c.l.b16 %v779
    %v1585 = vunpack.c.l.b16 %v780
    %v1586 = vunpack.c.h.b16 %v780
    %v1587 = vunpack.c.l.b16 %v781
    %v1588 = vunpack.c.l.b16 %v782
    %v1589 = vunpack.c.h.b16 %v782
    %v1590 = vunpack.c.l.b16 %v783
    %v1591 = vunpack.c.l.b16 %v784
    %v1592 = vunpack.c.h.b16 %v784
    %v1593 = vunpack.c.l.b16 %v785
    %v1594 = vunpack.c.l.b16 %v786
    %v1595 = vunpack.c.h.b16 %v786
    %v1596 = vunpack.c.l.b16 %v787
    %v1597 = vunpack.c.l.b16 %v788
    %v1598 = vunpack.c.h.b16 %v788
    %v1599 = vunpack.c.l.b16 %v789
    %v1600 = vunpack.c.l.b16 %v790
    %v1601 = vunpack.c.h.b16 %v790
    %v1602 = vunpack.c.l.b16 %v791
    %v1603 = vunpack.c.l.b16 %v792
    %v1604 = vunpack.c.h.b16 %v792
    %v1605 = vunpack.c.l.b16 %v793
    %v1606 = vunpack.c.l.b16 %v794
    %v1607 = vunpack.c.h.b16 %v794
    %v1608 = vunpack.c.l.b16 %v795
    %v1609 = vunpack.c.l.b16 %v796
    %v1610 = vunpack.c.h.b16 %v796
    %v1611 = vunpack.c.l.b16 %v797
    %v1612 = vunpack.c.l.b16 %v798
    %v1613 = vunpack.c.h.b16 %v798
    %v1614 = vunpack.c.l.b16 %v799
    %v1615 = vunpack.c.l.b16 %v800
    %v1616 = vunpack.c.h.b16 %v800
    %v1617 = vunpack.c.l.b16 %v801
    %v1618 = vunpack.c.l.b16 %v802
    %v1619 = vunpack.c.h.b16 %v802
    %v1620 = vunpack.c.l.b16 %v803
    %v1621 = vunpack.c.l.b16 %v804
    %v1622 = vunpack.c.h.b16 %v804
    %v1623 = vunpack.c.l.b16 %v805
    %v1624 = vunpack.c.l.b16 %v806
    %v1625 = vunpack.c.h.b16 %v806
    %v1626 = vunpack.c.l.b16 %v807
    %v1627 = vunpack.c.l.b16 %v808
    %v1628 = vunpack.c.h.b16 %v808
    %v1629 = vunpack.c.l.b16 %v809
    %v1630 = vunpack.c.l.b16 %v810
    %v1631 = vunpack.c.h.b16 %v810
    %v1632 = vunpack.c.l.b16 %v811
    %v1633 = vunpack.c.l.b16 %v812
    %v1634 = vunpack.c.h.b16 %v812
    %v1635 = vunpack.c.l.b16 %v813
    %v1636 = vunpack.c.l.b16 %v814
    %v1637 = vunpack.c.h.b16 %v814
    %v1638 = vunpack.c.l.b16 %v815
    %v1639 = vunpack.c.l.b16 %v816
    %v1640 = vunpack.c.h.b16 %v816
    %v1641 = vunpack.c.l.b16 %v817
    %v1642 = vunpack.c.l.b16 %v818
    %v1643 = vunpack.c.h.b16 %v818
    %v1644 = vunpack.c.l.b16 %v819
    %v1645 = vunpack.c.l.b16 %v820
    %v1646 = vunpack.c.h.b16 %v820
    %v1647 = vunpack.c.l.b16 %v821
    %v1648 = vunpack.c.l.b16 %v822
    %v1649 = vunpack.c.h.b16 %v822
    %v1650 = vunpack.c.l.b16 %v823
    %v1651 = vunpack.c.l.b16 %v824
    %v1652 = vunpack.c.h.b16 %v824
    %v1653 = vunpack.c.l.b16 %v825
    %v1654 = vunpack.c.l.b16 %v826
    %v1655 = vunpack.c.h.b16 %v826
    %v1656 = vunpack.c.l.b16 %v827
    %v1657 = vunpack.c.l.b16 %v828
    %v1658 = vunpack.c.h.b16 %v828
    %v1659 = vunpack.c.l.b16 %v829
    %v1660 = vunpack.c.l.b16 %v830
    %v1661 = vunpack.c.h.b16 %v830
    %v1662 = vunpack.c.l.b16 %v831
    %v1663 = vunpack.c.l.b16 %v832
    %v1664 = vunpack.c.h.b16 %v832
    %v1665 = vunpack.c.l.b16 %v833
    %v1666 = vunpack.c.l.b16 %v834
    %v1667 = vunpack.c.h.b16 %v834
    %v1668 = vunpack.c.l.b16 %v835
    %v1669 = vunpack.c.l.b16 %v836
    %v1670 = vunpack.c.h.b16 %v836
    %v1671 = vunpack.c.l.b16 %v837
    %v1672 = vunpack.c.l.b16 %v838
    %v1673 = vunpack.c.h.b16 %v838
    %v1674 = vunpack.c.l.b16 %v839
    %v1675 = vunpack.c.l.b16 %v840
    %v1676 = vunpack.c.h.b16 %v840
    %v1677 = vunpack.c.l.b16 %v841
    %v1678 = vunpack.c.l.b16 %v842
    %v1679 = vunpack.c.h.b16 %v842
    %v1680 = vunpack.c.l.b16 %v843
    %v1681 = vunpack.c.l.b16 %v844
    %v1682 = vunpack.c.h.b16 %v844
    %v1683 = vunpack.c.l.b16 %v845
    %v1684 = vunpack.c.l.b16 %v846
    %v1685 = vunpack.c.h.b16 %v846
    %v1686 = vunpack.c.l.b16 %v847
    %v1687 = vunpack.c.l.b16 %v848
    %v1688 = vunpack.c.h.b16 %v848
    %v1689 = vunpack.c.l.b16 %v849
    %v1690 = vunpack.c.l.b16 %v850
    %v1691 = vunpack.c.h.b16 %v850
    %v1692 = vunpack.c.l.b16 %v851
    %v1693 = vunpack.c.l.b16 %v852
    %v1694 = vunpack.c.h.b16 %v852
    %v1695 = vunpack.c.l.b16 %v853
    %v1696 = vunpack.c.l.b16 %v854
    %v1697 = vunpack.c.h.b16 %v854
    %v1698 = vunpack.c.l.b16 %v855
    %v1699 = vunpack.c.l.b16 %v856
    %v1700 = vunpack.c.h.b16 %v856
    %v1701 = vunpack.c.l.b16 %v857
    %v1702 = vunpack.c.l.b16 %v858
    %v1703 = vunpack.c.h.b16 %v858
    %v1704 = vunpack.c.l.b16 %v859
    %v1705 = vunpack.c.l.b16 %v860
    %v1706 = vunpack.c.h.b16 %v860
    %v1707 = vunpack.c.l.b16 %v861
    %v1708 = vunpack.c.l.b16 %v862
    %v1709 = vunpack.c.h.b16 %v862
    %v1710 = vunpack.c.l.b16 %v863
    %v1711 = vunpack.c.l.b16 %v864
    %v1712 = vunpack.c.h.b16 %v864
    %v1713 = vunpack.c.l.b16 %v865
    %v1714 = vunpack.c.l.b16 %v866
    %v1715 = vunpack.c.h.b16 %v866
    %v1716 = vunpack.c.l.b16 %v867
    %v1717 = vunpack.c.l.b16 %v868
    %v1718 = vunpack.c.h.b16 %v868
    %v1719 = vunpack.c.l.b16 %v869
    %v1720 = vunpack.c.l.b16 %v870
    %v1721 = vunpack.c.h.b16 %v870
    %v1722 = vunpack.c.l.b16 %v871
    %v1723 = vunpack.c.l.b16 %v872
    %v1724 = vunpack.c.h.b16 %v872
    %v1725 = vunpack.c.l.b16 %v873
    %v1726 = vunpack.c.l.b16 %v874
    %v1727 = vunpack.c.h.b16 %v874
    %v1728 = vunpack.c.l.b16 %v875
    %v1729 = vunpack.c.l.b16 %v876
    %v1730 = vunpack.c.h.b16 %v876
    %v1731 = vunpack.c.l.b16 %v877
    %v1732 = vunpack.c.l.b16 %v878
    %v1733 = vunpack.c.h.b16 %v878
    %v1734 = vunpack.c.l.b16 %v879
    %v1735 = vunpack.c.l.b16 %v880
    %v1736 = vunpack.c.h.b16 %v880
    %v1737 = vunpack.c.l.b16 %v881
    %v1738 = vunpack.c.l.b16 %v882
    %v1739 = vunpack.c.h.b16 %v882
    %v1740 = vunpack.c.l.b16 %v883
    %v1741 = vunpack.c.l.b16 %v884
    %v1742 = vunpack.c.h.b16 %v884
    %v1743 = vunpack.c.l.b16 %v885
    %v1744 = vunpack.c.l.b16 %v886
    %v1745 = vunpack.c.h.b16 %v886
    %v1746 = vunpack.c.l.b16 %v887
    %v1747 = vunpack.c.l.b16 %v888
    %v1748 = vunpack.c.h.b16 %v888
    %v1749 = vunpack.c.l.b16 %v889
    %v1750 = vunpack.c.l.b16 %v890
    %v1751 = vunpack.c.h.b16 %v890
    %v1752 = vunpack.c.l.b16 %v891
    %v1753 = vunpack.c.l.b16 %v892
    %v1754 = vunpack.c.h.b16 %v892
    %v1755 = vunpack.c.l.b16 %v893
    %v1756 = vunpack.c.l.b16 %v894
    %v1757 = vunpack.c.h.b16 %v894
    %v1758 = vunpack.c.l.b16 %v895
    %v1759 = vunpack.c.l.b16 %v896
    %v1760 = vunpack.c.h.b16 %v896
    %v1761 = vunpack.c.l.b16 %v897
    %v1762 = vunpack.c.l.b16 %v898
    %v1763 = vunpack.c.h.b16 %v898
    %v1764 = vunpack.c.l.b16 %v899
    %v1765 = vunpack.c.l.b16 %v900
    %v1766 = vunpack.c.h.b16 %v900
    %v1767 = vunpack.c.l.b16 %v901
    %v1768 = vunpack.c.l.b16 %v902
    %v1769 = vunpack.c.h.b16 %v902
    %v1770 = vunpack.c.l.b16 %v903
    %v1771 = vunpack.c.l.b16 %v904
    %v1772 = vunpack.c.h.b16 %v904
    %v1773 = vunpack.c.l.b16 %v905
    %v1774 = vunpack.c.l.b16 %v906
    %v1775 = vunpack.c.h.b16 %v906
    %v1776 = vunpack.c.l.b16 %v907
    %v1777 = vunpack.c.l.b16 %v908
    %v1778 = vunpack.c.h.b16 %v908
    %v1779 = vunpack.c.l.b16 %v909
    %v1780 = vunpack.c.l.b16 %v910
    %v1781 = vunpack.c.h.b16 %v910
    %v1782 = vunpack.c.l.b16 %v911
    %v1783 = vunpack.c.l.b16 %v912
    %v1784 = vunpack.c.h.b16 %v912
    %v1785 = vunpack.c.l.b16 %v913
    %v1786 = vunpack.c.l.b16 %v914
    %v1787 = vunpack.c.h.b16 %v914
    %v1788 = vunpack.c.l.b16 %v915
    %v1789 = vunpack.c.l.b16 %v916
    %v1790 = vunpack.c.h.b16 %v916
    %v1791 = vunpack.c.l.b16 %v917
    %v1792 = vunpack.c.l.b16 %v918
    %v1793 = vunpack.c.h.b16 %v918
    %v1794 = vunpack.c.l.b16 %v919
    %v1795 = vunpack.c.l.b16 %v920
    %v1796 = vunpack.c.h.b16 %v920
    %v1797 = vunpack.c.l.b16 %v921
    %v1798 = vunpack.c.l.b16 %v922
    %v1799 = vunpack.c.h.b16 %v922
    %v1800 = vunpack.c.l.b16 %v923
    %v1801 = vunpack.c.l.b16 %v924
    %v1802 = vunpack.c.h.b16 %v924
    %v1803 = vunpack.c.l.b16 %v925
    %v1804 = vunpack.c.l.b16 %v926
    %v1805 = vunpack.c.h.b16 %v926
    %v1806 = vunpack.c.l.b16 %v927
    %v1807 = vunpack.c.l.b16 %v928
    %v1808 = vunpack.c.h.b16 %v928
    %v1809 = vunpack.c.l.b16 %v929
    %v1810 = vunpack.c.l.b16 %v930
    %v1811 = vunpack.c.h.b16 %v930
    %v1812 = vunpack.c.l.b16 %v931
    %v1813 = vunpack.c.l.b16 %v932
    %v1814 = vunpack.c.h.b16 %v932
    %v1815 = vunpack.c.l.b16 %v933
    %v1816 = vunpack.c.l.b16 %v934
    %v1817 = vunpack.c.h.b16 %v934
    %v1818 = vunpack.c.l.b16 %v935
    %v1819 = vunpack.c.l.b16 %v936
    %v1820 = vunpack.c.h.b16 %v936
    %v1821 = vunpack.c.l.b16 %v937
    %v1822 = vunpack.c.l.b16 %v938
    %v1823 = vunpack.c.h.b16 %v938
    %v1824 = vunpack.c.l.b16 %v939
    %v1825 = vunpack.c.l.b16 %v940
    %v1826 = vunpack.c.h.b16 %v940
    %v1827 = vunpack.c.l.b16 %v941
    %v1828 = vunpack.c.l.b16 %v942
    %v1829 = vunpack.c.h.b16 %v942
    %v1830 = vunpack.c.l.b16 %v943
    %v1831 = vunpack.c.l.b16 %v944
    %v1832 = vunpack.c.h.b16 %v944
    %v1833 = vunpack.c.l.b16 %v945
    %v1834 = vunpack.c.l.b16 %v946
    %v1835 = vunpack.c.h.b16 %v946
    %v1836 = vunpack.c.l.b16 %v947
    %v1837 = vunpack.c.l.b16 %v948
    %v1838 = vunpack.c.h.b16 %v948
    %v1839 = vunpack.c.l.b16 %v949
    %v1840 = vunpack.c.l.b16 %v950
    %v1841 = vunpack.c.h.b16 %v950
    %v1842 = vunpack.c.l.b16 %v951
    %v1843 = vunpack.c.l.b16 %v952
    %v1844 = vunpack.c.h.b16 %v952
    %v1845 = vunpack.c.l.b16 %v953
    %v1846 = vunpack.c.l.b16 %v954
    %v1847 = vunpack.c.h.b16 %v954
    %v1848 = vunpack.c.l.b16 %v955
    %v1849 = vunpack.c.l.b16 %v956
    %v1850 = vunpack.c.h.b16 %v956
    %v1851 = vunpack.c.l.b16 %v957
    %v1852 = vunpack.c.l.b16 %v958
    %v1853 = vunpack.c.h.b16 %v958
    %v1854 = vunpack.c.l.b16 %v959
    %v1855 = vunpack.c.l.b16 %v960
    %v1856 = vunpack.c.h.b16 %v960
    %v1857 = vunpack.c.l.b16 %v961
    %v1858 = vunpack.c.l.b16 %v962
    %v1859 = vunpack.c.h.b16 %v962
    %v1860 = vunpack.c.l.b16 %v963
    %v1861 = vunpack.c.l.b16 %v964
    %v1862 = vunpack.c.h.b16 %v964
    %v1863 = vunpack.c.l.b16 %v965
    %v1864 = vunpack.c.l.b16 %v966
    %v1865 = vunpack.c.h.b16 %v966
    %v1866 = vunpack.c.l.b16 %v967
    %v1867 = vunpack.c.l.b16 %v968
    %v1868 = vunpack.c.h.b16 %v968
    %v1869 = vunpack.c.l.b16 %v969
    %v1870 = vunpack.c.l.b16 %v970
    %v1871 = vunpack.c.h.b16 %v970
    %v1872 = vunpack.c.l.b16 %v971
    %v1873 = vunpack.c.l.b16 %v972
    %v1874 = vunpack.c.h.b16 %v972
    %v1875 = vunpack.c.l.b16 %v973
    %v1876 = vunpack.c.l.b16 %v974
    %v1877 = vunpack.c.h.b16 %v974
    %v1878 = vunpack.c.l.b16 %v975
    %v1879 = vunpack.c.l.b16 %v976
    %v1880 = vunpack.c.h.b16 %v976
    %v1881 = vunpack.c.l.b16 %v977
    %v1882 = vunpack.c.l.b16 %v978
    %v1883 = vunpack.c.h.b16 %v978
    %v1884 = vunpack.c.l.b16 %v979
    %v1885 = vunpack.c.l.b16 %v980
    %v1886 = vunpack.c.h.b16 %v980
    %v1887 = vunpack.c.l.b16 %v981
    %v1888 = vunpack.c.l.b16 %v982
    %v1889 = vunpack.c.h.b16 %v982
    %v1890 = vunpack.c.l.b16 %v983
    %v1891 = vunpack.c.l.b16 %v984
    %v1892 = vunpack.c.h.b16 %v984
    %v1893 = vunpack.c.l.b16 %v985
    %v1894 = vunpack.c.l.b16 %v986
    %v1895 = vunpack.c.h.b16 %v986
    %v1896 = vunpack.c.l.b16 %v987
    %v1897 = vunpack.c.l.b16 %v988
    %v1898 = vunpack.c.h.b16 %v988
    %v1899 = vunpack.c.l.b16 %v989
    %v1900 = vunpack.c.l.b16 %v990
    %v1901 = vunpack.c.h.b16 %v990
    %v1902 = vunpack.c.l.b16 %v991
    %v1903 = vunpack.c.l.b16 %v992
    %v1904 = vunpack.c.h.b16 %v992
    %v1905 = vunpack.c.l.b16 %v993
    %v1906 = vunpack.c.l.b16 %v994
    %v1907 = vunpack.c.h.b16 %v994
    %v1908 = vunpack.c.l.b16 %v995
    %v1909 = vunpack.c.l.b16 %v996
    %v1910 = vunpack.c.h.b16 %v996
    %v1911 = vunpack.c.l.b16 %v997
    %v1912 = vunpack.c.l.b16 %v998
    %v1913 = vunpack.c.h.b16 %v998
    %v1914 = vunpack.c.l.b16 %v999
    %v1915 = vunpack.c.l.b16 %v1000
    %v1916 = vunpack.c.h.b16 %v1000
    %v1917 = vunpack.c.l.b16 %v1001
    %v1918 = vunpack.c.l.b16 %v1002
    %v1919 = vunpack.c.h.b16 %v1002
    %v1920 = vunpack.c.l.b16 %v1003
    %v1921 = vunpack.c.l.b16 %v1004
    %v1922 = vunpack.c.h.b16 %v1004
    %v1923 = vunpack.c.l.b16 %v1005
    %v1924 = vunpack.c.l.b16 %v1006
    %v1925 = vunpack.c.h.b16 %v1006
    %v1926 = vunpack.c.l.b16 %v1007
    %v1927 = vunpack.c.l.b16 %v1008
    %v1928 = vunpack.c.h.b16 %v1008
    %v1929 = vunpack.c.l.b16 %v1009
    %v1930 = vunpack.c.l.b16 %v1010
    %v1931 = vunpack.c.h.b16 %v1010
    %v1932 = vunpack.c.l.b16 %v1011
    %v1933 = vunpack.c.l.b16 %v1012
    %v1934 = vunpack.c.h.b16 %v1012
    %v1935 = vunpack.c.l.b16 %v1013
    %v1936 = vunpack.c.l.b16 %v1014
    %v1937 = vunpack.c.h.b16 %v1014
    %v1938 = vunpack.c.l.b16 %v1015
    %v1939 = vunpack.c.l.b16 %v1016
    %v1940 = vunpack.c.h.b16 %v1016
    %v1941 = vunpack.c.l.b16 %v1017
    %v1942 = vunpack.c.l.b16 %v1018
    %v1943 = vunpack.c.h.b16 %v1018
    %v1944 = vunpack.c.l.b16 %v1019
    %v1945 = vunpack.c.l.b16 %v1020
    %v1946 = vunpack.c.h.b16 %v1020
    %v1947 = vunpack.c.l.b16 %v1021
    %v1948 = vunpack.c.l.b16 %v1022
    %v1949 = vunpack.c.h.b16 %v1022
    %v1950 = vunpack.c.l.b16 %v1023
    %v1951 = vunpack.c.l.b16 %v1024
    %v1952 = vunpack.c.h.b16 %v1024
    %v1953 = vunpack.c.l.b16 %v1025
    %v1954 = vunpack.c.l.b16 %v1026
    %v1955 = vunpack.c.h.b16 %v1026
    %v1956 = vunpack.c.l.b16 %v1027
    %v1957 = vunpack.c.l.b16 %v1028
    %v1958 = vunpack.c.h.b16 %v1028
    %v1959 = vunpack.c.l.b16 %v1029
    %v1960 = vunpack.c.l.b16 %v1030
    %v1961 = vunpack.c.h.b16 %v1030
    %v1962 = vunpack.c.l.b16 %v1031
    %v1963 = vunpack.c.l.b16 %v1032
    %v1964 = vunpack.c.h.b16 %v1032
    %v1965 = vunpack.c.l.b16 %v1033
    %v1966 = vunpack.c.l.b16 %v1034
    %v1967 = vunpack.c.h.b16 %v1034
    %v1968 = vunpack.c.l.b16 %v1035
    %v1969 = vunpack.c.l.b16 %v1036
    %v1970 = vunpack.c.h.b16 %v1036
    %v1971 = vunpack.c.l.b16 %v1037
    %v1972 = vunpack.c.l.b16 %v1038
    %v1973 = vunpack.c.h.b16 %v1038
    %v1974 = vunpack.c.l.b16 %v1039
    %v1975 = vunpack.c.l.b16 %v1040
    %v1976 = vunpack.c.h.b16 %v1040
    %v1977 = vunpack.c.l.b16 %v1041
    %v1978 = vunpack.c.l.b16 %v1042
    %v1979 = vunpack.c.h.b16 %v1042
    %v1980 = vunpack.c.l.b16 %v1043
    %v1981 = vunpack.c.l.b16 %v1044
    %v1982 = vunpack.c.h.b16 %v1044
    %v1983 = vunpack.c.l.b16 %v1045
    %v1984 = vunpack.c.l.b16 %v1046
    %v1985 = vunpack.c.h.b16 %v1046
    %v1986 = vunpack.c.l.b16 %v1047
    %v1987 = vunpack.c.l.b16 %v1048
    %v1988 = vunpack.c.h.b16 %v1048
    %v1989 = vunpack.c.l.b16 %v1049
    %v1990 = vunpack.c.l.b16 %v1050
    %v1991 = vunpack.c.h.b16 %v1050
    %v1992 = vunpack.c.l.b16 %v1051
    %v1993 = vunpack.c.l.b16 %v1052
    %v1994 = vunpack.c.h.b16 %v1052
    %v1995 = vunpack.c.l.b16 %v1053
    %v1996 = vunpack.c.l.b16 %v1054
    %v1997 = vunpack.c.h.b16 %v1054
    %v1998 = vunpack.c.l.b16 %v1055
    %v1999 = vunpack.c.l.b16 %v1056
    %v2000 = vunpack.c.h.b16 %v1056
    %v2001 = vunpack.c.l.b16 %v1057
    %v2002 = vunpack.c.l.b16 %v1058
    %v2003 = vunpack.c.h.b16 %v1058
    %v2004 = vunpack.c.l.b16 %v1059
    %v2005 = vunpack.c.l.b16 %v1060
    %v2006 = vunpack.c.h.b16 %v1060
    %v2007 = vunpack.c.l.b16 %v1061
    %v2008 = vunpack.c.l.b16 %v1062
    %v2009 = vunpack.c.h.b16 %v1062
    %v2010 = vunpack.c.l.b16 %v1063
    %v2011 = vunpack.c.l.b16 %v1064
    %v2012 = vunpack.c.h.b16 %v1064
    %v2013 = vunpack.c.l.b16 %v1065
    %v2014 = vunpack.c.l.b16 %v1066
    %v2015 = vunpack.c.h.b16 %v1066
    %v2016 = vunpack.c.l.b16 %v1067
    %v2017 = vunpack.c.l.b16 %v1068
    %v2018 = vunpack.c.h.b16 %v1068
    %v2019 = vunpack.c.l.b16 %v1069
    %v2020 = vunpack.c.l.b16 %v1070
    %v2021 = vunpack.c.h.b16 %v1070
    %v2022 = vunpack.c.l.b16 %v1071
    %v2023 = vunpack.c.l.b16 %v1072
    %v2024 = vunpack.c.h.b16 %v1072
    %v2025 = vunpack.c.l.b16 %v1073
    %v2026 = vunpack.c.l.b16 %v1074
    %v2027 = vunpack.c.h.b16 %v1074
    %v2028 = vunpack.c.l.b16 %v1075
    %v2029 = vunpack.c.l.b16 %v1076
    %v2030 = vunpack.c.h.b16 %v1076
    %v2031 = vunpack.c.l.b16 %v1077
    %v2032 = vunpack.c.l.b16 %v1078
    %v2033 = vunpack.c.h.b16 %v1078
    %v2034 = vunpack.c.l.b16 %v1079
    %v2035 = vunpack.c.l.b16 %v1080
    %v2036 = vunpack.c.h.b16 %v1080
    %v2037 = vunpack.c.l.b16 %v1081
    %v2038 = vunpack.c.l.b16 %v1082
    %v2039 = vunpack.c.h.b16 %v1082
    %v2040 = vunpack.c.l.b16 %v1083
    %v2041 = vunpack.c.l.b16 %v1084
    %v2042 = vunpack.c.h.b16 %v1084
    %v2043 = vunpack.c.l.b16 %v1085
    %v2044 = vunpack.c.l.b16 %v1086
    %v2045 = vunpack.c.h.b16 %v1086
    %v2046 = vunpack.c.l.b16 %v1087
    %v2047 = vunpack.c.l.b16 %v1088
    %v2048 = vunpack.c.h.b16 %v1088
    %v2049 = vunpack.c.l.b16 %v1089
    %v2050 = vunpack.c.l.b16 %v1090
    %v2051 = vunpack.c.h.b16 %v1090
    %v2052 = vunpack.c.l.b16 %v1091
    %v2053 = vunpack.c.l.b16 %v1092
    %v2054 = vunpack.c.h.b16 %v1092
    %v2055 = vunpack.c.l.b16 %v1093
    %v2056 = vunpack.c.l.b16 %v1094
    %v2057 = vunpack.c.h.b16 %v1094
    %v2058 = vunpack.c.l.b16 %v1095
    %v2059 = vunpack.c.l.b16 %v1096
    %v2060 = vunpack.c.h.b16 %v1096
    %v2061 = vunpack.c.l.b16 %v1097
    %v2062 = vunpack.c.l.b16 %v1098
    %v2063 = vunpack.c.h.b16 %v1098
    %v2064 = vunpack.c.l.b16 %v1099
    %v2065 = vunpack.c.l.b16 %v1100
    %v2066 = vunpack.c.h.b16 %v1100
    %v2067 = vunpack.c.l.b16 %v1101
    %v2068 = vunpack.c.l.b16 %v1102
    %v2069 = vunpack.c.h.b16 %v1102
    %v2070 = vunpack.c.l.b16 %v1103
    %v2071 = vunpack.c.l.b16 %v1104
    %v2072 = vunpack.c.h.b16 %v1104
    %v2073 = vunpack.c.l.b16 %v1105
    %v2074 = vunpack.c.l.b16 %v1106
    %v2075 = vunpack.c.h.b16 %v1106
    %v2076 = vunpack.c.l.b16 %v1107
    %v2077 = vunpack.c.l.b16 %v1108
    %v2078 = vunpack.c.h.b16 %v1108
    %v2079 = vunpack.c.l.b16 %v1109
    %v2080 = vunpack.c.l.b16 %v1110
    %v2081 = vunpack.c.h.b16 %v1110
    %v2082 = vunpack.c.l.b16 %v1111
    %v2083 = vunpack.c.l.b16 %v1112
    %v2084 = vunpack.c.h.b16 %v1112
    %v2085 = vunpack.c.l.b16 %v1113
    %v2086 = vpack.c.b16 %v1513, %v1510
    %v2087 = vpack.c.b16 %v1514, %v1511
    %v2088 = vpack.c.b16 %v1515, %v1512
    %v2089 = vpack.c.b16 %v1519, %v1516
    %v2090 = vpack.c.b16 %v1520, %v1517
    %v2091 = vpack.c.b16 %v1521, %v1518
    %v2092 = vpack.c.b16 %v1525, %v1522
    %v2093 = vpack.c.b16 %v1526, %v1523
    %v2094 = vpack.c.b16 %v1527, %v1524
    %v2095 = vpack.c.b16 %v1531, %v1528
    %v2096 = vpack.c.b16 %v1532, %v1529
    %v2097 = vpack.c.b16 %v1533, %v1530
    %v2098 = vpack.c.b16 %v1537, %v1534
    %v2099 = vpack.c.b16 %v1538, %v1535
    %v2100 = vpack.c.b16 %v1539, %v1536
    %v2101 = vpack.c.b16 %v1543, %v1540
    %v2102 = vpack.c.b16 %v1544, %v1541
    %v2103 = vpack.c.b16 %v1545, %v1542
    %v2104 = vpack.c.b16 %v1549, %v1546
    %v2105 = vpack.c.b16 %v1550, %v1547
    %v2106 = vpack.c.b16 %v1551, %v1548
    %v2107 = vpack.c.b16 %v1555, %v1552
    %v2108 = vpack.c.b16 %v1556, %v1553
    %v2109 = vpack.c.b16 %v1557, %v1554
    %v2110 = vpack.c.b16 %v1561, %v1558
    %v2111 = vpack.c.b16 %v1562, %v1559
    %v2112 = vpack.c.b16 %v1563, %v1560
    %v2113 = vpack.c.b16 %v1567, %v1564
    %v2114 = vpack.c.b16 %v1568, %v1565
    %v2115 = vpack.c.b16 %v1569, %v1566
    %v2116 = vpack.c.b16 %v1573, %v1570
    %v2117 = vpack.c.b16 %v1574, %v1571
    %v2118 = vpack.c.b16 %v1575, %v1572
    %v2119 = vpack.c.b16 %v1579, %v1576
    %v2120 = vpack.c.b16 %v1580, %v1577
    %v2121 = vpack.c.b16 %v1581, %v1578
    %v2122 = vpack.c.b16 %v1585, %v1582
    %v2123 = vpack.c.b16 %v1586, %v1583
    %v2124 = vpack.c.b16 %v1587, %v1584
    %v2125 = vpack.c.b16 %v1591, %v1588
    %v2126 = vpack.c.b16 %v1592, %v1589
    %v2127 = vpack.c.b16 %v1593, %v1590
    %v2128 = vpack.c.b16 %v1597, %v1594
    %v2129 = vpack.c.b16 %v1598, %v1595
    %v2130 = vpack.c.b16 %v1599, %v1596
    %v2131 = vpack.c.b16 %v1603, %v1600
    %v2132 = vpack.c.b16 %v1604, %v1601
    %v2133 = vpack.c.b16 %v1605, %v1602
    %v2134 = vpack.c.b16 %v1609, %v1606
    %v2135 = vpack.c.b16 %v1610, %v1607
    %v2136 = vpack.c.b16 %v1611, %v1608
    %v2137 = vpack.c.b16 %v1615, %v1612
    %v2138 = vpack.c.b16 %v1616, %v1613
    %v2139 = vpack.c.b16 %v1617, %v1614
    %v2140 = vpack.c.b16 %v1621, %v1618
    %v2141 = vpack.c.b16 %v1622, %v1619
    %v2142 = vpack.c.b16 %v1623, %v1620
    %v2143 = vpack.c.b16 %v1627, %v1624
    %v2144 = vpack.c.b16 %v1628, %v1625
    %v2145 = vpack.c.b16 %v1629, %v1626
    %v2146 = vpack.c.b16 %v1633, %v1630
    %v2147 = vpack.c.b16 %v1634, %v1631
    %v2148 = vpack.c.b16 %v1635, %v1632
    %v2149 = vpack.c.b16 %v1639, %v1636
    %v2150 = vpack.c.b16 %v1640, %v1637
    %v2151 = vpack.c.b16 %v1641, %v1638
    %v2152 = vpack.c.b16 %v1645, %v1642
    %v2153 = vpack.c.b16 %v1646, %v1643
    %v2154 = vpack.c.b16 %v1647, %v1644
    %v2155 = vpack.c.b16 %v1651, %v1648
    %v2156 = vpack.c.b16 %v1652, %v1649
    %v2157 = vpack.c.b16 %v1653, %v1650
    %v2158 = vpack.c.b16 %v1657, %v1654
    %v2159 = vpack.c.b16 %v1658, %v1655
    %v2160 = vpack.c.b16 %v1659, %v1656
    %v2161 = vpack.c.b16 %v1663, %v1660
    %v2162 = vpack.c.b16 %v1664, %v1661
    %v2163 = vpack.c.b16 %v1665, %v1662
    %v2164 = vpack.c.b16 %v1669, %v1666
    %v2165 = vpack.c.b16 %v1670, %v1667
    %v2166 = vpack.c.b16 %v1671, %v1668
    %v2167 = vpack.c.b16 %v1675, %v1672
    %v2168 = vpack.c.b16 %v1676, %v1673
    %v2169 = vpack.c.b16 %v1677, %v1674
    %v2170 = vpack.c.b16 %v1681, %v1678
    %v2171 = vpack.c.b16 %v1682, %v1679
    %v2172 = vpack.c.b16 %v1683, %v1680
    %v2173 = vpack.c.b16 %v1687, %v1684
    %v2174 = vpack.c.b16 %v1688, %v1685
    %v2175 = vpack.c.b16 %v1689, %v1686
    %v2176 = vpack.c.b16 %v1693, %v1690
    %v2177 = vpack.c.b16 %v1694, %v1691
    %v2178 = vpack.c.b16 %v1695, %v1692
    %v2179 = vpack.c.b16 %v1699, %v1696
    %v2180 = vpack.c.b16 %v1700, %v1697
    %v2181 = vpack.c.b16 %v1701, %v1698
    %v2182 = vpack.c.b16 %v1705, %v1702
    %v2183 = vpack.c.b16 %v1706, %v1703
    %v2184 = vpack.c.b16 %v1707, %v1704
    %v2185 = vpack.c.b16 %v1711, %v1708
    %v2186 = vpack.c.b16 %v1712, %v1709
    %v2187 = vpack.c.b16 %v1713, %v1710
    %v2188 = vpack.c.b16 %v1717, %v1714
    %v2189 = vpack.c.b16 %v1718, %v1715
    %v2190 = vpack.c.b16 %v1719, %v1716
    %v2191 = vpack.c.b16 %v1723, %v1720
    %v2192 = vpack.c.b16 %v1724, %v1721
    %v2193 = vpack.c.b16 %v1725, %v1722
    %v2194 = vpack.c.b16 %v1729, %v1726
    %v2195 = vpack.c.b16 %v1730, %v1727
    %v2196 = vpack.c.b16 %v1731, %v1728
    %v2197 = vpack.c.b16 %v1735, %v1732
    %v2198 = vpack.c.b16 %v1736, %v1733
    %v2199 = vpack.c.b16 %v1737, %v1734
    %v2200 = vpack.c.b16 %v1741, %v1738
    %v2201 = vpack.c.b16 %v1742, %v1739
    %v2202 = vpack.c.b16 %v1743, %v1740
    %v2203 = vpack.c.b16 %v1747, %v1744
    %v2204 = vpack.c.b16 %v1748, %v1745
    %v2205 = vpack.c.b16 %v1749, %v1746
    %v2206 = vpack.c.b16 %v1753, %v1750
    %v2207 = vpack.c.b16 %v1754, %v1751
    %v2208 = vpack.c.b16 %v1755, %v1752
    %v2209 = vpack.c.b16 %v1759, %v1756
    %v2210 = vpack.c.b16 %v1760, %v1757
    %v2211 = vpack.c.b16 %v1761, %v1758
    %v2212 = vpack.c.b16 %v1765, %v1762
    %v2213 = vpack.c.b16 %v1766, %v1763
    %v2214 = vpack.c.b16 %v1767, %v1764
    %v2215 = vpack.c.b16 %v1771, %v1768
    %v2216 = vpack.c.b16 %v1772, %v1769
    %v2217 = vpack.c.b16 %v1773, %v1770
    %v2218 = vpack.c.b16 %v1777, %v1774
    %v2219 = vpack.c.b16 %v1778, %v1775
    %v2220 = vpack.c.b16 %v1779, %v1776
    %v2221 = vpack.c.b16 %v1783, %v1780
    %v2222 = vpack.c.b16 %v1784, %v1781
    %v2223 = vpack.c.b16 %v1785, %v1782
    %v2224 = vpack.c.b16 %v1789, %v1786
    %v2225 = vpack.c.b16 %v1790, %v1787
    %v2226 = vpack.c.b16 %v1791, %v1788
    %v2227 = vpack.c.b16 %v1795, %v1792
    %v2228 = vpack.c.b16 %v1796, %v1793
    %v2229 = vpack.c.b16 %v1797, %v1794
    %v2230 = vpack.c.b16 %v1801, %v1798
    %v2231 = vpack.c.b16 %v1802, %v1799
    %v2232 = vpack.c.b16 %v1803, %v1800
    %v2233 = vpack.c.b16 %v1807, %v1804
    %v2234 = vpack.c.b16 %v1808, %v1805
    %v2235 = vpack.c.b16 %v1809, %v1806
    %v2236 = vpack.c.b16 %v1813, %v1810
    %v2237 = vpack.c.b16 %v1814, %v1811
    %v2238 = vpack.c.b16 %v1815, %v1812
    %v2239 = vpack.c.b16 %v1819, %v1816
    %v2240 = vpack.c.b16 %v1820, %v1817
    %v2241 = vpack.c.b16 %v1821, %v1818
    %v2242 = vpack.c.b16 %v1825, %v1822
    %v2243 = vpack.c.b16 %v1826, %v1823
    %v2244 = vpack.c.b16 %v1827, %v1824
    %v2245 = vpack.c.b16 %v1831, %v1828
    %v2246 = vpack.c.b16 %v1832, %v1829
    %v2247 = vpack.c.b16 %v1833, %v1830
    %v2248 = vpack.c.b16 %v1837, %v1834
    %v2249 = vpack.c.b16 %v1838, %v1835
    %v2250 = vpack.c.b16 %v1839, %v1836
    %v2251 = vpack.c.b16 %v1843, %v1840
    %v2252 = vpack.c.b16 %v1844, %v1841
    %v2253 = vpack.c.b16 %v1845, %v1842
    %v2254 = vpack.c.b16 %v1849, %v1846
    %v2255 = vpack.c.b16 %v1850, %v1847
    %v2256 = vpack.c.b16 %v1851, %v1848
    %v2257 = vpack.c.b16 %v1855, %v1852
    %v2258 = vpack.c.b16 %v1856, %v1853
    %v2259 = vpack.c.b16 %v1857, %v1854
    %v2260 = vpack.c.b16 %v1861, %v1858
    %v2261 = vpack.c.b16 %v1862, %v1859
    %v2262 = vpack.c.b16 %v1863, %v1860
    %v2263 = vpack.c.b16 %v1867, %v1864
    %v2264 = vpack.c.b16 %v1868, %v1865
    %v2265 = vpack.c.b16 %v1869, %v1866
    %v2266 = vpack.c.b16 %v1873, %v1870
    %v2267 = vpack.c.b16 %v1874, %v1871
    %v2268 = vpack.c.b16 %v1875, %v1872
    %v2269 = vpack.c.b16 %v1879, %v1876
    %v2270 = vpack.c.b16 %v1880, %v1877
    %v2271 = vpack.c.b16 %v1881, %v1878
    %v2272 = vpack.c.b16 %v1885, %v1882
    %v2273 = vpack.c.b16 %v1886, %v1883
    %v2274 = vpack.c.b16 %v1887, %v1884
    %v2275 = vpack.c.b16 %v1891, %v1888
    %v2276 = vpack.c.b16 %v1892, %v1889
    %v2277 = vpack.c.b16 %v1893, %v1890
    %v2278 = vpack.c.b16 %v1897, %v1894
    %v2279 = vpack.c.b16 %v1898, %v1895
    %v2280 = vpack.c.b16 %v1899, %v1896
    %v2281 = vpack.c.b16 %v1903, %v1900
    %v2282 = vpack.c.b16 %v1904, %v1901
    %v2283 = vpack.c.b16 %v1905, %v1902
    %v2284 = vpack.c.b16 %v1909, %v1906
    %v2285 = vpack.c.b16 %v1910, %v1907
    %v2286 = vpack.c.b16 %v1911, %v1908
    %v2287 = vpack.c.b16 %v1915, %v1912
    %v2288 = vpack.c.b16 %v1916, %v1913
    %v2289 = vpack.c.b16 %v1917, %v1914
    %v2290 = vpack.c.b16 %v1921, %v1918
    %v2291 = vpack.c.b16 %v1922, %v1919
    %v2292 = vpack.c.b16 %v1923, %v1920
    %v2293 = vpack.c.b16 %v1927, %v1924
    %v2294 = vpack.c.b16 %v1928, %v1925
    %v2295 = vpack.c.b16 %v1929, %v1926
    %v2296 = vpack.c.b16 %v1933, %v1930
    %v2297 = vpack.c.b16 %v1934, %v1931
    %v2298 = vpack.c.b16 %v1935, %v1932
    %v2299 = vpack.c.b16 %v1939, %v1936
    %v2300 = vpack.c.b16 %v1940, %v1937
    %v2301 = vpack.c.b16 %v1941, %v1938
    %v2302 = vpack.c.b16 %v1945, %v1942
    %v2303 = vpack.c.b16 %v1946, %v1943
    %v2304 = vpack.c.b16 %v1947, %v1944
    %v2305 = vpack.c.b16 %v1951, %v1948
    %v2306 = vpack.c.b16 %v1952, %v1949
    %v2307 = vpack.c.b16 %v1953, %v1950
    %v2308 = vpack.c.b16 %v1957, %v1954
    %v2309 = vpack.c.b16 %v1958, %v1955
    %v2310 = vpack.c.b16 %v1959, %v1956
    %v2311 = vpack.c.b16 %v1963, %v1960
    %v2312 = vpack.c.b16 %v1964, %v1961
    %v2313 = vpack.c.b16 %v1965, %v1962
    %v2314 = vpack.c.b16 %v1969, %v1966
    %v2315 = vpack.c.b16 %v1970, %v1967
    %v2316 = vpack.c.b16 %v1971, %v1968
    %v2317 = vpack.c.b16 %v1975, %v1972
    %v2318 = vpack.c.b16 %v1976, %v1973
    %v2319 = vpack.c.b16 %v1977, %v1974
    %v2320 = vpack.c.b16 %v1981, %v1978
    %v2321 = vpack.c.b16 %v1982, %v1979
    %v2322 = vpack.c.b16 %v1983, %v1980
    %v2323 = vpack.c.b16 %v1987, %v1984
    %v2324 = vpack.c.b16 %v1988, %v1985
    %v2325 = vpack.c.b16 %v1989, %v1986
    %v2326 = vpack.c.b16 %v1993, %v1990
    %v2327 = vpack.c.b16 %v1994, %v1991
    %v2328 = vpack.c.b16 %v1995, %v1992
    %v2329 = vpack.c.b16 %v1999, %v1996
    %v2330 = vpack.c.b16 %v2000, %v1997
    %v2331 = vpack.c.b16 %v2001, %v1998
    %v2332 = vpack.c.b16 %v2005, %v2002
    %v2333 = vpack.c.b16 %v2006, %v2003
    %v2334 = vpack.c.b16 %v2007, %v2004
    %v2335 = vpack.c.b16 %v2011, %v2008
    %v2336 = vpack.c.b16 %v2012, %v2009
    %v2337 = vpack.c.b16 %v2013, %v2010
    %v2338 = vpack.c.b16 %v2017, %v2014
    %v2339 = vpack.c.b16 %v2018, %v2015
    %v2340 = vpack.c.b16 %v2019, %v2016
    %v2341 = vpack.c.b16 %v2023, %v2020
    %v2342 = vpack.c.b16 %v2024, %v2021
    %v2343 = vpack.c.b16 %v2025, %v2022
    %v2344 = vpack.c.b16 %v2029, %v2026
    %v2345 = vpack.c.b16 %v2030, %v2027
    %v2346 = vpack.c.b16 %v2031, %v2028
    %v2347 = vpack.c.b16 %v2035, %v2032
    %v2348 = vpack.c.b16 %v2036, %v2033
    %v2349 = vpack.c.b16 %v2037, %v2034
    %v2350 = vpack.c.b16 %v2041, %v2038
    %v2351 = vpack.c.b16 %v2042, %v2039
    %v2352 = vpack.c.b16 %v2043, %v2040
    %v2353 = vpack.c.b16 %v2047, %v2044
    %v2354 = vpack.c.b16 %v2048, %v2045
    %v2355 = vpack.c.b16 %v2049, %v2046
    %v2356 = vpack.c.b16 %v2053, %v2050
    %v2357 = vpack.c.b16 %v2054, %v2051
    %v2358 = vpack.c.b16 %v2055, %v2052
    %v2359 = vpack.c.b16 %v2059, %v2056
    %v2360 = vpack.c.b16 %v2060, %v2057
    %v2361 = vpack.c.b16 %v2061, %v2058
    %v2362 = vpack.c.b16 %v2065, %v2062
    %v2363 = vpack.c.b16 %v2066, %v2063
    %v2364 = vpack.c.b16 %v2067, %v2064
    %v2365 = vpack.c.b16 %v2071, %v2068
    %v2366 = vpack.c.b16 %v2072, %v2069
    %v2367 = vpack.c.b16 %v2073, %v2070
    %v2368 = vpack.c.b16 %v2077, %v2074
    %v2369 = vpack.c.b16 %v2078, %v2075
    %v2370 = vpack.c.b16 %v2079, %v2076
    %v2371 = vpack.c.b16 %v2083, %v2080
    %v2372 = vpack.c.b16 %v2084, %v2081
    %v2373 = vpack.c.b16 %v2085, %v2082
    %2662 = vmatprep.subr.bf16.mxu0 %v2087
    %2663 = vmatpush1.bf16.msra.mxu0 %v2086
    %2664 = vmatprep.subr.bf16.mxu0 %v2090
    %2665 = vmatpush1.bf16.msra.mxu0 %v2089
    %2666 = vmatprep.subr.bf16.mxu0 %v2093
    %2667 = vmatpush1.bf16.msra.mxu0 %v2092
    %2668 = vmatprep.subr.bf16.mxu0 %v2096
    %2669 = vmatpush1.bf16.msra.mxu0 %v2095
    %2670 = vmatprep.subr.bf16.mxu0 %v2099
    %2671 = vmatpush1.bf16.msra.mxu0 %v2098
    %2672 = vmatprep.subr.bf16.mxu0 %v2102
    %2673 = vmatpush1.bf16.msra.mxu0 %v2101
    %2674 = vmatprep.subr.bf16.mxu0 %v2105
    %2675 = vmatpush1.bf16.msra.mxu0 %v2104
    %2676 = vmatprep.subr.bf16.mxu0 %v2108
    %2677 = vmatpush1.bf16.msra.mxu0 %v2107
    %2678 = vmatprep.subr.bf16.mxu0 %v2111
    %2679 = vmatpush1.bf16.msra.mxu0 %v2110
    %2680 = vmatprep.subr.bf16.mxu0 %v2114
    %2681 = vmatpush1.bf16.msra.mxu0 %v2113
    %2682 = vmatprep.subr.bf16.mxu0 %v2117
    %2683 = vmatpush1.bf16.msra.mxu0 %v2116
    %2684 = vmatprep.subr.bf16.mxu0 %v2120
    %2685 = vmatpush1.bf16.msra.mxu0 %v2119
    %2686 = vmatprep.subr.bf16.mxu0 %v2123
    %2687 = vmatpush1.bf16.msra.mxu0 %v2122
    %2688 = vmatprep.subr.bf16.mxu0 %v2126
    %2689 = vmatpush1.bf16.msra.mxu0 %v2125
    %2690 = vmatprep.subr.bf16.mxu0 %v2129
    %2691 = vmatpush1.bf16.msra.mxu0 %v2128
    %2692 = vmatprep.subr.bf16.mxu0 %v2132
    %2693 = vmatpush1.bf16.msra.mxu0 %v2131
    %2694 = vmatprep.mubr.bf16.mxu0 %v707
    %2695 = vmatmul.mubr.bf16.gmra.mrb[0].mxu0 %v706
    %v2696 = vpop.f32.mrb[0].mxu0
    %v2697 = vadd.f32 %v1114, %v2696
    %v2698 = vpop.f32.mrb[0].mxu0
    %v2699 = vadd.f32 %v1115, %v2698
    %v2700 = vpop.f32.mrb[0].mxu0
    %v2701 = vadd.f32 %v1117, %v2700
    %v2702 = vpop.f32.mrb[0].mxu0
    %v2703 = vadd.f32 %v1118, %v2702
    %2704 = vmatprep.mubr.bf16.mxu0 %v719
    %2705 = vmatmul.mubr.bf16.gmra.mrb[0].mxu0 %v718
    %v2706 = vpop.f32.mrb[0].mxu0
    %v2707 = vadd.f32 %v1120, %v2706
    %v2708 = vpop.f32.mrb[0].mxu0
    %v2709 = vadd.f32 %v1121, %v2708
    %v2710 = vpop.f32.mrb[0].mxu0
    %v2711 = vadd.f32 %v1123, %v2710
    %v2712 = vpop.f32.mrb[0].mxu0
    %v2713 = vadd.f32 %v1124, %v2712
    %2714 = vdwg.mxu0
    %2715 = vmatprep.subr.bf16.mxu0 %v2135
    %2716 = vmatpush1.bf16.msra.mxu0 %v2134
    %2717 = vmatprep.subr.bf16.mxu0 %v2138
    %2718 = vmatpush1.bf16.msra.mxu0 %v2137
    %2719 = vmatprep.subr.bf16.mxu0 %v2141
    %2720 = vmatpush1.bf16.msra.mxu0 %v2140
    %2721 = vmatprep.subr.bf16.mxu0 %v2144
    %2722 = vmatpush1.bf16.msra.mxu0 %v2143
    %2723 = vmatprep.subr.bf16.mxu0 %v2147
    %2724 = vmatpush1.bf16.msra.mxu0 %v2146
    %2725 = vmatprep.subr.bf16.mxu0 %v2150
    %2726 = vmatpush1.bf16.msra.mxu0 %v2149
    %2727 = vmatprep.subr.bf16.mxu0 %v2153
    %2728 = vmatpush1.bf16.msra.mxu0 %v2152
    %2729 = vmatprep.subr.bf16.mxu0 %v2156
    %2730 = vmatpush1.bf16.msra.mxu0 %v2155
    %2731 = vmatprep.subr.bf16.mxu0 %v2159
    %2732 = vmatpush1.bf16.msra.mxu0 %v2158
    %2733 = vmatprep.subr.bf16.mxu0 %v2162
    %2734 = vmatpush1.bf16.msra.mxu0 %v2161
    %2735 = vmatprep.subr.bf16.mxu0 %v2165
    %2736 = vmatpush1.bf16.msra.mxu0 %v2164
    %2737 = vmatprep.subr.bf16.mxu0 %v2168
    %2738 = vmatpush1.bf16.msra.mxu0 %v2167
    %2739 = vmatprep.subr.bf16.mxu0 %v2171
    %2740 = vmatpush1.bf16.msra.mxu0 %v2170
    %2741 = vmatprep.subr.bf16.mxu0 %v2174
    %2742 = vmatpush1.bf16.msra.mxu0 %v2173
    %2743 = vmatprep.subr.bf16.mxu0 %v2177
    %2744 = vmatpush1.bf16.msra.mxu0 %v2176
    %2745 = vmatprep.subr.bf16.mxu0 %v2180
    %2746 = vmatpush1.bf16.msra.mxu0 %v2179
    %2747 = vmatprep.mubr.bf16.mxu0 %v709
    %2748 = vmatmul.mubr.bf16.gmra.mrb[0].mxu0 %v708
    %v2749 = vpop.f32.mrb[0].mxu0
    %v2750 = vadd.f32 %v2697, %v2749
    %v2751 = vpop.f32.mrb[0].mxu0
    %v2752 = vadd.f32 %v2699, %v2751
    %v2753 = vpop.f32.mrb[0].mxu0
    %v2754 = vadd.f32 %v2701, %v2753
    %v2755 = vpop.f32.mrb[0].mxu0
    %v2756 = vadd.f32 %v2703, %v2755
    %2757 = vmatprep.mubr.bf16.mxu0 %v721
    %2758 = vmatmul.mubr.bf16.gmra.mrb[0].mxu0 %v720
    %v2759 = vpop.f32.mrb[0].mxu0
    %v2760 = vadd.f32 %v2707, %v2759
    %v2761 = vpop.f32.mrb[0].mxu0
    %v2762 = vadd.f32 %v2709, %v2761
    %v2763 = vpop.f32.mrb[0].mxu0
    %v2764 = vadd.f32 %v2711, %v2763
    %v2765 = vpop.f32.mrb[0].mxu0
    %v2766 = vadd.f32 %v2713, %v2765
    %2767 = vdwg.mxu0
    %2768 = vmatprep.subr.bf16.mxu0 %v2183
    %2769 = vmatpush1.bf16.msra.mxu0 %v2182
    %2770 = vmatprep.subr.bf16.mxu0 %v2186
    %2771 = vmatpush1.bf16.msra.mxu0 %v2185
    %2772 = vmatprep.subr.bf16.mxu0 %v2189
    %2773 = vmatpush1.bf16.msra.mxu0 %v2188
    %2774 = vmatprep.subr.bf16.mxu0 %v2192
    %2775 = vmatpush1.bf16.msra.mxu0 %v2191
    %2776 = vmatprep.subr.bf16.mxu0 %v2195
    %2777 = vmatpush1.bf16.msra.mxu0 %v2194
    %2778 = vmatprep.subr.bf16.mxu0 %v2198
    %2779 = vmatpush1.bf16.msra.mxu0 %v2197
    %2780 = vmatprep.subr.bf16.mxu0 %v2201
    %2781 = vmatpush1.bf16.msra.mxu0 %v2200
    %2782 = vmatprep.subr.bf16.mxu0 %v2204
    %2783 = vmatpush1.bf16.msra.mxu0 %v2203
    %2784 = vmatprep.subr.bf16.mxu0 %v2207
    %2785 = vmatpush1.bf16.msra.mxu0 %v2206
    %2786 = vmatprep.subr.bf16.mxu0 %v2210
    %2787 = vmatpush1.bf16.msra.mxu0 %v2209
    %2788 = vmatprep.subr.bf16.mxu0 %v2213
    %2789 = vmatpush1.bf16.msra.mxu0 %v2212
    %2790 = vmatprep.subr.bf16.mxu0 %v2216
    %2791 = vmatpush1.bf16.msra.mxu0 %v2215
    %2792 = vmatprep.subr.bf16.mxu0 %v2219
    %2793 = vmatpush1.bf16.msra.mxu0 %v2218
    %2794 = vmatprep.subr.bf16.mxu0 %v2222
    %2795 = vmatpush1.bf16.msra.mxu0 %v2221
    %2796 = vmatprep.subr.bf16.mxu0 %v2225
    %2797 = vmatpush1.bf16.msra.mxu0 %v2224
    %2798 = vmatprep.subr.bf16.mxu0 %v2228
    %2799 = vmatpush1.bf16.msra.mxu0 %v2227
    %2800 = vmatprep.mubr.bf16.mxu0 %v711
    %2801 = vmatmul.mubr.bf16.gmra.mrb[0].mxu0 %v710
    %v2802 = vpop.f32.mrb[0].mxu0
    %v2803 = vadd.f32 %v2750, %v2802
    %v2804 = vpop.f32.mrb[0].mxu0
    %v2805 = vadd.f32 %v2752, %v2804
    %v2806 = vpop.f32.mrb[0].mxu0
    %v2807 = vadd.f32 %v2754, %v2806
    %v2808 = vpop.f32.mrb[0].mxu0
    %v2809 = vadd.f32 %v2756, %v2808
    %2810 = vmatprep.mubr.bf16.mxu0 %v723
    %2811 = vmatmul.mubr.bf16.gmra.mrb[0].mxu0 %v722
    %v2812 = vpop.f32.mrb[0].mxu0
    %v2813 = vadd.f32 %v2760, %v2812
    %v2814 = vpop.f32.mrb[0].mxu0
    %v2815 = vadd.f32 %v2762, %v2814
    %v2816 = vpop.f32.mrb[0].mxu0
    %v2817 = vadd.f32 %v2764, %v2816
    %v2818 = vpop.f32.mrb[0].mxu0
    %v2819 = vadd.f32 %v2766, %v2818
    %2820 = vdwg.mxu0
    %2821 = vmatprep.subr.bf16.mxu0 %v2231
    %2822 = vmatpush1.bf16.msra.mxu0 %v2230
    %2823 = vmatprep.subr.bf16.mxu0 %v2234
    %2824 = vmatpush1.bf16.msra.mxu0 %v2233
    %2825 = vmatprep.subr.bf16.mxu0 %v2237
    %2826 = vmatpush1.bf16.msra.mxu0 %v2236
    %2827 = vmatprep.subr.bf16.mxu0 %v2240
    %2828 = vmatpush1.bf16.msra.mxu0 %v2239
    %2829 = vmatprep.subr.bf16.mxu0 %v2243
    %2830 = vmatpush1.bf16.msra.mxu0 %v2242
    %2831 = vmatprep.subr.bf16.mxu0 %v2246
    %2832 = vmatpush1.bf16.msra.mxu0 %v2245
    %2833 = vmatprep.subr.bf16.mxu0 %v2249
    %2834 = vmatpush1.bf16.msra.mxu0 %v2248
    %2835 = vmatprep.subr.bf16.mxu0 %v2252
    %2836 = vmatpush1.bf16.msra.mxu0 %v2251
    %2837 = vmatprep.subr.bf16.mxu0 %v2255
    %2838 = vmatpush1.bf16.msra.mxu0 %v2254
    %2839 = vmatprep.subr.bf16.mxu0 %v2258
    %2840 = vmatpush1.bf16.msra.mxu0 %v2257
    %2841 = vmatprep.subr.bf16.mxu0 %v2261
    %2842 = vmatpush1.bf16.msra.mxu0 %v2260
    %2843 = vmatprep.subr.bf16.mxu0 %v2264
    %2844 = vmatpush1.bf16.msra.mxu0 %v2263
    %2845 = vmatprep.subr.bf16.mxu0 %v2267
    %2846 = vmatpush1.bf16.msra.mxu0 %v2266
    %2847 = vmatprep.subr.bf16.mxu0 %v2270
    %2848 = vmatpush1.bf16.msra.mxu0 %v2269
    %2849 = vmatprep.subr.bf16.mxu0 %v2273
    %2850 = vmatpush1.bf16.msra.mxu0 %v2272
    %2851 = vmatprep.subr.bf16.mxu0 %v2276
    %2852 = vmatpush1.bf16.msra.mxu0 %v2275
    %2853 = vmatprep.mubr.bf16.mxu0 %v713
    %2854 = vmatmul.mubr.bf16.gmra.mrb[0].mxu0 %v712
    %v2855 = vpop.f32.mrb[0].mxu0
    %v2856 = vadd.f32 %v2803, %v2855
    %v2857 = vpop.f32.mrb[0].mxu0
    %v2858 = vadd.f32 %v2805, %v2857
    %v2859 = vpop.f32.mrb[0].mxu0
    %v2860 = vadd.f32 %v2807, %v2859
    %v2861 = vpop.f32.mrb[0].mxu0
    %v2862 = vadd.f32 %v2809, %v2861
    %2863 = vmatprep.mubr.bf16.mxu0 %v725
    %2864 = vmatmul.mubr.bf16.gmra.mrb[0].mxu0 %v724
    %v2865 = vpop.f32.mrb[0].mxu0
    %v2866 = vadd.f32 %v2813, %v2865
    %v2867 = vpop.f32.mrb[0].mxu0
    %v2868 = vadd.f32 %v2815, %v2867
    %v2869 = vpop.f32.mrb[0].mxu0
    %v2870 = vadd.f32 %v2817, %v2869
    %v2871 = vpop.f32.mrb[0].mxu0
    %v2872 = vadd.f32 %v2819, %v2871
    %2873 = vdwg.mxu0
    %2874 = vmatprep.subr.bf16.mxu0 %v2279
    %2875 = vmatpush1.bf16.msra.mxu0 %v2278
    %2876 = vmatprep.subr.bf16.mxu0 %v2282
    %2877 = vmatpush1.bf16.msra.mxu0 %v2281
    %2878 = vmatprep.subr.bf16.mxu0 %v2285
    %2879 = vmatpush1.bf16.msra.mxu0 %v2284
    %2880 = vmatprep.subr.bf16.mxu0 %v2288
    %2881 = vmatpush1.bf16.msra.mxu0 %v2287
    %2882 = vmatprep.subr.bf16.mxu0 %v2291
    %2883 = vmatpush1.bf16.msra.mxu0 %v2290
    %2884 = vmatprep.subr.bf16.mxu0 %v2294
    %2885 = vmatpush1.bf16.msra.mxu0 %v2293
    %2886 = vmatprep.subr.bf16.mxu0 %v2297
    %2887 = vmatpush1.bf16.msra.mxu0 %v2296
    %2888 = vmatprep.subr.bf16.mxu0 %v2300
    %2889 = vmatpush1.bf16.msra.mxu0 %v2299
    %2890 = vmatprep.subr.bf16.mxu0 %v2303
    %2891 = vmatpush1.bf16.msra.mxu0 %v2302
    %2892 = vmatprep.subr.bf16.mxu0 %v2306
    %2893 = vmatpush1.bf16.msra.mxu0 %v2305
    %2894 = vmatprep.subr.bf16.mxu0 %v2309
    %2895 = vmatpush1.bf16.msra.mxu0 %v2308
    %2896 = vmatprep.subr.bf16.mxu0 %v2312
    %2897 = vmatpush1.bf16.msra.mxu0 %v2311
    %2898 = vmatprep.subr.bf16.mxu0 %v2315
    %2899 = vmatpush1.bf16.msra.mxu0 %v2314
    %2900 = vmatprep.subr.bf16.mxu0 %v2318
    %2901 = vmatpush1.bf16.msra.mxu0 %v2317
    %2902 = vmatprep.subr.bf16.mxu0 %v2321
    %2903 = vmatpush1.bf16.msra.mxu0 %v2320
    %2904 = vmatprep.subr.bf16.mxu0 %v2324
    %2905 = vmatpush1.bf16.msra.mxu0 %v2323
    %2906 = vmatprep.mubr.bf16.mxu0 %v715
    %2907 = vmatmul.mubr.bf16.gmra.mrb[0].mxu0 %v714
    %v2908 = vpop.f32.mrb[0].mxu0
    %v2909 = vadd.f32 %v2856, %v2908
    %v2910 = vpop.f32.mrb[0].mxu0
    %v2911 = vadd.f32 %v2858, %v2910
    %v2912 = vpop.f32.mrb[0].mxu0
    %v2913 = vadd.f32 %v2860, %v2912
    %v2914 = vpop.f32.mrb[0].mxu0
    %v2915 = vadd.f32 %v2862, %v2914
    %2916 = vmatprep.mubr.bf16.mxu0 %v727
    %2917 = vmatmul.mubr.bf16.gmra.mrb[0].mxu0 %v726
    %v2918 = vpop.f32.mrb[0].mxu0
    %v2919 = vadd.f32 %v2866, %v2918
    %v2920 = vpop.f32.mrb[0].mxu0
    %v2921 = vadd.f32 %v2868, %v2920
    %v2922 = vpop.f32.mrb[0].mxu0
    %v2923 = vadd.f32 %v2870, %v2922
    %v2924 = vpop.f32.mrb[0].mxu0
    %v2925 = vadd.f32 %v2872, %v2924
    %2926 = vdwg.mxu0
    %2927 = vmatprep.subr.bf16.mxu0 %v2327
    %2928 = vmatpush1.bf16.msra.mxu0 %v2326
    %2929 = vmatprep.subr.bf16.mxu0 %v2330
    %2930 = vmatpush1.bf16.msra.mxu0 %v2329
    %2931 = vmatprep.subr.bf16.mxu0 %v2333
    %2932 = vmatpush1.bf16.msra.mxu0 %v2332
    %2933 = vmatprep.subr.bf16.mxu0 %v2336
    %2934 = vmatpush1.bf16.msra.mxu0 %v2335
    %2935 = vmatprep.subr.bf16.mxu0 %v2339
    %2936 = vmatpush1.bf16.msra.mxu0 %v2338
    %2937 = vmatprep.subr.bf16.mxu0 %v2342
    %2938 = vmatpush1.bf16.msra.mxu0 %v2341
    %2939 = vmatprep.subr.bf16.mxu0 %v2345
    %2940 = vmatpush1.bf16.msra.mxu0 %v2344
    %2941 = vmatprep.subr.bf16.mxu0 %v2348
    %2942 = vmatpush1.bf16.msra.mxu0 %v2347
    %2943 = vmatprep.subr.bf16.mxu0 %v2351
    %2944 = vmatpush1.bf16.msra.mxu0 %v2350
    %2945 = vmatprep.subr.bf16.mxu0 %v2354
    %2946 = vmatpush1.bf16.msra.mxu0 %v2353
    %2947 = vmatprep.subr.bf16.mxu0 %v2357
    %2948 = vmatpush1.bf16.msra.mxu0 %v2356
    %2949 = vmatprep.subr.bf16.mxu0 %v2360
    %2950 = vmatpush1.bf16.msra.mxu0 %v2359
    %2951 = vmatprep.subr.bf16.mxu0 %v2363
    %2952 = vmatpush1.bf16.msra.mxu0 %v2362
    %2953 = vmatprep.subr.bf16.mxu0 %v2366
    %2954 = vmatpush1.bf16.msra.mxu0 %v2365
    %2955 = vmatprep.subr.bf16.mxu0 %v2369
    %2956 = vmatpush1.bf16.msra.mxu0 %v2368
    %2957 = vmatprep.subr.bf16.mxu0 %v2372
    %2958 = vmatpush1.bf16.msra.mxu0 %v2371
    %2959 = vmatprep.mubr.bf16.mxu0 %v717
    %2960 = vmatmul.mubr.bf16.gmra.mrb[0].mxu0 %v716
    %v2961 = vpop.f32.mrb[0].mxu0
    %v2962 = vadd.f32 %v2909, %v2961
    %v2963 = vpop.f32.mrb[0].mxu0
    %v2964 = vadd.f32 %v2911, %v2963
    %v2965 = vpop.f32.mrb[0].mxu0
    %v2966 = vadd.f32 %v2913, %v2965
    %v2967 = vpop.f32.mrb[0].mxu0
    %v2968 = vadd.f32 %v2915, %v2967
    %2969 = vmatprep.mubr.bf16.mxu0 %v729
    %2970 = vmatmul.mubr.bf16.gmra.mrb[0].mxu0 %v728
    %v2971 = vpop.f32.mrb[0].mxu0
    %v2972 = vadd.f32 %v2919, %v2971
    %v2973 = vpop.f32.mrb[0].mxu0
    %v2974 = vadd.f32 %v2921, %v2973
    %v2975 = vpop.f32.mrb[0].mxu0
    %v2976 = vadd.f32 %v2923, %v2975
    %v2977 = vpop.f32.mrb[0].mxu0
    %v2978 = vadd.f32 %v2925, %v2977
    %2979 = vdwg.mxu0
    %2980 = vmatprep.subr.bf16.mxu0 0
    %2981 = vmatpush1.bf16.msra.mxu0 %v2088
    %2982 = vmatprep.subr.bf16.mxu0 0
    %2983 = vmatpush1.bf16.msra.mxu0 %v2091
    %2984 = vmatprep.subr.bf16.mxu0 0
    %2985 = vmatpush1.bf16.msra.mxu0 %v2094
    %2986 = vmatprep.subr.bf16.mxu0 0
    %2987 = vmatpush1.bf16.msra.mxu0 %v2097
    %2988 = vmatprep.subr.bf16.mxu0 0
    %2989 = vmatpush1.bf16.msra.mxu0 %v2100
    %2990 = vmatprep.subr.bf16.mxu0 0
    %2991 = vmatpush1.bf16.msra.mxu0 %v2103
    %2992 = vmatprep.subr.bf16.mxu0 0
    %2993 = vmatpush1.bf16.msra.mxu0 %v2106
    %2994 = vmatprep.subr.bf16.mxu0 0
    %2995 = vmatpush1.bf16.msra.mxu0 %v2109
    %2996 = vmatprep.subr.bf16.mxu0 0
    %2997 = vmatpush1.bf16.msra.mxu0 %v2112
    %2998 = vmatprep.subr.bf16.mxu0 0
    %2999 = vmatpush1.bf16.msra.mxu0 %v2115
    %3000 = vmatprep.subr.bf16.mxu0 0
    %3001 = vmatpush1.bf16.msra.mxu0 %v2118
    %3002 = vmatprep.subr.bf16.mxu0 0
    %3003 = vmatpush1.bf16.msra.mxu0 %v2121
    %3004 = vmatprep.subr.bf16.mxu0 0
    %3005 = vmatpush1.bf16.msra.mxu0 %v2124
    %3006 = vmatprep.subr.bf16.mxu0 0
    %3007 = vmatpush1.bf16.msra.mxu0 %v2127
    %3008 = vmatprep.subr.bf16.mxu0 0
    %3009 = vmatpush1.bf16.msra.mxu0 %v2130
    %3010 = vmatprep.subr.bf16.mxu0 0
    %3011 = vmatpush1.bf16.msra.mxu0 %v2133
    %3012 = vmatprep.mubr.bf16.mxu0 %v707
    %3013 = vmatmul.mubr.bf16.gmra.mrb[0].mxu0 %v706
    %v3014 = vpop.f32.mrb[0].mxu0
    %v3015 = vadd.f32 %v1116, %v3014
    %v3016 = vpop.f32.mrb[0].mxu0
    %v3017 = vpop.f32.mrb[0].mxu0
    %v3018 = vadd.f32 %v1119, %v3017
    %v3019 = vpop.f32.mrb[0].mxu0
    %3020 = vmatprep.mubr.bf16.mxu0 %v719
    %3021 = vmatmul.mubr.bf16.gmra.mrb[0].mxu0 %v718
    %v3022 = vpop.f32.mrb[0].mxu0
    %v3023 = vadd.f32 %v1122, %v3022
    %v3024 = vpop.f32.mrb[0].mxu0
    %v3025 = vpop.f32.mrb[0].mxu0
    %v3026 = vadd.f32 %v1125, %v3025
    %v3027 = vpop.f32.mrb[0].mxu0
    %3028 = vdwg.mxu0
    %3029 = vmatprep.subr.bf16.mxu0 0
    %3030 = vmatpush1.bf16.msra.mxu0 %v2136
    %3031 = vmatprep.subr.bf16.mxu0 0
    %3032 = vmatpush1.bf16.msra.mxu0 %v2139
    %3033 = vmatprep.subr.bf16.mxu0 0
    %3034 = vmatpush1.bf16.msra.mxu0 %v2142
    %3035 = vmatprep.subr.bf16.mxu0 0
    %3036 = vmatpush1.bf16.msra.mxu0 %v2145
    %3037 = vmatprep.subr.bf16.mxu0 0
    %3038 = vmatpush1.bf16.msra.mxu0 %v2148
    %3039 = vmatprep.subr.bf16.mxu0 0
    %3040 = vmatpush1.bf16.msra.mxu0 %v2151
    %3041 = vmatprep.subr.bf16.mxu0 0
    %3042 = vmatpush1.bf16.msra.mxu0 %v2154
    %3043 = vmatprep.subr.bf16.mxu0 0
    %3044 = vmatpush1.bf16.msra.mxu0 %v2157
    %3045 = vmatprep.subr.bf16.mxu0 0
    %3046 = vmatpush1.bf16.msra.mxu0 %v2160
    %3047 = vmatprep.subr.bf16.mxu0 0
    %3048 = vmatpush1.bf16.msra.mxu0 %v2163
    %3049 = vmatprep.subr.bf16.mxu0 0
    %3050 = vmatpush1.bf16.msra.mxu0 %v2166
    %3051 = vmatprep.subr.bf16.mxu0 0
    %3052 = vmatpush1.bf16.msra.mxu0 %v2169
    %3053 = vmatprep.subr.bf16.mxu0 0
    %3054 = vmatpush1.bf16.msra.mxu0 %v2172
    %3055 = vmatprep.subr.bf16.mxu0 0
    %3056 = vmatpush1.bf16.msra.mxu0 %v2175
    %3057 = vmatprep.subr.bf16.mxu0 0
    %3058 = vmatpush1.bf16.msra.mxu0 %v2178
    %3059 = vmatprep.subr.bf16.mxu0 0
    %3060 = vmatpush1.bf16.msra.mxu0 %v2181
    %3061 = vmatprep.mubr.bf16.mxu0 %v709
    %3062 = vmatmul.mubr.bf16.gmra.mrb[0].mxu0 %v708
    %v3063 = vpop.f32.mrb[0].mxu0
    %v3064 = vadd.f32 %v3015, %v3063
    %v3065 = vpop.f32.mrb[0].mxu0
    %v3066 = vpop.f32.mrb[0].mxu0
    %v3067 = vadd.f32 %v3018, %v3066
    %v3068 = vpop.f32.mrb[0].mxu0
    %3069 = vmatprep.mubr.bf16.mxu0 %v721
    %3070 = vmatmul.mubr.bf16.gmra.mrb[0].mxu0 %v720
    %v3071 = vpop.f32.mrb[0].mxu0
    %v3072 = vadd.f32 %v3023, %v3071
    %v3073 = vpop.f32.mrb[0].mxu0
    %v3074 = vpop.f32.mrb[0].mxu0
    %v3075 = vadd.f32 %v3026, %v3074
    %v3076 = vpop.f32.mrb[0].mxu0
    %3077 = vdwg.mxu0
    %3078 = vmatprep.subr.bf16.mxu0 0
    %3079 = vmatpush1.bf16.msra.mxu0 %v2184
    %3080 = vmatprep.subr.bf16.mxu0 0
    %3081 = vmatpush1.bf16.msra.mxu0 %v2187
    %3082 = vmatprep.subr.bf16.mxu0 0
    %3083 = vmatpush1.bf16.msra.mxu0 %v2190
    %3084 = vmatprep.subr.bf16.mxu0 0
    %3085 = vmatpush1.bf16.msra.mxu0 %v2193
    %3086 = vmatprep.subr.bf16.mxu0 0
    %3087 = vmatpush1.bf16.msra.mxu0 %v2196
    %3088 = vmatprep.subr.bf16.mxu0 0
    %3089 = vmatpush1.bf16.msra.mxu0 %v2199
    %3090 = vmatprep.subr.bf16.mxu0 0
    %3091 = vmatpush1.bf16.msra.mxu0 %v2202
    %3092 = vmatprep.subr.bf16.mxu0 0
    %3093 = vmatpush1.bf16.msra.mxu0 %v2205
    %3094 = vmatprep.subr.bf16.mxu0 0
    %3095 = vmatpush1.bf16.msra.mxu0 %v2208
    %3096 = vmatprep.subr.bf16.mxu0 0
    %3097 = vmatpush1.bf16.msra.mxu0 %v2211
    %3098 = vmatprep.subr.bf16.mxu0 0
    %3099 = vmatpush1.bf16.msra.mxu0 %v2214
    %3100 = vmatprep.subr.bf16.mxu0 0
    %3101 = vmatpush1.bf16.msra.mxu0 %v2217
    %3102 = vmatprep.subr.bf16.mxu0 0
    %3103 = vmatpush1.bf16.msra.mxu0 %v2220
    %3104 = vmatprep.subr.bf16.mxu0 0
    %3105 = vmatpush1.bf16.msra.mxu0 %v2223
    %3106 = vmatprep.subr.bf16.mxu0 0
    %3107 = vmatpush1.bf16.msra.mxu0 %v2226
    %3108 = vmatprep.subr.bf16.mxu0 0
    %3109 = vmatpush1.bf16.msra.mxu0 %v2229
    %3110 = vmatprep.mubr.bf16.mxu0 %v711
    %3111 = vmatmul.mubr.bf16.gmra.mrb[0].mxu0 %v710
    %v3112 = vpop.f32.mrb[0].mxu0
    %v3113 = vadd.f32 %v3064, %v3112
    %v3114 = vpop.f32.mrb[0].mxu0
    %v3115 = vpop.f32.mrb[0].mxu0
    %v3116 = vadd.f32 %v3067, %v3115
    %v3117 = vpop.f32.mrb[0].mxu0
    %3118 = vmatprep.mubr.bf16.mxu0 %v723
    %3119 = vmatmul.mubr.bf16.gmra.mrb[0].mxu0 %v722
    %v3120 = vpop.f32.mrb[0].mxu0
    %v3121 = vadd.f32 %v3072, %v3120
    %v3122 = vpop.f32.mrb[0].mxu0
    %v3123 = vpop.f32.mrb[0].mxu0
    %v3124 = vadd.f32 %v3075, %v3123
    %v3125 = vpop.f32.mrb[0].mxu0
    %3126 = vdwg.mxu0
    %3127 = vmatprep.subr.bf16.mxu0 0
    %3128 = vmatpush1.bf16.msra.mxu0 %v2232
    %3129 = vmatprep.subr.bf16.mxu0 0
    %3130 = vmatpush1.bf16.msra.mxu0 %v2235
    %3131 = vmatprep.subr.bf16.mxu0 0
    %3132 = vmatpush1.bf16.msra.mxu0 %v2238
    %3133 = vmatprep.subr.bf16.mxu0 0
    %3134 = vmatpush1.bf16.msra.mxu0 %v2241
    %3135 = vmatprep.subr.bf16.mxu0 0
    %3136 = vmatpush1.bf16.msra.mxu0 %v2244
    %3137 = vmatprep.subr.bf16.mxu0 0
    %3138 = vmatpush1.bf16.msra.mxu0 %v2247
    %3139 = vmatprep.subr.bf16.mxu0 0
    %3140 = vmatpush1.bf16.msra.mxu0 %v2250
    %3141 = vmatprep.subr.bf16.mxu0 0
    %3142 = vmatpush1.bf16.msra.mxu0 %v2253
    %3143 = vmatprep.subr.bf16.mxu0 0
    %3144 = vmatpush1.bf16.msra.mxu0 %v2256
    %3145 = vmatprep.subr.bf16.mxu0 0
    %3146 = vmatpush1.bf16.msra.mxu0 %v2259
    %3147 = vmatprep.subr.bf16.mxu0 0
    %3148 = vmatpush1.bf16.msra.mxu0 %v2262
    %3149 = vmatprep.subr.bf16.mxu0 0
    %3150 = vmatpush1.bf16.msra.mxu0 %v2265
    %3151 = vmatprep.subr.bf16.mxu0 0
    %3152 = vmatpush1.bf16.msra.mxu0 %v2268
    %3153 = vmatprep.subr.bf16.mxu0 0
    %3154 = vmatpush1.bf16.msra.mxu0 %v2271
    %3155 = vmatprep.subr.bf16.mxu0 0
    %3156 = vmatpush1.bf16.msra.mxu0 %v2274
    %3157 = vmatprep.subr.bf16.mxu0 0
    %3158 = vmatpush1.bf16.msra.mxu0 %v2277
    %3159 = vmatprep.mubr.bf16.mxu0 %v713
    %3160 = vmatmul.mubr.bf16.gmra.mrb[0].mxu0 %v712
    %v3161 = vpop.f32.mrb[0].mxu0
    %v3162 = vadd.f32 %v3113, %v3161
    %v3163 = vpop.f32.mrb[0].mxu0
    %v3164 = vpop.f32.mrb[0].mxu0
    %v3165 = vadd.f32 %v3116, %v3164
    %v3166 = vpop.f32.mrb[0].mxu0
    %3167 = vmatprep.mubr.bf16.mxu0 %v725
    %3168 = vmatmul.mubr.bf16.gmra.mrb[0].mxu0 %v724
    %v3169 = vpop.f32.mrb[0].mxu0
    %v3170 = vadd.f32 %v3121, %v3169
    %v3171 = vpop.f32.mrb[0].mxu0
    %v3172 = vpop.f32.mrb[0].mxu0
    %v3173 = vadd.f32 %v3124, %v3172
    %v3174 = vpop.f32.mrb[0].mxu0
    %3175 = vdwg.mxu0
    %3176 = vmatprep.subr.bf16.mxu0 0
    %3177 = vmatpush1.bf16.msra.mxu0 %v2280
    %3178 = vmatprep.subr.bf16.mxu0 0
    %3179 = vmatpush1.bf16.msra.mxu0 %v2283
    %3180 = vmatprep.subr.bf16.mxu0 0
    %3181 = vmatpush1.bf16.msra.mxu0 %v2286
    %3182 = vmatprep.subr.bf16.mxu0 0
    %3183 = vmatpush1.bf16.msra.mxu0 %v2289
    %3184 = vmatprep.subr.bf16.mxu0 0
    %3185 = vmatpush1.bf16.msra.mxu0 %v2292
    %3186 = vmatprep.subr.bf16.mxu0 0
    %3187 = vmatpush1.bf16.msra.mxu0 %v2295
    %3188 = vmatprep.subr.bf16.mxu0 0
    %3189 = vmatpush1.bf16.msra.mxu0 %v2298
    %3190 = vmatprep.subr.bf16.mxu0 0
    %3191 = vmatpush1.bf16.msra.mxu0 %v2301
    %3192 = vmatprep.subr.bf16.mxu0 0
    %3193 = vmatpush1.bf16.msra.mxu0 %v2304
    %3194 = vmatprep.subr.bf16.mxu0 0
    %3195 = vmatpush1.bf16.msra.mxu0 %v2307
    %3196 = vmatprep.subr.bf16.mxu0 0
    %3197 = vmatpush1.bf16.msra.mxu0 %v2310
    %3198 = vmatprep.subr.bf16.mxu0 0
    %3199 = vmatpush1.bf16.msra.mxu0 %v2313
    %3200 = vmatprep.subr.bf16.mxu0 0
    %3201 = vmatpush1.bf16.msra.mxu0 %v2316
    %3202 = vmatprep.subr.bf16.mxu0 0
    %3203 = vmatpush1.bf16.msra.mxu0 %v2319
    %3204 = vmatprep.subr.bf16.mxu0 0
    %3205 = vmatpush1.bf16.msra.mxu0 %v2322
    %3206 = vmatprep.subr.bf16.mxu0 0
    %3207 = vmatpush1.bf16.msra.mxu0 %v2325
    %3208 = vmatprep.mubr.bf16.mxu0 %v715
    %3209 = vmatmul.mubr.bf16.gmra.mrb[0].mxu0 %v714
    %v3210 = vpop.f32.mrb[0].mxu0
    %v3211 = vadd.f32 %v3162, %v3210
    %v3212 = vpop.f32.mrb[0].mxu0
    %v3213 = vpop.f32.mrb[0].mxu0
    %v3214 = vadd.f32 %v3165, %v3213
    %v3215 = vpop.f32.mrb[0].mxu0
    %3216 = vmatprep.mubr.bf16.mxu0 %v727
    %3217 = vmatmul.mubr.bf16.gmra.mrb[0].mxu0 %v726
    %v3218 = vpop.f32.mrb[0].mxu0
    %v3219 = vadd.f32 %v3170, %v3218
    %v3220 = vpop.f32.mrb[0].mxu0
    %v3221 = vpop.f32.mrb[0].mxu0
    %v3222 = vadd.f32 %v3173, %v3221
    %v3223 = vpop.f32.mrb[0].mxu0
    %3224 = vdwg.mxu0
    %3225 = vmatprep.subr.bf16.mxu0 0
    %3226 = vmatpush1.bf16.msra.mxu0 %v2328
    %3227 = vmatprep.subr.bf16.mxu0 0
    %3228 = vmatpush1.bf16.msra.mxu0 %v2331
    %3229 = vmatprep.subr.bf16.mxu0 0
    %3230 = vmatpush1.bf16.msra.mxu0 %v2334
    %3231 = vmatprep.subr.bf16.mxu0 0
    %3232 = vmatpush1.bf16.msra.mxu0 %v2337
    %3233 = vmatprep.subr.bf16.mxu0 0
    %3234 = vmatpush1.bf16.msra.mxu0 %v2340
    %3235 = vmatprep.subr.bf16.mxu0 0
    %3236 = vmatpush1.bf16.msra.mxu0 %v2343
    %3237 = vmatprep.subr.bf16.mxu0 0
    %3238 = vmatpush1.bf16.msra.mxu0 %v2346
    %3239 = vmatprep.subr.bf16.mxu0 0
    %3240 = vmatpush1.bf16.msra.mxu0 %v2349
    %3241 = vmatprep.subr.bf16.mxu0 0
    %3242 = vmatpush1.bf16.msra.mxu0 %v2352
    %3243 = vmatprep.subr.bf16.mxu0 0
    %3244 = vmatpush1.bf16.msra.mxu0 %v2355
    %3245 = vmatprep.subr.bf16.mxu0 0
    %3246 = vmatpush1.bf16.msra.mxu0 %v2358
    %3247 = vmatprep.subr.bf16.mxu0 0
    %3248 = vmatpush1.bf16.msra.mxu0 %v2361
    %3249 = vmatprep.subr.bf16.mxu0 0
    %3250 = vmatpush1.bf16.msra.mxu0 %v2364
    %3251 = vmatprep.subr.bf16.mxu0 0
    %3252 = vmatpush1.bf16.msra.mxu0 %v2367
    %3253 = vmatprep.subr.bf16.mxu0 0
    %3254 = vmatpush1.bf16.msra.mxu0 %v2370
    %3255 = vmatprep.subr.bf16.mxu0 0
    %3256 = vmatpush1.bf16.msra.mxu0 %v2373
    %3257 = vmatprep.mubr.bf16.mxu0 %v717
    %3258 = vmatmul.mubr.bf16.gmra.mrb[0].mxu0 %v716
    %v3259 = vpop.f32.mrb[0].mxu0
    %v3260 = vadd.f32 %v3211, %v3259
    %v3261 = vpop.f32.mrb[0].mxu0
    %v3262 = vpop.f32.mrb[0].mxu0
    %v3263 = vadd.f32 %v3214, %v3262
    %v3264 = vpop.f32.mrb[0].mxu0
    %3265 = vmatprep.mubr.bf16.mxu0 %v729
    %3266 = vmatmul.mubr.bf16.gmra.mrb[0].mxu0 %v728
    %v3267 = vpop.f32.mrb[0].mxu0
    %v3268 = vadd.f32 %v3219, %v3267
    %v3269 = vpop.f32.mrb[0].mxu0
    %v3270 = vpop.f32.mrb[0].mxu0
    %v3271 = vadd.f32 %v3222, %v3270
    %v3272 = vpop.f32.mrb[0].mxu0
    %3273 = vdwg.mxu0
    %v3274 = vmax.f32 %v2962, %v2966
    %v3275 = vrot.slane %v3274, 4
    %v3276 = vmax.f32 %v3274, %v3275
    %v3277 = vrot.slane %v3276, 2
    %v3278 = vmax.f32 %v3276, %v3277
    %v3279 = vrot.slane %v3278, 1
    %v3280 = vmax.f32 %v3278, %v3279
    %v3281 = vmax.f32 %v2964, %v2968
    %v3282 = vrot.slane %v3281, 4
    %v3283 = vmax.f32 %v3281, %v3282
    %v3284 = vrot.slane %v3283, 2
    %v3285 = vmax.f32 %v3283, %v3284
    %v3286 = vrot.slane %v3285, 1
    %v3287 = vmax.f32 %v3285, %v3286
    %v3288 = vmax.f32 %v3260, %v3263
    %v3289 = vrot.slane %v3288, 4
    %v3290 = vmax.f32 %v3288, %v3289
    %v3291 = vrot.slane %v3290, 2
    %v3292 = vmax.f32 %v3290, %v3291
    %v3293 = vrot.slane %v3292, 1
    %v3294 = vmax.f32 %v3292, %v3293
    %v3295 = vmax.f32 %v2972, %v2976
    %v3296 = vrot.slane %v3295, 4
    %v3297 = vmax.f32 %v3295, %v3296
    %v3298 = vrot.slane %v3297, 2
    %v3299 = vmax.f32 %v3297, %v3298
    %v3300 = vrot.slane %v3299, 1
    %v3301 = vmax.f32 %v3299, %v3300
    %v3302 = vmax.f32 %v2974, %v2978
    %v3303 = vrot.slane %v3302, 4
    %v3304 = vmax.f32 %v3302, %v3303
    %v3305 = vrot.slane %v3304, 2
    %v3306 = vmax.f32 %v3304, %v3305
    %v3307 = vrot.slane %v3306, 1
    %v3308 = vmax.f32 %v3306, %v3307
    %v3309 = vmax.f32 %v3268, %v3271
    %v3310 = vrot.slane %v3309, 4
    %v3311 = vmax.f32 %v3309, %v3310
    %v3312 = vrot.slane %v3311, 2
    %v3313 = vmax.f32 %v3311, %v3312
    %v3314 = vrot.slane %v3313, 1
    %v3315 = vmax.f32 %v3313, %v3314
    %vm3316 = vcmask 1040384
    %v3317 = vsel %vm3316, %v3280, %v3301
    %v3318 = vsel %vm3316, %v3287, %v3308
    %v3319 = vsel %vm3316, %v3294, %v3315
    %v3320 = vld [vmem:[#allocation11] sm:$0x7]
    %v3322 = vlaneseq
    %v3323 = vshrl.u32 %v3322, 7
    %v3324 = vsub.s32 0, %v3323
    %v3325 = vrot.slane %v3320, %v3324
    %v3326 = vlaneseq
    %v3327 = vshrl.u32 %v3326, 7
    %v3328 = vsub.s32 1, %v3327
    %v3329 = vrot.slane %v3320, %v3328
    %v3330 = vlaneseq
    %v3331 = vshrl.u32 %v3330, 7
    %v3332 = vsub.s32 2, %v3331
    %v3333 = vrot.slane %v3320, %v3332
    %v3337 = vadd.f32 %v3317, %v3325
    %v3338 = vadd.f32 %v3318, %v3329
    %v3339 = vadd.f32 %v3319, %v3333
    %v3340 = vpack.c.bf16 %v3337, %v3337
    %v3341 = vpack.c.bf16 %v3338, %v3338
    %v3342 = vpack.c.bf16 %v3339, %v3339
    %v3343 = vld [vmem:[#allocation12] sm:$0xf]
    %v3344 = vld [vmem:[#allocation12 + $0x4] sm:$0xf]
    %v3345 = vld [vmem:[#allocation12 + $0x8] sm:$0xf]
    %v3346 = vld [vmem:[#allocation12 + $0xc] sm:$0xf]
    %v3347 = vld [vmem:[#allocation12 + $0x10] sm:$0xf]
    %v3348 = vld [vmem:[#allocation12 + $0x14] sm:$0xf]
    %v3349 = vld [vmem:[#allocation12 + $0x18] sm:$0xf]
    %v3350 = vld [vmem:[#allocation12 + $0x1c] sm:$0xf]
    %v3351 = vld [vmem:[#allocation12 + $0x20] sm:$0xf]
    %v3352 = vld [vmem:[#allocation12 + $0x24] sm:$0xf]
    %v3353 = vld [vmem:[#allocation12 + $0x28] sm:$0xf]
    %v3354 = vld [vmem:[#allocation12 + $0x2c] sm:$0xf]
    %v3355 = vld [vmem:[#allocation12 + $0x30] sm:$0xf]
    %v3356 = vld [vmem:[#allocation12 + $0x34] sm:$0xf]
    %v3357 = vld [vmem:[#allocation12 + $0x38] sm:$0xf]
    %v3358 = vld [vmem:[#allocation12 + $0x3c] sm:$0xf]
    %v3359 = vld [vmem:[#allocation12 + $0x40] sm:$0xf]
    %v3360 = vld [vmem:[#allocation12 + $0x44] sm:$0xf]
    %v3361 = vld [vmem:[#allocation12 + $0x48] sm:$0xf]
    %v3362 = vld [vmem:[#allocation12 + $0x4c] sm:$0xf]
    %v3363 = vld [vmem:[#allocation12 + $0x50] sm:$0xf]
    %v3364 = vld [vmem:[#allocation12 + $0x54] sm:$0xf]
    %v3365 = vld [vmem:[#allocation12 + $0x58] sm:$0xf]
    %v3366 = vld [vmem:[#allocation12 + $0x5c] sm:$0xf]
    %v3367 = vld [vmem:[#allocation12 + $0x60] sm:$0xf]
    %v3368 = vld [vmem:[#allocation12 + $0x64] sm:$0xf]
    %v3369 = vld [vmem:[#allocation12 + $0x68] sm:$0xf]
    %v3370 = vld [vmem:[#allocation12 + $0x6c] sm:$0xf]
    %v3371 = vld [vmem:[#allocation12 + $0x70] sm:$0xf]
    %v3372 = vld [vmem:[#allocation12 + $0x74] sm:$0xf]
    %v3373 = vld [vmem:[#allocation12 + $0x78] sm:$0xf]
    %v3374 = vld [vmem:[#allocation12 + $0x7c] sm:$0xf]
    %v3375 = vld [vmem:[#allocation12 + $0x80] sm:$0xf]
    %v3376 = vld [vmem:[#allocation12 + $0x84] sm:$0xf]
    %v3377 = vld [vmem:[#allocation12 + $0x88] sm:$0xf]
    %v3378 = vld [vmem:[#allocation12 + $0x8c] sm:$0xf]
    %v3379 = vld [vmem:[#allocation12 + $0x90] sm:$0xf]
    %v3380 = vld [vmem:[#allocation12 + $0x94] sm:$0xf]
    %v3381 = vld [vmem:[#allocation12 + $0x98] sm:$0xf]
    %v3382 = vld [vmem:[#allocation12 + $0x9c] sm:$0xf]
    %v3383 = vld [vmem:[#allocation12 + $0xa0] sm:$0xf]
    %v3384 = vld [vmem:[#allocation12 + $0xa4] sm:$0xf]
    %v3385 = vld [vmem:[#allocation12 + $0xa8] sm:$0xf]
    %v3386 = vld [vmem:[#allocation12 + $0xac] sm:$0xf]
    %v3387 = vld [vmem:[#allocation12 + $0xb0] sm:$0xf]
    %v3388 = vld [vmem:[#allocation12 + $0xb4] sm:$0xf]
    %v3389 = vld [vmem:[#allocation12 + $0xb8] sm:$0xf]
    %v3390 = vld [vmem:[#allocation12 + $0xbc] sm:$0xf]
    %v3391 = vld [vmem:[#allocation14] sm:$0x1]
    %v3393 = vlaneseq
    %v3394 = vshrl.u32 %v3393, 7
    %v3395 = vsub.s32 0, %v3394
    %v3396 = vrot.slane %v3391, %v3395
    %v3446 = vunpack.c.l.b16 %v3343
    %v3447 = vunpack.c.l.b16 %v3344
    %v3448 = vunpack.c.l.b16 %v3345
    %v3449 = vunpack.c.l.b16 %v3346
    %v3450 = vunpack.c.l.b16 %v3347
    %v3451 = vunpack.c.l.b16 %v3348
    %v3452 = vunpack.c.l.b16 %v3349
    %v3453 = vunpack.c.l.b16 %v3350
    %v3454 = vunpack.c.l.b16 %v3351
    %v3455 = vunpack.c.l.b16 %v3352
    %v3456 = vunpack.c.l.b16 %v3353
    %v3457 = vunpack.c.l.b16 %v3354
    %v3458 = vunpack.c.l.b16 %v3355
    %v3459 = vunpack.c.l.b16 %v3356
    %v3460 = vunpack.c.l.b16 %v3357
    %v3461 = vunpack.c.l.b16 %v3358
    %v3462 = vunpack.c.l.b16 %v3359
    %v3463 = vunpack.c.l.b16 %v3360
    %v3464 = vunpack.c.l.b16 %v3361
    %v3465 = vunpack.c.l.b16 %v3362
    %v3466 = vunpack.c.l.b16 %v3363
    %v3467 = vunpack.c.l.b16 %v3364
    %v3468 = vunpack.c.l.b16 %v3365
    %v3469 = vunpack.c.l.b16 %v3366
    %v3470 = vunpack.c.l.b16 %v3367
    %v3471 = vunpack.c.l.b16 %v3368
    %v3472 = vunpack.c.l.b16 %v3369
    %v3473 = vunpack.c.l.b16 %v3370
    %v3474 = vunpack.c.l.b16 %v3371
    %v3475 = vunpack.c.l.b16 %v3372
    %v3476 = vunpack.c.l.b16 %v3373
    %v3477 = vunpack.c.l.b16 %v3374
    %v3478 = vunpack.c.l.b16 %v3375
    %v3479 = vunpack.c.l.b16 %v3376
    %v3480 = vunpack.c.l.b16 %v3377
    %v3481 = vunpack.c.l.b16 %v3378
    %v3482 = vunpack.c.l.b16 %v3379
    %v3483 = vunpack.c.l.b16 %v3380
    %v3484 = vunpack.c.l.b16 %v3381
    %v3485 = vunpack.c.l.b16 %v3382
    %v3486 = vunpack.c.l.b16 %v3383
    %v3487 = vunpack.c.l.b16 %v3384
    %v3488 = vunpack.c.l.b16 %v3385
    %v3489 = vunpack.c.l.b16 %v3386
    %v3490 = vunpack.c.l.b16 %v3387
    %v3491 = vunpack.c.l.b16 %v3388
    %v3492 = vunpack.c.l.b16 %v3389
    %v3493 = vunpack.c.l.b16 %v3390
    %v3494 = vpack.c.b16 %v3447, %v3446
    %v3495 = vpack.c.b16 %v3449, %v3448
    %v3496 = vpack.c.b16 %v3451, %v3450
    %v3497 = vpack.c.b16 %v3453, %v3452
    %v3498 = vpack.c.b16 %v3455, %v3454
    %v3499 = vpack.c.b16 %v3457, %v3456
    %v3500 = vpack.c.b16 %v3459, %v3458
    %v3501 = vpack.c.b16 %v3461, %v3460
    %v3502 = vpack.c.b16 %v3463, %v3462
    %v3503 = vpack.c.b16 %v3465, %v3464
    %v3504 = vpack.c.b16 %v3467, %v3466
    %v3505 = vpack.c.b16 %v3469, %v3468
    %v3506 = vpack.c.b16 %v3471, %v3470
    %v3507 = vpack.c.b16 %v3473, %v3472
    %v3508 = vpack.c.b16 %v3475, %v3474
    %v3509 = vpack.c.b16 %v3477, %v3476
    %v3510 = vpack.c.b16 %v3479, %v3478
    %v3511 = vpack.c.b16 %v3481, %v3480
    %v3512 = vpack.c.b16 %v3483, %v3482
    %v3513 = vpack.c.b16 %v3485, %v3484
    %v3514 = vpack.c.b16 %v3487, %v3486
    %v3515 = vpack.c.b16 %v3489, %v3488
    %v3516 = vpack.c.b16 %v3491, %v3490
    %v3517 = vpack.c.b16 %v3493, %v3492
    %3542 = vmatprep.subr.bf16.mxu0 0
    %3543 = vmatpush1.bf16.msra.mxu0 %v3494
    %3544 = vmatprep.subr.bf16.mxu0 0
    %3545 = vmatpush1.bf16.msra.mxu0 %v3495
    %3546 = vmatprep.subr.bf16.mxu0 0
    %3547 = vmatpush1.bf16.msra.mxu0 %v3496
    %3548 = vmatprep.subr.bf16.mxu0 0
    %3549 = vmatpush1.bf16.msra.mxu0 %v3497
    %3550 = vmatprep.subr.bf16.mxu0 0
    %3551 = vmatpush1.bf16.msra.mxu0 %v3498
    %3552 = vmatprep.subr.bf16.mxu0 0
    %3553 = vmatpush1.bf16.msra.mxu0 %v3499
    %3554 = vmatprep.subr.bf16.mxu0 0
    %3555 = vmatpush1.bf16.msra.mxu0 %v3500
    %3556 = vmatprep.subr.bf16.mxu0 0
    %3557 = vmatpush1.bf16.msra.mxu0 %v3501
    %3558 = vmatprep.subr.bf16.mxu0 0
    %3559 = vmatpush1.bf16.msra.mxu0 %v3502
    %3560 = vmatprep.subr.bf16.mxu0 0
    %3561 = vmatpush1.bf16.msra.mxu0 %v3503
    %3562 = vmatprep.subr.bf16.mxu0 0
    %3563 = vmatpush1.bf16.msra.mxu0 %v3504
    %3564 = vmatprep.subr.bf16.mxu0 0
    %3565 = vmatpush1.bf16.msra.mxu0 %v3505
    %3566 = vmatprep.subr.bf16.mxu0 0
    %3567 = vmatpush1.bf16.msra.mxu0 %v3506
    %3568 = vmatprep.subr.bf16.mxu0 0
    %3569 = vmatpush1.bf16.msra.mxu0 %v3507
    %3570 = vmatprep.subr.bf16.mxu0 0
    %3571 = vmatpush1.bf16.msra.mxu0 %v3508
    %3572 = vmatprep.subr.bf16.mxu0 0
    %3573 = vmatpush1.bf16.msra.mxu0 %v3509
    %3574 = vmatprep.mubr.bf16.mxu0 %v3341
    %3575 = vmatmul.mubr.bf16.gmra.mrb[0].mxu0 %v3340
    %v3576 = vpop.f32.mrb[0].mxu0
    %v3577 = vadd.f32 %v3396, %v3576
    %v3578 = vpop.f32.mrb[0].mxu0
    %v3579 = vpop.f32.mrb[0].mxu0
    %v3580 = vpop.f32.mrb[0].mxu0
    %3581 = vdwg.mxu0
    %3582 = vmatprep.subr.bf16.mxu0 0
    %3583 = vmatpush1.bf16.msra.mxu0 %v3510
    %3584 = vmatprep.subr.bf16.mxu0 0
    %3585 = vmatpush1.bf16.msra.mxu0 %v3511
    %3586 = vmatprep.subr.bf16.mxu0 0
    %3587 = vmatpush1.bf16.msra.mxu0 %v3512
    %3588 = vmatprep.subr.bf16.mxu0 0
    %3589 = vmatpush1.bf16.msra.mxu0 %v3513
    %3590 = vmatprep.subr.bf16.mxu0 0
    %3591 = vmatpush1.bf16.msra.mxu0 %v3514
    %3592 = vmatprep.subr.bf16.mxu0 0
    %3593 = vmatpush1.bf16.msra.mxu0 %v3515
    %3594 = vmatprep.subr.bf16.mxu0 0
    %3595 = vmatpush1.bf16.msra.mxu0 %v3516
    %3596 = vmatprep.subr.bf16.mxu0 0
    %3597 = vmatpush1.bf16.msra.mxu0 %v3517
    %3598 = vmatprep.subr.bf16.mxu0 0
    %3599 = vmatpush1.bf16.msra.mxu0 0
    %3600 = vmatprep.subr.bf16.mxu0 0
    %3601 = vmatpush1.bf16.msra.mxu0 0
    %3602 = vmatprep.subr.bf16.mxu0 0
    %3603 = vmatpush1.bf16.msra.mxu0 0
    %3604 = vmatprep.subr.bf16.mxu0 0
    %3605 = vmatpush1.bf16.msra.mxu0 0
    %3606 = vmatprep.subr.bf16.mxu0 0
    %3607 = vmatpush1.bf16.msra.mxu0 0
    %3608 = vmatprep.subr.bf16.mxu0 0
    %3609 = vmatpush1.bf16.msra.mxu0 0
    %3610 = vmatprep.subr.bf16.mxu0 0
    %3611 = vmatpush1.bf16.msra.mxu0 0
    %3612 = vmatprep.subr.bf16.mxu0 0
    %3613 = vmatpush1.bf16.msra.mxu0 0
    %3614 = vmatprep.mubr.bf16.mxu0 0
    %3615 = vmatmul.mubr.bf16.gmra.mrb[0].mxu0 %v3342
    %v3616 = vpop.f32.mrb[0].mxu0
    %v3617 = vadd.f32 %v3577, %v3616
    %v3618 = vpop.f32.mrb[0].mxu0
    %v3619 = vpop.f32.mrb[0].mxu0
    %v3620 = vpop.f32.mrb[0].mxu0
    %3621 = vdwg.mxu0
    %v3622 = vmax.f32 %v3617, 0.0
    %v3623 = vpack.c.bf16 %v3622, %v3622
    %v3624 = vld [vmem:[#allocation15] sm:$0xf]
    %v3625 = vld [vmem:[#allocation15 + $0x4] sm:$0xf]
    %v3626 = vld [vmem:[#allocation15 + $0x8] sm:$0xf]
    %v3627 = vld [vmem:[#allocation15 + $0xc] sm:$0xf]
    %v3628 = vld [vmem:[#allocation15 + $0x10] sm:$0xf]
    %v3629 = vld [vmem:[#allocation15 + $0x14] sm:$0xf]
    %v3630 = vld [vmem:[#allocation15 + $0x18] sm:$0xf]
    %v3631 = vld [vmem:[#allocation15 + $0x1c] sm:$0xf]
    %v3632 = vld [vmem:[#allocation15 + $0x20] sm:$0xf]
    %v3633 = vld [vmem:[#allocation15 + $0x24] sm:$0xf]
    %v3634 = vld [vmem:[#allocation15 + $0x28] sm:$0xf]
    %v3635 = vld [vmem:[#allocation15 + $0x2c] sm:$0xf]
    %v3636 = vld [vmem:[#allocation15 + $0x30] sm:$0xf]
    %v3637 = vld [vmem:[#allocation15 + $0x34] sm:$0xf]
    %v3638 = vld [vmem:[#allocation15 + $0x38] sm:$0xf]
    %v3639 = vld [vmem:[#allocation15 + $0x3c] sm:$0xf]
    %v3640 = vld [vmem:[#allocation17] sm:$0x1]
    %v3642 = vlaneseq
    %v3643 = vshrl.u32 %v3642, 7
    %v3644 = vsub.s32 0, %v3643
    %v3645 = vrot.slane %v3640, %v3644
    %v3663 = vunpack.c.l.b16 %v3624
    %v3664 = vunpack.c.l.b16 %v3625
    %v3665 = vunpack.c.l.b16 %v3626
    %v3666 = vunpack.c.l.b16 %v3627
    %v3667 = vunpack.c.l.b16 %v3628
    %v3668 = vunpack.c.l.b16 %v3629
    %v3669 = vunpack.c.l.b16 %v3630
    %v3670 = vunpack.c.l.b16 %v3631
    %v3671 = vunpack.c.l.b16 %v3632
    %v3672 = vunpack.c.l.b16 %v3633
    %v3673 = vunpack.c.l.b16 %v3634
    %v3674 = vunpack.c.l.b16 %v3635
    %v3675 = vunpack.c.l.b16 %v3636
    %v3676 = vunpack.c.l.b16 %v3637
    %v3677 = vunpack.c.l.b16 %v3638
    %v3678 = vunpack.c.l.b16 %v3639
    %v3679 = vpack.c.b16 %v3664, %v3663
    %v3680 = vpack.c.b16 %v3666, %v3665
    %v3681 = vpack.c.b16 %v3668, %v3667
    %v3682 = vpack.c.b16 %v3670, %v3669
    %v3683 = vpack.c.b16 %v3672, %v3671
    %v3684 = vpack.c.b16 %v3674, %v3673
    %v3685 = vpack.c.b16 %v3676, %v3675
    %v3686 = vpack.c.b16 %v3678, %v3677
    %3695 = vmatprep.subr.bf16.mxu0 0
    %3696 = vmatpush1.bf16.msra.mxu0 %v3679
    %3697 = vmatprep.subr.bf16.mxu0 0
    %3698 = vmatpush1.bf16.msra.mxu0 %v3680
    %3699 = vmatprep.subr.bf16.mxu0 0
    %3700 = vmatpush1.bf16.msra.mxu0 %v3681
    %3701 = vmatprep.subr.bf16.mxu0 0
    %3702 = vmatpush1.bf16.msra.mxu0 %v3682
    %3703 = vmatprep.subr.bf16.mxu0 0
    %3704 = vmatpush1.bf16.msra.mxu0 %v3683
    %3705 = vmatprep.subr.bf16.mxu0 0
    %3706 = vmatpush1.bf16.msra.mxu0 %v3684
    %3707 = vmatprep.subr.bf16.mxu0 0
    %3708 = vmatpush1.bf16.msra.mxu0 %v3685
    %3709 = vmatprep.subr.bf16.mxu0 0
    %3710 = vmatpush1.bf16.msra.mxu0 %v3686
    %3711 = vmatprep.subr.bf16.mxu0 0
    %3712 = vmatpush1.bf16.msra.mxu0 0
    %3713 = vmatprep.subr.bf16.mxu0 0
    %3714 = vmatpush1.bf16.msra.mxu0 0
    %3715 = vmatprep.subr.bf16.mxu0 0
    %3716 = vmatpush1.bf16.msra.mxu0 0
    %3717 = vmatprep.subr.bf16.mxu0 0
    %3718 = vmatpush1.bf16.msra.mxu0 0
    %3719 = vmatprep.subr.bf16.mxu0 0
    %3720 = vmatpush1.bf16.msra.mxu0 0
    %3721 = vmatprep.subr.bf16.mxu0 0
    %3722 = vmatpush1.bf16.msra.mxu0 0
    %3723 = vmatprep.subr.bf16.mxu0 0
    %3724 = vmatpush1.bf16.msra.mxu0 0
    %3725 = vmatprep.subr.bf16.mxu0 0
    %3726 = vmatpush1.bf16.msra.mxu0 0
    %3727 = vmatprep.mubr.bf16.mxu0 0
    %3728 = vmatmul.mubr.bf16.gmra.mrb[0].mxu0 %v3623
    %v3729 = vpop.f32.mrb[0].mxu0
    %v3730 = vadd.f32 %v3645, %v3729
    %v3731 = vpop.f32.mrb[0].mxu0
    %v3732 = vpop.f32.mrb[0].mxu0
    %v3733 = vpop.f32.mrb[0].mxu0
    %3734 = vdwg.mxu0
    %3735 = vst [vmem:[#allocation18] sm:$0x3] %v3730
    // Predicated region
    $region66: #{tpu_custom_call.1} parent=1 // pred_check
      _
    $region67: #{tpu_custom_call.1} parent=1 // pred_check_branch
      %3737 = sbr.rel (0) target = $region69
    $region68: #{tpu_custom_call.1} parent=1 // pred_region
      %s3739 = ssub.s32 32, 32
      %3740 = vsyncadd [#allocation6], %s3739
      %s3742 = sshll.u32 [#allocation18], 4
      %s3743 = int_to_ptr.vmem [resolvable:$true] %s3742
      %3745 = dma.vmem_to_hbm [thread:$0]  %s3743, 32, %s9, [#allocation6]
    $region69: #{tpu_custom_call.1} parent=1 // pred_fallthru
      _
    // Predicated region
    $region70: #{tpu_custom_call.1} parent=1 // pred_check
      _
    $region71: #{tpu_custom_call.1} parent=1 // pred_check_branch
      %3747 = sbr.rel (0) target = $region73
    $region72: #{tpu_custom_call.1} parent=1 // pred_region
      %3748 = dma.done [#allocation6], 32
    $region73: #{tpu_custom_call.1} parent=1 // pred_fallthru
      _
    %3749 = vsyncpa [#allocation5], 1
    %3750 = vsyncpa [#allocation10], 1
    %3751 = vsyncpa [#allocation13], 1
    %3752 = vsyncpa [#allocation16], 1
    %3753 = vsyncpa [#allocation6], 1
    %3754 = vsyncpa [#allocation7], 1
  %3755 = vsyncmov [#allocation3]
  %s3756 = vpop.sfrf %3755
  %p3757 = scmp.eq.s32.totalorder %s3756, 0
  %p3758 = pneg %p3757
  %3760 = shalt.err (%p3758)

</llo_original>
